<compile_context>
chip_gen: v6e
topology: v6e:2x2x1
jax: 0.10.0
libtpu: 0.0.40
codegen_flags: <defaults>
</compile_context>

<pallas_src>
import functools

import jax
import jax.numpy as jnp
from jax.experimental import pallas as pl
from jax.experimental.pallas import tpu as pltpu


def _layer_norm(x, gamma, beta, eps=1e-5):
    # x: (T, D) f32; gamma/beta: (1, D). Biased variance, like torch.nn.LayerNorm.
    mean = jnp.mean(x, axis=-1, keepdims=True)
    var = jnp.mean((x - mean) ** 2, axis=-1, keepdims=True)
    inv = jax.lax.rsqrt(var + eps)
    return (x - mean) * inv * gamma + beta


def encoder_layer_kernel(
    src_q_ref,                                   # (1, TQ, D)    f32  query rows
    src_kv_ref,                                  # (1, L_pad, D) f32  full (padded) sequence
    wq_ref,                                      # (D, D)   bf16 (in, out), 1/sqrt(hd) folded in
    wkv_ref,                                     # (D, 2D)  bf16 fused [Wk^T | Wv^T]
    wo_ref,                                      # (D, D)   bf16 Wo^T
    w1_ref, w2_ref,                              # (D, F), (F, D) bf16
    bq_ref,                                      # (1, D)  f32 (pre-scaled)
    bkv_ref,                                     # (1, 2D) f32
    bo_ref, b1_ref, b2_ref,                      # (1, D), (1, F), (1, D) f32
    g1_ref, be1_ref, g2_ref, be2_ref,            # (1, D) f32
    out_ref,                                     # (1, TQ, D) f32
    attnw_ref,                                   # (1, H, TQ, L_pad) attn dtype
    kv_scr,                                      # VMEM (L_pad, 2D) bf16 — persists across qi
    ctx_scr,                                     # VMEM (TQ, D) bf16
    *, nhead, seq_len, ff_chunk,
):
    D = src_q_ref.shape[-1]
    hd = D // nhead
    L_pad = src_kv_ref.shape[1]

    # ---- K/V projection: once per batch (first query tile), persisted in bf16 scratch ----
    @pl.when(pl.program_id(1) == 0)
    def _():
        xkv_b = src_kv_ref[0].astype(jnp.bfloat16)                       # (L_pad, D)
        kv = (jnp.dot(xkv_b, wkv_ref[...], preferred_element_type=jnp.float32)
              + bkv_ref[...])                                            # (L_pad, 2D) f32
        kv_scr[...] = kv.astype(jnp.bfloat16)

    xq = src_q_ref[0]                                                    # (TQ, D) f32
    xq_b = xq.astype(jnp.bfloat16)

    # ---- Q projection (scale folded into wq/bq in the wrapper) ----
    q = (jnp.dot(xq_b, wq_ref[...], preferred_element_type=jnp.float32)
         + bq_ref[...]).astype(jnp.bfloat16)                             # (TQ, D)

    need_mask = seq_len != L_pad
    if need_mask:
        col = jax.lax.broadcasted_iota(jnp.int32, (q.shape[0], L_pad), 1)
        key_mask = col < seq_len

    # ---- per-head attention; contexts written into scratch at static column offsets ----
    # NOTE: the head loop is statically unrolled (nhead is small); for very large H/L a
    # fori_loop would bound the live ranges of the (TQ, L) temporaries.
    for h in range(nhead):
        lo = h * hd
        q_h = q[:, lo:lo + hd]                                           # (TQ, hd) bf16
        k_h = kv_scr[:, lo:lo + hd]                                      # (L_pad, hd) bf16
        v_h = kv_scr[:, D + lo:D + lo + hd]                              # (L_pad, hd) bf16
        s = jax.lax.dot_general(q_h, k_h, (((1,), (1,)), ((), ())),
                                preferred_element_type=jnp.float32)      # (TQ, L_pad)
        if need_mask:
            s = jnp.where(key_mask, s, -1e30)
        s = s - jnp.max(s, axis=-1, keepdims=True)
        e = jnp.exp(s)
        p = e / jnp.sum(e, axis=-1, keepdims=True)                       # exact softmax
        p_b = p.astype(jnp.bfloat16)
        attnw_ref[0, h] = p_b.astype(attnw_ref.dtype)
        ctx_h = jnp.dot(p_b, v_h, preferred_element_type=jnp.float32)    # (TQ, hd)
        ctx_scr[:, lo:lo + hd] = ctx_h.astype(jnp.bfloat16)

    # ---- single full-width output projection (full MXU contraction over D) ----
    attn_out = (jnp.dot(ctx_scr[...], wo_ref[...],
                        preferred_element_type=jnp.float32) + bo_ref[...])

    # ---- residual + norm1 ----
    x1 = _layer_norm(xq + attn_out, g1_ref[...], be1_ref[...])

    # ---- feed-forward, chunked over the hidden dim F (dropout = identity) ----
    x1_b = x1.astype(jnp.bfloat16)
    Fdim = w1_ref.shape[1]
    ff = jnp.zeros(xq.shape, jnp.float32)
    for c in range(Fdim // ff_chunk):
        lo = c * ff_chunk
        h_c = (jnp.dot(x1_b, w1_ref[:, lo:lo + ff_chunk],
                       preferred_element_type=jnp.float32)
               + b1_ref[:, lo:lo + ff_chunk])
        h_c = jnp.maximum(h_c, 0.0).astype(jnp.bfloat16)                 # ReLU
        ff = ff + jnp.dot(h_c, w2_ref[lo:lo + ff_chunk, :],
                          preferred_element_type=jnp.float32)
    ff = ff + b2_ref[...]

    # ---- residual + norm2 ----
    y = _layer_norm(x1 + ff, g2_ref[...], be2_ref[...])
    out_ref[0] = y.astype(out_ref.dtype)


def custom_transformer_encoder_layer(src, params, *, nhead,
                                     attn_weights_dtype=jnp.bfloat16,
                                     q_tile=128, ff_chunk_max=512):
    """src: (B, L, D) f32. Returns (out (B,L,D) f32, attn_weights (B,H,L,L) attn_weights_dtype)."""
    B, L, D = src.shape
    F = params["w1"].shape[0]
    H = nhead
    if D % H != 0:
        raise ValueError("d_model must be divisible by nhead")
    hd = D // H
    scale = 1.0 / float(hd) ** 0.5

    # ---- query-row tiling; pad L to a multiple of the tile (keys masked in-kernel) ----
    if L <= q_tile:
        TQ, L_pad = L, L
    else:
        TQ = q_tile
        L_pad = ((L + TQ - 1) // TQ) * TQ
    n_q = L_pad // TQ
    src_p = src if L_pad == L else jnp.pad(src, ((0, 0), (0, L_pad - L), (0, 0)))

    TF = ff_chunk_max if (F > ff_chunk_max and F % ff_chunk_max == 0) else F

    # ---- weight prep: transpose to (in, out), fold 1/sqrt(hd), fuse K|V, cast bf16 ----
    wq_t = (params["wq"].T * scale).astype(jnp.bfloat16)                          # (D, D)
    wkv_t = jnp.concatenate([params["wk"].T, params["wv"].T], 1).astype(jnp.bfloat16)  # (D, 2D)
    wo_t = params["wo"].T.astype(jnp.bfloat16)                                    # (D, D)
    w1_t = params["w1"].T.astype(jnp.bfloat16)                                    # (D, F)
    w2_t = params["w2"].T.astype(jnp.bfloat16)                                    # (F, D)
    bq = (params["bq"] * scale).astype(jnp.float32)
    bkv = jnp.concatenate([params["bk"], params["bv"]], 1).astype(jnp.float32)    # (1, 2D)
    bo = params["bo"].astype(jnp.float32)
    b1 = params["b1"].astype(jnp.float32)
    b2 = params["b2"].astype(jnp.float32)
    g1 = params["g1"].astype(jnp.float32)
    be1 = params["beta1"].astype(jnp.float32)
    g2 = params["g2"].astype(jnp.float32)
    be2 = params["beta2"].astype(jnp.float32)

    # ---- generation-aware VMEM budget (v7x has only 64 MiB per TensorCore) ----
    try:
        vmem_cap = int(pltpu.get_tpu_info().vmem_capacity_bytes)
    except Exception:
        vmem_cap = 64 * 1024 * 1024
    attn_bytes = jnp.dtype(attn_weights_dtype).itemsize
    wbytes = (4 * D * D + 2 * D * F) * 2                                 # bf16 weights (1 copy)
    act = 2 * ((2 * TQ * D + L_pad * D) * 4 + H * TQ * L_pad * attn_bytes)  # dbl-buffered blocks
    scratch = (L_pad * 2 * D + TQ * D) * 2                               # bf16 scratch
    tmp = 8 * TQ * max(L_pad, TF, D) * 4 + (2 << 20)                     # live temporaries headroom

    kernel = functools.partial(encoder_layer_kernel, nhead=H, seq_len=L, ff_chunk=TF)
    args = (src_p, src_p, wq_t, wkv_t, wo_t, w1_t, w2_t,
            bq, bkv, bo, b1, b2, g1, be1, g2, be2)

    def build(single_buffer_weights):
        wfac = 1 if single_buffer_weights else 2
        est = wfac * wbytes + act + scratch + tmp
        # If est exceeds the cap, shrink TQ / ff_chunk_max (e.g. 512 -> 256 on v7x).
        vmem_limit = int(min(vmem_cap - (8 << 20), max(32 << 20, est)))
        wkw = dict(pipeline_mode=pl.Buffered(1)) if single_buffer_weights else {}

        def cspec(shape, weight=False):
            kw = wkw if weight else {}
            return pl.BlockSpec(shape, lambda b, qi: (0,) * len(shape), **kw)

        in_specs = [
            pl.BlockSpec((1, TQ, D), lambda b, qi: (b, qi, 0)),          # src (query rows)
            pl.BlockSpec((1, L_pad, D), lambda b, qi: (b, 0, 0)),        # src (keys/values)
            cspec((D, D), True), cspec((D, 2 * D), True), cspec((D, D), True),   # wq wkv wo
            cspec((D, F), True), cspec((F, D), True),                            # w1 w2
            cspec((1, D)), cspec((1, 2 * D)), cspec((1, D)),                     # bq bkv bo
            cspec((1, F)), cspec((1, D)),                                        # b1 b2
            cspec((1, D)), cspec((1, D)), cspec((1, D)), cspec((1, D)),          # g1 be1 g2 be2
        ]
        out_specs = (
            pl.BlockSpec((1, TQ, D), lambda b, qi: (b, qi, 0)),
            pl.BlockSpec((1, H, TQ, L_pad), lambda b, qi: (b, 0, qi, 0)),
        )
        out_shape = (
            jax.ShapeDtypeStruct((B, L_pad, D), jnp.float32),
            jax.ShapeDtypeStruct((B, H, L_pad, L_pad), attn_weights_dtype),
        )
        return pl.pallas_call(
            kernel,
            out_shape=out_shape,
            grid=(B, n_q),
            in_specs=in_specs,
            out_specs=out_specs,
            scratch_shapes=[pltpu.VMEM((L_pad, 2 * D), jnp.bfloat16),    # persistent K|V
                            pltpu.VMEM((TQ, D), jnp.bfloat16)],          # per-tile context
            compiler_params=pltpu.CompilerParams(
                # B parallel (megacore), qi arbitrary so the per-batch K/V scratch
                # carry across query tiles stays valid on each core.
                dimension_semantics=("parallel", "arbitrary"),
                vmem_limit_bytes=vmem_limit,
            ),
        )

    try:
        out, attnw = build(True)(*args)
        jax.block_until_ready((out, attnw))
    except Exception:
        # pl.Buffered(1) single-buffering unsupported in this jax build -> default buffering.
        out, attnw = build(False)(*args)

    if L_pad != L:
        out = out[:, :L, :]
        attnw = attnw[:, :, :L, :L]
    return out, attnw


def init_params(key, d_model, nhead, dim_feedforward):
    ks = jax.random.split(key, 12)
    s = 0.1
    # nn.MultiheadAttention in_proj_weight is (3*D, D); split into q/k/v parts.
    in_proj_w = jax.random.normal(ks[0], (3 * d_model, d_model), jnp.float32) * s
    in_proj_b = jax.random.normal(ks[1], (3 * d_model,), jnp.float32) * s
    wq, wk, wv = jnp.split(in_proj_w, 3, axis=0)
    bq, bk, bv = jnp.split(in_proj_b, 3, axis=0)
    return {
        "wq": wq, "wk": wk, "wv": wv,
        "bq": bq.reshape(1, -1), "bk": bk.reshape(1, -1), "bv": bv.reshape(1, -1),
        "wo": jax.random.normal(ks[2], (d_model, d_model), jnp.float32) * s,
        "bo": (jax.random.normal(ks[3], (d_model,), jnp.float32) * s).reshape(1, -1),
        "w1": jax.random.normal(ks[4], (dim_feedforward, d_model), jnp.float32) * s,
        "b1": (jax.random.normal(ks[5], (dim_feedforward,), jnp.float32) * s).reshape(1, -1),
        "w2": jax.random.normal(ks[6], (d_model, dim_feedforward), jnp.float32) * s,
        "b2": (jax.random.normal(ks[7], (d_model,), jnp.float32) * s).reshape(1, -1),
        "g1": (1.0 + jax.random.normal(ks[8], (d_model,), jnp.float32) * s).reshape(1, -1),
        "beta1": (jax.random.normal(ks[9], (d_model,), jnp.float32) * s).reshape(1, -1),
        "g2": (1.0 + jax.random.normal(ks[10], (d_model,), jnp.float32) * s).reshape(1, -1),
        "beta2": (jax.random.normal(ks[11], (d_model,), jnp.float32) * s).reshape(1, -1),
    }


def reference_forward(src, params, nhead):
    """Pure-JAX fp32 reference (mirrors the PyTorch module in eval mode)."""
    B, L, D = src.shape
    H = nhead
    hd = D // H
    scale = 1.0 / float(hd) ** 0.5

    def lin(x, w, b):
        return x @ w.T + b[0]

    def ln(x, g, b, eps=1e-5):
        m = jnp.mean(x, axis=-1, keepdims=True)
        var = jnp.mean((x - m) ** 2, axis=-1, keepdims=True)
        return (x - m) / jnp.sqrt(var + eps) * g[0] + b[0]

    q = lin(src, params["wq"], params["bq"]) * scale
    k = lin(src, params["wk"], params["bk"])
    v = lin(src, params["wv"], params["bv"])
    qh = q.reshape(B, L, H, hd).transpose(0, 2, 1, 3)
    kh = k.reshape(B, L, H, hd).transpose(0, 2, 1, 3)
    vh = v.reshape(B, L, H, hd).transpose(0, 2, 1, 3)
    s = jnp.einsum("bhqd,bhkd->bhqk", qh, kh)
    p = jax.nn.softmax(s, axis=-1)
    ctx = jnp.einsum("bhqk,bhkd->bhqd", p, vh).transpose(0, 2, 1, 3).reshape(B, L, D)
    attn = lin(ctx, params["wo"], params["bo"])
    x1 = ln(src + attn, params["g1"], params["beta1"])
    h = jax.nn.relu(lin(x1, params["w1"], params["b1"]))
    ff = lin(h, params["w2"], params["b2"])
    y = ln(x1 + ff, params["g2"], params["beta2"])
    return y, p


if __name__ == "__main__":
    def run_case(B, L, d_model, nhead, dim_ff, seed):
        key = jax.random.PRNGKey(seed)
        k_src, k_par = jax.random.split(key)
        src = jax.random.normal(k_src, (B, L, d_model), jnp.float32)
        params = init_params(k_par, d_model, nhead, dim_ff)

        out, attn_w = custom_transformer_encoder_layer(src, params, nhead=nhead)
        out = jax.block_until_ready(out)
        attn_w = jax.block_until_ready(attn_w)

        assert out.shape == (B, L, d_model)
        assert attn_w.shape == (B, nhead, L, L)
        assert bool(jnp.all(jnp.isfinite(out)))

        attn_f32 = attn_w.astype(jnp.float32)
        # attention rows sum to ~1 (exact softmax in-kernel; bf16 storage rounding only)
        assert bool(jnp.allclose(jnp.sum(attn_f32, axis=-1), 1.0, atol=1e-2))

        # compare against the pure-JAX fp32 reference (kernel matmuls run in bf16)
        out_ref, attn_ref = reference_forward(src, params, nhead)
        assert float(jnp.max(jnp.abs(out - out_ref))) < 6e-2
        assert float(jnp.max(jnp.abs(attn_f32 - attn_ref))) < 2e-2

    # small single-tile case (typical toy shape for this module)
    run_case(B=2, L=8, d_model=32, nhead=4, dim_ff=128, seed=0)
    # multi-query-tile + padded-L case: exercises the per-batch K/V hoist (pl.when at
    # qi == 0), the scratch carry across query tiles, and the key-padding mask
    # (L=200 -> L_pad=256, TQ=128, n_q=2).
    run_case(B=1, L=200, d_model=32, nhead=4, dim_ff=128, seed=1)

    print("KERNEL_OK")
</pallas_src>

<mosaic_0001>
module attributes {stable_mosaic.version = 11 : i64} {
  func.func @encoder_layer_kernel(%arg0: i32, %arg1: i32, %arg2: memref<1x8x32xf32, #tpu.memory_space<vmem>>, %arg3: memref<1x8x32xf32, #tpu.memory_space<vmem>>, %arg4: memref<32x32xbf16, #tpu.memory_space<vmem>>, %arg5: memref<32x64xbf16, #tpu.memory_space<vmem>>, %arg6: memref<32x32xbf16, #tpu.memory_space<vmem>>, %arg7: memref<32x128xbf16, #tpu.memory_space<vmem>>, %arg8: memref<128x32xbf16, #tpu.memory_space<vmem>>, %arg9: memref<1x32xf32, #tpu.memory_space<vmem>>, %arg10: memref<1x64xf32, #tpu.memory_space<vmem>>, %arg11: memref<1x32xf32, #tpu.memory_space<vmem>>, %arg12: memref<1x128xf32, #tpu.memory_space<vmem>>, %arg13: memref<1x32xf32, #tpu.memory_space<vmem>>, %arg14: memref<1x32xf32, #tpu.memory_space<vmem>>, %arg15: memref<1x32xf32, #tpu.memory_space<vmem>>, %arg16: memref<1x32xf32, #tpu.memory_space<vmem>>, %arg17: memref<1x32xf32, #tpu.memory_space<vmem>>, %arg18: memref<1x8x32xf32, #tpu.memory_space<vmem>>, %arg19: memref<1x4x8x8xbf16, #tpu.memory_space<vmem>>, %arg20: memref<8x64xbf16, #tpu.memory_space<vmem>>, %arg21: memref<8x32xbf16, #tpu.memory_space<vmem>>) attributes {dimension_semantics = [#tpu.dimension_semantics<parallel>, #tpu.dimension_semantics<arbitrary>], iteration_bounds = array<i64: 2, 1>, scalar_prefetch = 0 : i64, scratch_operands = 2 : i64, tpu.core_type = #tpu.core_type<tc>, window_params = [{transform_indices = @transform_0, window_bounds = array<i64: 1, 8, 32>}, {transform_indices = @transform_1, window_bounds = array<i64: 1, 8, 32>}, {pipeline_mode = #tpu.pipeline_mode<synchronous>, transform_indices = @transform_2, window_bounds = array<i64: 32, 32>}, {pipeline_mode = #tpu.pipeline_mode<synchronous>, transform_indices = @transform_3, window_bounds = array<i64: 32, 64>}, {pipeline_mode = #tpu.pipeline_mode<synchronous>, transform_indices = @transform_4, window_bounds = array<i64: 32, 32>}, {pipeline_mode = #tpu.pipeline_mode<synchronous>, transform_indices = @transform_5, window_bounds = array<i64: 32, 128>}, {pipeline_mode = #tpu.pipeline_mode<synchronous>, transform_indices = @transform_6, window_bounds = array<i64: 128, 32>}, {pipeline_mode = #tpu.pipeline_mode<synchronous>, transform_indices = @transform_7, window_bounds = array<i64: 1, 32>}, {pipeline_mode = #tpu.pipeline_mode<synchronous>, transform_indices = @transform_8, window_bounds = array<i64: 1, 64>}, {pipeline_mode = #tpu.pipeline_mode<synchronous>, transform_indices = @transform_9, window_bounds = array<i64: 1, 32>}, {pipeline_mode = #tpu.pipeline_mode<synchronous>, transform_indices = @transform_10, window_bounds = array<i64: 1, 128>}, {pipeline_mode = #tpu.pipeline_mode<synchronous>, transform_indices = @transform_11, window_bounds = array<i64: 1, 32>}, {pipeline_mode = #tpu.pipeline_mode<synchronous>, transform_indices = @transform_12, window_bounds = array<i64: 1, 32>}, {pipeline_mode = #tpu.pipeline_mode<synchronous>, transform_indices = @transform_13, window_bounds = array<i64: 1, 32>}, {pipeline_mode = #tpu.pipeline_mode<synchronous>, transform_indices = @transform_14, window_bounds = array<i64: 1, 32>}, {pipeline_mode = #tpu.pipeline_mode<synchronous>, transform_indices = @transform_15, window_bounds = array<i64: 1, 32>}, {transform_indices = @transform_16, window_bounds = array<i64: 1, 8, 32>}, {transform_indices = @transform_17, window_bounds = array<i64: 1, 4, 8, 8>}]} {
    %c0_i32 = arith.constant 0 : i32
    %0 = arith.cmpi eq, %arg1, %c0_i32 : i32
    %1 = arith.extui %0 : i1 to i32
    %c0_i32_0 = arith.constant 0 : i32
    %2 = arith.cmpi ne, %1, %c0_i32_0 : i32
    scf.if %2 {
      %c0_93 = arith.constant 0 : index
      %c0_94 = arith.constant 0 : index
      %c0_95 = arith.constant 0 : index
      %167 = vector.load %arg3[%c0_93, %c0_94, %c0_95] : memref<1x8x32xf32, #tpu.memory_space<vmem>>, vector<1x8x32xf32>
      %168 = vector.shape_cast %167 : vector<1x8x32xf32> to vector<8x32xf32>
      %169 = arith.truncf %168 : vector<8x32xf32> to vector<8x32xbf16>
      %c0_96 = arith.constant 0 : index
      %c0_97 = arith.constant 0 : index
      %170 = vector.load %arg5[%c0_96, %c0_97] : memref<32x64xbf16, #tpu.memory_space<vmem>>, vector<32x64xbf16>
      %cst_98 = arith.constant dense<0.000000e+00> : vector<8x64xf32>
      %171 = tpu.matmul %169, %170, %cst_98 {dimension_numbers = #tpu.dot_dimension_numbers<[1], [0], [0], [1], [0, 0, 1, 1], [], []>} : vector<8x32xbf16>, vector<32x64xbf16>, vector<8x64xf32> -> vector<8x64xf32>
      %c0_99 = arith.constant 0 : index
      %c0_100 = arith.constant 0 : index
      %172 = vector.load %arg10[%c0_99, %c0_100] : memref<1x64xf32, #tpu.memory_space<vmem>>, vector<1x64xf32>
      %173 = vector.broadcast %172 : vector<1x64xf32> to vector<8x64xf32>
      %174 = arith.addf %171, %173 : vector<8x64xf32>
      %175 = arith.truncf %174 : vector<8x64xf32> to vector<8x64xbf16>
      %c0_101 = arith.constant 0 : index
      %c0_102 = arith.constant 0 : index
      %176 = vector.load %arg20[%c0_101, %c0_102] : memref<8x64xbf16, #tpu.memory_space<vmem>>, vector<8x64xbf16>
      tpu.vector_store %arg20[%c0_101, %c0_102], %175 {strides = array<i32>} : memref<8x64xbf16, #tpu.memory_space<vmem>>, vector<8x64xbf16>,
    } else {
    }
    %c0 = arith.constant 0 : index
    %c0_1 = arith.constant 0 : index
    %c0_2 = arith.constant 0 : index
    %3 = vector.load %arg2[%c0, %c0_1, %c0_2] : memref<1x8x32xf32, #tpu.memory_space<vmem>>, vector<1x8x32xf32>
    %4 = vector.shape_cast %3 : vector<1x8x32xf32> to vector<8x32xf32>
    %5 = arith.truncf %4 : vector<8x32xf32> to vector<8x32xbf16>
    %c0_3 = arith.constant 0 : index
    %c0_4 = arith.constant 0 : index
    %6 = vector.load %arg4[%c0_3, %c0_4] : memref<32x32xbf16, #tpu.memory_space<vmem>>, vector<32x32xbf16>
    %cst = arith.constant dense<0.000000e+00> : vector<8x32xf32>
    %7 = tpu.matmul %5, %6, %cst {dimension_numbers = #tpu.dot_dimension_numbers<[1], [0], [0], [1], [0, 0, 1, 1], [], []>} : vector<8x32xbf16>, vector<32x32xbf16>, vector<8x32xf32> -> vector<8x32xf32>
    %c0_5 = arith.constant 0 : index
    %c0_6 = arith.constant 0 : index
    %8 = vector.load %arg9[%c0_5, %c0_6] : memref<1x32xf32, #tpu.memory_space<vmem>>, vector<1x32xf32>
    %9 = vector.broadcast %8 : vector<1x32xf32> to vector<8x32xf32>
    %10 = arith.addf %7, %9 : vector<8x32xf32>
    %11 = arith.truncf %10 : vector<8x32xf32> to vector<8x32xbf16>
    %12 = vector.extract_strided_slice %11 {offsets = [0, 0], sizes = [8, 8], strides = [1, 1]} : vector<8x32xbf16> to vector<8x8xbf16>
    %c0_7 = arith.constant 0 : index
    %c0_8 = arith.constant 0 : index
    %13 = vector.load %arg20[%c0_7, %c0_8] : memref<8x64xbf16, #tpu.memory_space<vmem>>, vector<8x8xbf16>
    %c0_9 = arith.constant 0 : index
    %c32 = arith.constant 32 : index
    %14 = vector.load %arg20[%c0_9, %c32] : memref<8x64xbf16, #tpu.memory_space<vmem>>, vector<8x8xbf16>
    %cst_10 = arith.constant dense<0.000000e+00> : vector<8x8xf32>
    %15 = tpu.matmul %12, %13, %cst_10 {dimension_numbers = #tpu.dot_dimension_numbers<[1], [1], [0], [0], [0, 0, 1, 0], [], []>} : vector<8x8xbf16>, vector<8x8xbf16>, vector<8x8xf32> -> vector<8x8xf32>
    %cst_11 = arith.constant dense<0xFF800000> : vector<8xf32>
    %16 = vector.multi_reduction <maximumf>, %15, %cst_11 [1] : vector<8x8xf32> to vector<8xf32>
    %17 = vector.shape_cast %16 : vector<8xf32> to vector<8x1xf32>
    %18 = vector.broadcast %17 : vector<8x1xf32> to vector<8x8xf32>
    %19 = arith.subf %15, %18 : vector<8x8xf32>
    %20 = math.exp %19 : vector<8x8xf32>
    %cst_12 = arith.constant dense<0.000000e+00> : vector<8xf32>
    %21 = vector.multi_reduction <add>, %20, %cst_12 [1] : vector<8x8xf32> to vector<8xf32>
    %22 = vector.shape_cast %21 : vector<8xf32> to vector<8x1xf32>
    %23 = vector.broadcast %22 : vector<8x1xf32> to vector<8x8xf32>
    %24 = arith.divf %20, %23 : vector<8x8xf32>
    %25 = arith.truncf %24 : vector<8x8xf32> to vector<8x8xbf16>
    %c0_13 = arith.constant 0 : index
    %c0_14 = arith.constant 0 : index
    %c0_15 = arith.constant 0 : index
    %c0_16 = arith.constant 0 : index
    %26 = vector.load %arg19[%c0_13, %c0_14, %c0_15, %c0_16] : memref<1x4x8x8xbf16, #tpu.memory_space<vmem>>, vector<1x1x8x8xbf16>
    %27 = vector.shape_cast %26 : vector<1x1x8x8xbf16> to vector<8x8xbf16>
    %28 = vector.shape_cast %25 : vector<8x8xbf16> to vector<1x1x8x8xbf16>
    tpu.vector_store %arg19[%c0_13, %c0_14, %c0_15, %c0_16], %28 {strides = array<i32>} : memref<1x4x8x8xbf16, #tpu.memory_space<vmem>>, vector<1x1x8x8xbf16>,
    %cst_17 = arith.constant dense<0.000000e+00> : vector<8x8xf32>
    %29 = tpu.matmul %25, %14, %cst_17 {dimension_numbers = #tpu.dot_dimension_numbers<[1], [0], [0], [1], [0, 0, 1, 1], [], []>} : vector<8x8xbf16>, vector<8x8xbf16>, vector<8x8xf32> -> vector<8x8xf32>
    %30 = arith.truncf %29 : vector<8x8xf32> to vector<8x8xbf16>
    %c0_18 = arith.constant 0 : index
    %c0_19 = arith.constant 0 : index
    %31 = vector.load %arg21[%c0_18, %c0_19] : memref<8x32xbf16, #tpu.memory_space<vmem>>, vector<8x8xbf16>
    tpu.vector_store %arg21[%c0_18, %c0_19], %30 {strides = array<i32>} : memref<8x32xbf16, #tpu.memory_space<vmem>>, vector<8x8xbf16>,
    %32 = vector.extract_strided_slice %11 {offsets = [0, 8], sizes = [8, 8], strides = [1, 1]} : vector<8x32xbf16> to vector<8x8xbf16>
    %c0_20 = arith.constant 0 : index
    %c8 = arith.constant 8 : index
    %33 = vector.load %arg20[%c0_20, %c8] : memref<8x64xbf16, #tpu.memory_space<vmem>>, vector<8x8xbf16>
    %c0_21 = arith.constant 0 : index
    %c40 = arith.constant 40 : index
    %34 = vector.load %arg20[%c0_21, %c40] : memref<8x64xbf16, #tpu.memory_space<vmem>>, vector<8x8xbf16>
    %cst_22 = arith.constant dense<0.000000e+00> : vector<8x8xf32>
    %35 = tpu.matmul %32, %33, %cst_22 {dimension_numbers = #tpu.dot_dimension_numbers<[1], [1], [0], [0], [0, 0, 1, 0], [], []>} : vector<8x8xbf16>, vector<8x8xbf16>, vector<8x8xf32> -> vector<8x8xf32>
    %cst_23 = arith.constant dense<0xFF800000> : vector<8xf32>
    %36 = vector.multi_reduction <maximumf>, %35, %cst_23 [1] : vector<8x8xf32> to vector<8xf32>
    %37 = vector.shape_cast %36 : vector<8xf32> to vector<8x1xf32>
    %38 = vector.broadcast %37 : vector<8x1xf32> to vector<8x8xf32>
    %39 = arith.subf %35, %38 : vector<8x8xf32>
    %40 = math.exp %39 : vector<8x8xf32>
    %cst_24 = arith.constant dense<0.000000e+00> : vector<8xf32>
    %41 = vector.multi_reduction <add>, %40, %cst_24 [1] : vector<8x8xf32> to vector<8xf32>
    %42 = vector.shape_cast %41 : vector<8xf32> to vector<8x1xf32>
    %43 = vector.broadcast %42 : vector<8x1xf32> to vector<8x8xf32>
    %44 = arith.divf %40, %43 : vector<8x8xf32>
    %45 = arith.truncf %44 : vector<8x8xf32> to vector<8x8xbf16>
    %c0_25 = arith.constant 0 : index
    %c1 = arith.constant 1 : index
    %c0_26 = arith.constant 0 : index
    %c0_27 = arith.constant 0 : index
    %46 = vector.load %arg19[%c0_25, %c1, %c0_26, %c0_27] : memref<1x4x8x8xbf16, #tpu.memory_space<vmem>>, vector<1x1x8x8xbf16>
    %47 = vector.shape_cast %46 : vector<1x1x8x8xbf16> to vector<8x8xbf16>
    %48 = vector.shape_cast %45 : vector<8x8xbf16> to vector<1x1x8x8xbf16>
    tpu.vector_store %arg19[%c0_25, %c1, %c0_26, %c0_27], %48 {strides = array<i32>} : memref<1x4x8x8xbf16, #tpu.memory_space<vmem>>, vector<1x1x8x8xbf16>,
    %cst_28 = arith.constant dense<0.000000e+00> : vector<8x8xf32>
    %49 = tpu.matmul %45, %34, %cst_28 {dimension_numbers = #tpu.dot_dimension_numbers<[1], [0], [0], [1], [0, 0, 1, 1], [], []>} : vector<8x8xbf16>, vector<8x8xbf16>, vector<8x8xf32> -> vector<8x8xf32>
    %50 = arith.truncf %49 : vector<8x8xf32> to vector<8x8xbf16>
    %c0_29 = arith.constant 0 : index
    %c8_30 = arith.constant 8 : index
    %51 = vector.load %arg21[%c0_29, %c8_30] : memref<8x32xbf16, #tpu.memory_space<vmem>>, vector<8x8xbf16>
    tpu.vector_store %arg21[%c0_29, %c8_30], %50 {strides = array<i32>} : memref<8x32xbf16, #tpu.memory_space<vmem>>, vector<8x8xbf16>,
    %52 = vector.extract_strided_slice %11 {offsets = [0, 16], sizes = [8, 8], strides = [1, 1]} : vector<8x32xbf16> to vector<8x8xbf16>
    %c0_31 = arith.constant 0 : index
    %c16 = arith.constant 16 : index
    %53 = vector.load %arg20[%c0_31, %c16] : memref<8x64xbf16, #tpu.memory_space<vmem>>, vector<8x8xbf16>
    %c0_32 = arith.constant 0 : index
    %c48 = arith.constant 48 : index
    %54 = vector.load %arg20[%c0_32, %c48] : memref<8x64xbf16, #tpu.memory_space<vmem>>, vector<8x8xbf16>
    %cst_33 = arith.constant dense<0.000000e+00> : vector<8x8xf32>
    %55 = tpu.matmul %52, %53, %cst_33 {dimension_numbers = #tpu.dot_dimension_numbers<[1], [1], [0], [0], [0, 0, 1, 0], [], []>} : vector<8x8xbf16>, vector<8x8xbf16>, vector<8x8xf32> -> vector<8x8xf32>
    %cst_34 = arith.constant dense<0xFF800000> : vector<8xf32>
    %56 = vector.multi_reduction <maximumf>, %55, %cst_34 [1] : vector<8x8xf32> to vector<8xf32>
    %57 = vector.shape_cast %56 : vector<8xf32> to vector<8x1xf32>
    %58 = vector.broadcast %57 : vector<8x1xf32> to vector<8x8xf32>
    %59 = arith.subf %55, %58 : vector<8x8xf32>
    %60 = math.exp %59 : vector<8x8xf32>
    %cst_35 = arith.constant dense<0.000000e+00> : vector<8xf32>
    %61 = vector.multi_reduction <add>, %60, %cst_35 [1] : vector<8x8xf32> to vector<8xf32>
    %62 = vector.shape_cast %61 : vector<8xf32> to vector<8x1xf32>
    %63 = vector.broadcast %62 : vector<8x1xf32> to vector<8x8xf32>
    %64 = arith.divf %60, %63 : vector<8x8xf32>
    %65 = arith.truncf %64 : vector<8x8xf32> to vector<8x8xbf16>
    %c0_36 = arith.constant 0 : index
    %c2 = arith.constant 2 : index
    %c0_37 = arith.constant 0 : index
    %c0_38 = arith.constant 0 : index
    %66 = vector.load %arg19[%c0_36, %c2, %c0_37, %c0_38] : memref<1x4x8x8xbf16, #tpu.memory_space<vmem>>, vector<1x1x8x8xbf16>
    %67 = vector.shape_cast %66 : vector<1x1x8x8xbf16> to vector<8x8xbf16>
    %68 = vector.shape_cast %65 : vector<8x8xbf16> to vector<1x1x8x8xbf16>
    tpu.vector_store %arg19[%c0_36, %c2, %c0_37, %c0_38], %68 {strides = array<i32>} : memref<1x4x8x8xbf16, #tpu.memory_space<vmem>>, vector<1x1x8x8xbf16>,
    %cst_39 = arith.constant dense<0.000000e+00> : vector<8x8xf32>
    %69 = tpu.matmul %65, %54, %cst_39 {dimension_numbers = #tpu.dot_dimension_numbers<[1], [0], [0], [1], [0, 0, 1, 1], [], []>} : vector<8x8xbf16>, vector<8x8xbf16>, vector<8x8xf32> -> vector<8x8xf32>
    %70 = arith.truncf %69 : vector<8x8xf32> to vector<8x8xbf16>
    %c0_40 = arith.constant 0 : index
    %c16_41 = arith.constant 16 : index
    %71 = vector.load %arg21[%c0_40, %c16_41] : memref<8x32xbf16, #tpu.memory_space<vmem>>, vector<8x8xbf16>
    tpu.vector_store %arg21[%c0_40, %c16_41], %70 {strides = array<i32>} : memref<8x32xbf16, #tpu.memory_space<vmem>>, vector<8x8xbf16>,
    %72 = vector.extract_strided_slice %11 {offsets = [0, 24], sizes = [8, 8], strides = [1, 1]} : vector<8x32xbf16> to vector<8x8xbf16>
    %c0_42 = arith.constant 0 : index
    %c24 = arith.constant 24 : index
    %73 = vector.load %arg20[%c0_42, %c24] : memref<8x64xbf16, #tpu.memory_space<vmem>>, vector<8x8xbf16>
    %c0_43 = arith.constant 0 : index
    %c56 = arith.constant 56 : index
    %74 = vector.load %arg20[%c0_43, %c56] : memref<8x64xbf16, #tpu.memory_space<vmem>>, vector<8x8xbf16>
    %cst_44 = arith.constant dense<0.000000e+00> : vector<8x8xf32>
    %75 = tpu.matmul %72, %73, %cst_44 {dimension_numbers = #tpu.dot_dimension_numbers<[1], [1], [0], [0], [0, 0, 1, 0], [], []>} : vector<8x8xbf16>, vector<8x8xbf16>, vector<8x8xf32> -> vector<8x8xf32>
    %cst_45 = arith.constant dense<0xFF800000> : vector<8xf32>
    %76 = vector.multi_reduction <maximumf>, %75, %cst_45 [1] : vector<8x8xf32> to vector<8xf32>
    %77 = vector.shape_cast %76 : vector<8xf32> to vector<8x1xf32>
    %78 = vector.broadcast %77 : vector<8x1xf32> to vector<8x8xf32>
    %79 = arith.subf %75, %78 : vector<8x8xf32>
    %80 = math.exp %79 : vector<8x8xf32>
    %cst_46 = arith.constant dense<0.000000e+00> : vector<8xf32>
    %81 = vector.multi_reduction <add>, %80, %cst_46 [1] : vector<8x8xf32> to vector<8xf32>
    %82 = vector.shape_cast %81 : vector<8xf32> to vector<8x1xf32>
    %83 = vector.broadcast %82 : vector<8x1xf32> to vector<8x8xf32>
    %84 = arith.divf %80, %83 : vector<8x8xf32>
    %85 = arith.truncf %84 : vector<8x8xf32> to vector<8x8xbf16>
    %c0_47 = arith.constant 0 : index
    %c3 = arith.constant 3 : index
    %c0_48 = arith.constant 0 : index
    %c0_49 = arith.constant 0 : index
    %86 = vector.load %arg19[%c0_47, %c3, %c0_48, %c0_49] : memref<1x4x8x8xbf16, #tpu.memory_space<vmem>>, vector<1x1x8x8xbf16>
    %87 = vector.shape_cast %86 : vector<1x1x8x8xbf16> to vector<8x8xbf16>
    %88 = vector.shape_cast %85 : vector<8x8xbf16> to vector<1x1x8x8xbf16>
    tpu.vector_store %arg19[%c0_47, %c3, %c0_48, %c0_49], %88 {strides = array<i32>} : memref<1x4x8x8xbf16, #tpu.memory_space<vmem>>, vector<1x1x8x8xbf16>,
    %cst_50 = arith.constant dense<0.000000e+00> : vector<8x8xf32>
    %89 = tpu.matmul %85, %74, %cst_50 {dimension_numbers = #tpu.dot_dimension_numbers<[1], [0], [0], [1], [0, 0, 1, 1], [], []>} : vector<8x8xbf16>, vector<8x8xbf16>, vector<8x8xf32> -> vector<8x8xf32>
    %90 = arith.truncf %89 : vector<8x8xf32> to vector<8x8xbf16>
    %c0_51 = arith.constant 0 : index
    %c24_52 = arith.constant 24 : index
    %91 = vector.load %arg21[%c0_51, %c24_52] : memref<8x32xbf16, #tpu.memory_space<vmem>>, vector<8x8xbf16>
    tpu.vector_store %arg21[%c0_51, %c24_52], %90 {strides = array<i32>} : memref<8x32xbf16, #tpu.memory_space<vmem>>, vector<8x8xbf16>,
    %c0_53 = arith.constant 0 : index
    %c0_54 = arith.constant 0 : index
    %92 = vector.load %arg21[%c0_53, %c0_54] : memref<8x32xbf16, #tpu.memory_space<vmem>>, vector<8x32xbf16>
    %c0_55 = arith.constant 0 : index
    %c0_56 = arith.constant 0 : index
    %93 = vector.load %arg6[%c0_55, %c0_56] : memref<32x32xbf16, #tpu.memory_space<vmem>>, vector<32x32xbf16>
    %cst_57 = arith.constant dense<0.000000e+00> : vector<8x32xf32>
    %94 = tpu.matmul %92, %93, %cst_57 {dimension_numbers = #tpu.dot_dimension_numbers<[1], [0], [0], [1], [0, 0, 1, 1], [], []>} : vector<8x32xbf16>, vector<32x32xbf16>, vector<8x32xf32> -> vector<8x32xf32>
    %c0_58 = arith.constant 0 : index
    %c0_59 = arith.constant 0 : index
    %95 = vector.load %arg11[%c0_58, %c0_59] : memref<1x32xf32, #tpu.memory_space<vmem>>, vector<1x32xf32>
    %96 = vector.broadcast %95 : vector<1x32xf32> to vector<8x32xf32>
    %97 = arith.addf %94, %96 : vector<8x32xf32>
    %98 = arith.addf %4, %97 : vector<8x32xf32>
    %c0_60 = arith.constant 0 : index
    %c0_61 = arith.constant 0 : index
    %99 = vector.load %arg14[%c0_60, %c0_61] : memref<1x32xf32, #tpu.memory_space<vmem>>, vector<1x32xf32>
    %c0_62 = arith.constant 0 : index
    %c0_63 = arith.constant 0 : index
    %100 = vector.load %arg15[%c0_62, %c0_63] : memref<1x32xf32, #tpu.memory_space<vmem>>, vector<1x32xf32>
    %cst_64 = arith.constant dense<0.000000e+00> : vector<8xf32>
    %101 = vector.multi_reduction <add>, %98, %cst_64 [1] : vector<8x32xf32> to vector<8xf32>
    %102 = vector.shape_cast %101 : vector<8xf32> to vector<8x1xf32>
    %cst_65 = arith.constant 3.200000e+01 : f32
    %103 = vector.broadcast %cst_65 : f32 to vector<8x1xf32>
    %104 = arith.divf %102, %103 : vector<8x1xf32>
    %105 = vector.broadcast %104 : vector<8x1xf32> to vector<8x32xf32>
    %106 = arith.subf %98, %105 : vector<8x32xf32>
    %107 = arith.mulf %106, %106 : vector<8x32xf32>
    %cst_66 = arith.constant dense<0.000000e+00> : vector<8xf32>
    %108 = vector.multi_reduction <add>, %107, %cst_66 [1] : vector<8x32xf32> to vector<8xf32>
    %109 = vector.shape_cast %108 : vector<8xf32> to vector<8x1xf32>
    %cst_67 = arith.constant 3.200000e+01 : f32
    %110 = vector.broadcast %cst_67 : f32 to vector<8x1xf32>
    %111 = arith.divf %109, %110 : vector<8x1xf32>
    %cst_68 = arith.constant 9.99999974E-6 : f32
    %112 = vector.broadcast %cst_68 : f32 to vector<8x1xf32>
    %113 = arith.addf %111, %112 : vector<8x1xf32>
    %114 = math.rsqrt %113 : vector<8x1xf32>
    %115 = vector.broadcast %104 : vector<8x1xf32> to vector<8x32xf32>
    %116 = arith.subf %98, %115 : vector<8x32xf32>
    %117 = vector.broadcast %114 : vector<8x1xf32> to vector<8x32xf32>
    %118 = arith.mulf %116, %117 : vector<8x32xf32>
    %119 = vector.broadcast %99 : vector<1x32xf32> to vector<8x32xf32>
    %120 = arith.mulf %118, %119 : vector<8x32xf32>
    %121 = vector.broadcast %100 : vector<1x32xf32> to vector<8x32xf32>
    %122 = arith.addf %120, %121 : vector<8x32xf32>
    %123 = arith.truncf %122 : vector<8x32xf32> to vector<8x32xbf16>
    %cst_69 = arith.constant 0.000000e+00 : f32
    %124 = vector.broadcast %cst_69 : f32 to vector<8x32xf32>
    %c0_70 = arith.constant 0 : index
    %c0_71 = arith.constant 0 : index
    %125 = vector.load %arg7[%c0_70, %c0_71] : memref<32x128xbf16, #tpu.memory_space<vmem>>, vector<32x128xbf16>
    %cst_72 = arith.constant dense<0.000000e+00> : vector<8x128xf32>
    %126 = tpu.matmul %123, %125, %cst_72 {dimension_numbers = #tpu.dot_dimension_numbers<[1], [0], [0], [1], [0, 0, 1, 1], [], []>} : vector<8x32xbf16>, vector<32x128xbf16>, vector<8x128xf32> -> vector<8x128xf32>
    %c0_73 = arith.constant 0 : index
    %c0_74 = arith.constant 0 : index
    %127 = vector.load %arg12[%c0_73, %c0_74] : memref<1x128xf32, #tpu.memory_space<vmem>>, vector<1x128xf32>
    %128 = vector.broadcast %127 : vector<1x128xf32> to vector<8x128xf32>
    %129 = arith.addf %126, %128 : vector<8x128xf32>
    %cst_75 = arith.constant 0.000000e+00 : f32
    %130 = vector.broadcast %cst_75 : f32 to vector<8x128xf32>
    %131 = arith.maximumf %129, %130 : vector<8x128xf32>
    %132 = arith.truncf %131 : vector<8x128xf32> to vector<8x128xbf16>
    %c0_76 = arith.constant 0 : index
    %c0_77 = arith.constant 0 : index
    %133 = vector.load %arg8[%c0_76, %c0_77] : memref<128x32xbf16, #tpu.memory_space<vmem>>, vector<128x32xbf16>
    %cst_78 = arith.constant dense<0.000000e+00> : vector<8x32xf32>
    %134 = tpu.matmul %132, %133, %cst_78 {dimension_numbers = #tpu.dot_dimension_numbers<[1], [0], [0], [1], [0, 0, 1, 1], [], []>} : vector<8x128xbf16>, vector<128x32xbf16>, vector<8x32xf32> -> vector<8x32xf32>
    %135 = arith.addf %124, %134 : vector<8x32xf32>
    %c0_79 = arith.constant 0 : index
    %c0_80 = arith.constant 0 : index
    %136 = vector.load %arg13[%c0_79, %c0_80] : memref<1x32xf32, #tpu.memory_space<vmem>>, vector<1x32xf32>
    %137 = vector.broadcast %136 : vector<1x32xf32> to vector<8x32xf32>
    %138 = arith.addf %135, %137 : vector<8x32xf32>
    %139 = arith.addf %122, %138 : vector<8x32xf32>
    %c0_81 = arith.constant 0 : index
    %c0_82 = arith.constant 0 : index
    %140 = vector.load %arg16[%c0_81, %c0_82] : memref<1x32xf32, #tpu.memory_space<vmem>>, vector<1x32xf32>
    %c0_83 = arith.constant 0 : index
    %c0_84 = arith.constant 0 : index
    %141 = vector.load %arg17[%c0_83, %c0_84] : memref<1x32xf32, #tpu.memory_space<vmem>>, vector<1x32xf32>
    %cst_85 = arith.constant dense<0.000000e+00> : vector<8xf32>
    %142 = vector.multi_reduction <add>, %139, %cst_85 [1] : vector<8x32xf32> to vector<8xf32>
    %143 = vector.shape_cast %142 : vector<8xf32> to vector<8x1xf32>
    %cst_86 = arith.constant 3.200000e+01 : f32
    %144 = vector.broadcast %cst_86 : f32 to vector<8x1xf32>
    %145 = arith.divf %143, %144 : vector<8x1xf32>
    %146 = vector.broadcast %145 : vector<8x1xf32> to vector<8x32xf32>
    %147 = arith.subf %139, %146 : vector<8x32xf32>
    %148 = arith.mulf %147, %147 : vector<8x32xf32>
    %cst_87 = arith.constant dense<0.000000e+00> : vector<8xf32>
    %149 = vector.multi_reduction <add>, %148, %cst_87 [1] : vector<8x32xf32> to vector<8xf32>
    %150 = vector.shape_cast %149 : vector<8xf32> to vector<8x1xf32>
    %cst_88 = arith.constant 3.200000e+01 : f32
    %151 = vector.broadcast %cst_88 : f32 to vector<8x1xf32>
    %152 = arith.divf %150, %151 : vector<8x1xf32>
    %cst_89 = arith.constant 9.99999974E-6 : f32
    %153 = vector.broadcast %cst_89 : f32 to vector<8x1xf32>
    %154 = arith.addf %152, %153 : vector<8x1xf32>
    %155 = math.rsqrt %154 : vector<8x1xf32>
    %156 = vector.broadcast %145 : vector<8x1xf32> to vector<8x32xf32>
    %157 = arith.subf %139, %156 : vector<8x32xf32>
    %158 = vector.broadcast %155 : vector<8x1xf32> to vector<8x32xf32>
    %159 = arith.mulf %157, %158 : vector<8x32xf32>
    %160 = vector.broadcast %140 : vector<1x32xf32> to vector<8x32xf32>
    %161 = arith.mulf %159, %160 : vector<8x32xf32>
    %162 = vector.broadcast %141 : vector<1x32xf32> to vector<8x32xf32>
    %163 = arith.addf %161, %162 : vector<8x32xf32>
    %c0_90 = arith.constant 0 : index
    %c0_91 = arith.constant 0 : index
    %c0_92 = arith.constant 0 : index
    %164 = vector.load %arg18[%c0_90, %c0_91, %c0_92] : memref<1x8x32xf32, #tpu.memory_space<vmem>>, vector<1x8x32xf32>
    %165 = vector.shape_cast %164 : vector<1x8x32xf32> to vector<8x32xf32>
    %166 = vector.shape_cast %163 : vector<8x32xf32> to vector<1x8x32xf32>
    tpu.vector_store %arg18[%c0_90, %c0_91, %c0_92], %166 {strides = array<i32>} : memref<1x8x32xf32, #tpu.memory_space<vmem>>, vector<1x8x32xf32>,
    return
  }
  func.func @transform_0(%arg0: i32, %arg1: i32) -> (i32, i32, i32) {
    %c0_i32 = arith.constant 0 : i32
    %c0_i32_0 = arith.constant 0 : i32
    return %arg0, %arg1, %c0_i32 : i32, i32, i32
  }
  func.func @transform_1(%arg0: i32, %arg1: i32) -> (i32, i32, i32) {
    %c0_i32 = arith.constant 0 : i32
    %c0_i32_0 = arith.constant 0 : i32
    %c0_i32_1 = arith.constant 0 : i32
    return %arg0, %c0_i32, %c0_i32_0 : i32, i32, i32
  }
  func.func @transform_2(%arg0: i32, %arg1: i32) -> (i32, i32) {
    %c0_i32 = arith.constant 0 : i32
    %c0_i32_0 = arith.constant 0 : i32
    %c0_i32_1 = arith.constant 0 : i32
    return %c0_i32, %c0_i32_0 : i32, i32
  }
  func.func @transform_3(%arg0: i32, %arg1: i32) -> (i32, i32) {
    %c0_i32 = arith.constant 0 : i32
    %c0_i32_0 = arith.constant 0 : i32
    %c0_i32_1 = arith.constant 0 : i32
    return %c0_i32, %c0_i32_0 : i32, i32
  }
  func.func @transform_4(%arg0: i32, %arg1: i32) -> (i32, i32) {
    %c0_i32 = arith.constant 0 : i32
    %c0_i32_0 = arith.constant 0 : i32
    %c0_i32_1 = arith.constant 0 : i32
    return %c0_i32, %c0_i32_0 : i32, i32
  }
  func.func @transform_5(%arg0: i32, %arg1: i32) -> (i32, i32) {
    %c0_i32 = arith.constant 0 : i32
    %c0_i32_0 = arith.constant 0 : i32
    %c0_i32_1 = arith.constant 0 : i32
    return %c0_i32, %c0_i32_0 : i32, i32
  }
  func.func @transform_6(%arg0: i32, %arg1: i32) -> (i32, i32) {
    %c0_i32 = arith.constant 0 : i32
    %c0_i32_0 = arith.constant 0 : i32
    %c0_i32_1 = arith.constant 0 : i32
    return %c0_i32, %c0_i32_0 : i32, i32
  }
  func.func @transform_7(%arg0: i32, %arg1: i32) -> (i32, i32) {
    %c0_i32 = arith.constant 0 : i32
    %c0_i32_0 = arith.constant 0 : i32
    %c0_i32_1 = arith.constant 0 : i32
    return %c0_i32, %c0_i32_0 : i32, i32
  }
  func.func @transform_8(%arg0: i32, %arg1: i32) -> (i32, i32) {
    %c0_i32 = arith.constant 0 : i32
    %c0_i32_0 = arith.constant 0 : i32
    %c0_i32_1 = arith.constant 0 : i32
    return %c0_i32, %c0_i32_0 : i32, i32
  }
  func.func @transform_9(%arg0: i32, %arg1: i32) -> (i32, i32) {
    %c0_i32 = arith.constant 0 : i32
    %c0_i32_0 = arith.constant 0 : i32
    %c0_i32_1 = arith.constant 0 : i32
    return %c0_i32, %c0_i32_0 : i32, i32
  }
  func.func @transform_10(%arg0: i32, %arg1: i32) -> (i32, i32) {
    %c0_i32 = arith.constant 0 : i32
    %c0_i32_0 = arith.constant 0 : i32
    %c0_i32_1 = arith.constant 0 : i32
    return %c0_i32, %c0_i32_0 : i32, i32
  }
  func.func @transform_11(%arg0: i32, %arg1: i32) -> (i32, i32) {
    %c0_i32 = arith.constant 0 : i32
    %c0_i32_0 = arith.constant 0 : i32
    %c0_i32_1 = arith.constant 0 : i32
    return %c0_i32, %c0_i32_0 : i32, i32
  }
  func.func @transform_12(%arg0: i32, %arg1: i32) -> (i32, i32) {
    %c0_i32 = arith.constant 0 : i32
    %c0_i32_0 = arith.constant 0 : i32
    %c0_i32_1 = arith.constant 0 : i32
    return %c0_i32, %c0_i32_0 : i32, i32
  }
  func.func @transform_13(%arg0: i32, %arg1: i32) -> (i32, i32) {
    %c0_i32 = arith.constant 0 : i32
    %c0_i32_0 = arith.constant 0 : i32
    %c0_i32_1 = arith.constant 0 : i32
    return %c0_i32, %c0_i32_0 : i32, i32
  }
  func.func @transform_14(%arg0: i32, %arg1: i32) -> (i32, i32) {
    %c0_i32 = arith.constant 0 : i32
    %c0_i32_0 = arith.constant 0 : i32
    %c0_i32_1 = arith.constant 0 : i32
    return %c0_i32, %c0_i32_0 : i32, i32
  }
  func.func @transform_15(%arg0: i32, %arg1: i32) -> (i32, i32) {
    %c0_i32 = arith.constant 0 : i32
    %c0_i32_0 = arith.constant 0 : i32
    %c0_i32_1 = arith.constant 0 : i32
    return %c0_i32, %c0_i32_0 : i32, i32
  }
  func.func @transform_16(%arg0: i32, %arg1: i32) -> (i32, i32, i32) {
    %c0_i32 = arith.constant 0 : i32
    %c0_i32_0 = arith.constant 0 : i32
    return %arg0, %arg1, %c0_i32 : i32, i32, i32
  }
  func.func @transform_17(%arg0: i32, %arg1: i32) -> (i32, i32, i32, i32) {
    %c0_i32 = arith.constant 0 : i32
    %c0_i32_0 = arith.constant 0 : i32
    %c0_i32_1 = arith.constant 0 : i32
    return %arg0, %c0_i32, %arg1, %c0_i32_0 : i32, i32, i32, i32
  }
}

module attributes {stable_mosaic.version = 11 : i64} {
  func.func @encoder_layer_kernel(%arg0: i32, %arg1: i32, %arg2: memref<1x8x32xf32, #tpu.memory_space<vmem>>, %arg3: memref<1x8x32xf32, #tpu.memory_space<vmem>>, %arg4: memref<32x32xbf16, #tpu.memory_space<vmem>>, %arg5: memref<32x64xbf16, #tpu.memory_space<vmem>>, %arg6: memref<32x32xbf16, #tpu.memory_space<vmem>>, %arg7: memref<32x128xbf16, #tpu.memory_space<vmem>>, %arg8: memref<128x32xbf16, #tpu.memory_space<vmem>>, %arg9: memref<1x32xf32, #tpu.memory_space<vmem>>, %arg10: memref<1x64xf32, #tpu.memory_space<vmem>>, %arg11: memref<1x32xf32, #tpu.memory_space<vmem>>, %arg12: memref<1x128xf32, #tpu.memory_space<vmem>>, %arg13: memref<1x32xf32, #tpu.memory_space<vmem>>, %arg14: memref<1x32xf32, #tpu.memory_space<vmem>>, %arg15: memref<1x32xf32, #tpu.memory_space<vmem>>, %arg16: memref<1x32xf32, #tpu.memory_space<vmem>>, %arg17: memref<1x32xf32, #tpu.memory_space<vmem>>, %arg18: memref<1x8x32xf32, #tpu.memory_space<vmem>>, %arg19: memref<1x4x8x8xbf16, #tpu.memory_space<vmem>>, %arg20: memref<8x64xbf16, #tpu.memory_space<vmem>>, %arg21: memref<8x32xbf16, #tpu.memory_space<vmem>>) attributes {dimension_semantics = [#tpu.dimension_semantics<parallel>, #tpu.dimension_semantics<arbitrary>], iteration_bounds = array<i64: 2, 1>, scalar_prefetch = 0 : i64, scratch_operands = 2 : i64, tpu.core_type = #tpu.core_type<tc>, window_params = [{transform_indices = @transform_0, window_bounds = array<i64: 1, 8, 32>}, {transform_indices = @transform_1, window_bounds = array<i64: 1, 8, 32>}, {pipeline_mode = #tpu.pipeline_mode<synchronous>, transform_indices = @transform_2, window_bounds = array<i64: 32, 32>}, {pipeline_mode = #tpu.pipeline_mode<synchronous>, transform_indices = @transform_3, window_bounds = array<i64: 32, 64>}, {pipeline_mode = #tpu.pipeline_mode<synchronous>, transform_indices = @transform_4, window_bounds = array<i64: 32, 32>}, {pipeline_mode = #tpu.pipeline_mode<synchronous>, transform_indices = @transform_5, window_bounds = array<i64: 32, 128>}, {pipeline_mode = #tpu.pipeline_mode<synchronous>, transform_indices = @transform_6, window_bounds = array<i64: 128, 32>}, {pipeline_mode = #tpu.pipeline_mode<synchronous>, transform_indices = @transform_7, window_bounds = array<i64: 1, 32>}, {pipeline_mode = #tpu.pipeline_mode<synchronous>, transform_indices = @transform_8, window_bounds = array<i64: 1, 64>}, {pipeline_mode = #tpu.pipeline_mode<synchronous>, transform_indices = @transform_9, window_bounds = array<i64: 1, 32>}, {pipeline_mode = #tpu.pipeline_mode<synchronous>, transform_indices = @transform_10, window_bounds = array<i64: 1, 128>}, {pipeline_mode = #tpu.pipeline_mode<synchronous>, transform_indices = @transform_11, window_bounds = array<i64: 1, 32>}, {pipeline_mode = #tpu.pipeline_mode<synchronous>, transform_indices = @transform_12, window_bounds = array<i64: 1, 32>}, {pipeline_mode = #tpu.pipeline_mode<synchronous>, transform_indices = @transform_13, window_bounds = array<i64: 1, 32>}, {pipeline_mode = #tpu.pipeline_mode<synchronous>, transform_indices = @transform_14, window_bounds = array<i64: 1, 32>}, {pipeline_mode = #tpu.pipeline_mode<synchronous>, transform_indices = @transform_15, window_bounds = array<i64: 1, 32>}, {transform_indices = @transform_16, window_bounds = array<i64: 1, 8, 32>}, {transform_indices = @transform_17, window_bounds = array<i64: 1, 4, 8, 8>}]} {
    %c0_i32 = arith.constant 0 : i32
    %0 = arith.cmpi eq, %arg1, %c0_i32 : i32
    %1 = arith.extui %0 : i1 to i32
    %c0_i32_0 = arith.constant 0 : i32
    %2 = arith.cmpi ne, %1, %c0_i32_0 : i32
    scf.if %2 {
      %c0_93 = arith.constant 0 : index
      %c0_94 = arith.constant 0 : index
      %c0_95 = arith.constant 0 : index
      %167 = vector.load %arg3[%c0_93, %c0_94, %c0_95] : memref<1x8x32xf32, #tpu.memory_space<vmem>>, vector<1x8x32xf32>
      %168 = vector.shape_cast %167 : vector<1x8x32xf32> to vector<8x32xf32>
      %169 = arith.truncf %168 : vector<8x32xf32> to vector<8x32xbf16>
      %c0_96 = arith.constant 0 : index
      %c0_97 = arith.constant 0 : index
      %170 = vector.load %arg5[%c0_96, %c0_97] : memref<32x64xbf16, #tpu.memory_space<vmem>>, vector<32x64xbf16>
      %cst_98 = arith.constant dense<0.000000e+00> : vector<8x64xf32>
      %171 = tpu.matmul %169, %170, %cst_98 {dimension_numbers = #tpu.dot_dimension_numbers<[1], [0], [0], [1], [0, 0, 1, 1], [], []>} : vector<8x32xbf16>, vector<32x64xbf16>, vector<8x64xf32> -> vector<8x64xf32>
      %c0_99 = arith.constant 0 : index
      %c0_100 = arith.constant 0 : index
      %172 = vector.load %arg10[%c0_99, %c0_100] : memref<1x64xf32, #tpu.memory_space<vmem>>, vector<1x64xf32>
      %173 = vector.broadcast %172 : vector<1x64xf32> to vector<8x64xf32>
      %174 = arith.addf %171, %173 : vector<8x64xf32>
      %175 = arith.truncf %174 : vector<8x64xf32> to vector<8x64xbf16>
      %c0_101 = arith.constant 0 : index
      %c0_102 = arith.constant 0 : index
      %176 = vector.load %arg20[%c0_101, %c0_102] : memref<8x64xbf16, #tpu.memory_space<vmem>>, vector<8x64xbf16>
      tpu.vector_store %arg20[%c0_101, %c0_102], %175 {strides = array<i32>} : memref<8x64xbf16, #tpu.memory_space<vmem>>, vector<8x64xbf16>,
    } else {
    }
    %c0 = arith.constant 0 : index
    %c0_1 = arith.constant 0 : index
    %c0_2 = arith.constant 0 : index
    %3 = vector.load %arg2[%c0, %c0_1, %c0_2] : memref<1x8x32xf32, #tpu.memory_space<vmem>>, vector<1x8x32xf32>
    %4 = vector.shape_cast %3 : vector<1x8x32xf32> to vector<8x32xf32>
    %5 = arith.truncf %4 : vector<8x32xf32> to vector<8x32xbf16>
    %c0_3 = arith.constant 0 : index
    %c0_4 = arith.constant 0 : index
    %6 = vector.load %arg4[%c0_3, %c0_4] : memref<32x32xbf16, #tpu.memory_space<vmem>>, vector<32x32xbf16>
    %cst = arith.constant dense<0.000000e+00> : vector<8x32xf32>
    %7 = tpu.matmul %5, %6, %cst {dimension_numbers = #tpu.dot_dimension_numbers<[1], [0], [0], [1], [0, 0, 1, 1], [], []>} : vector<8x32xbf16>, vector<32x32xbf16>, vector<8x32xf32> -> vector<8x32xf32>
    %c0_5 = arith.constant 0 : index
    %c0_6 = arith.constant 0 : index
    %8 = vector.load %arg9[%c0_5, %c0_6] : memref<1x32xf32, #tpu.memory_space<vmem>>, vector<1x32xf32>
    %9 = vector.broadcast %8 : vector<1x32xf32> to vector<8x32xf32>
    %10 = arith.addf %7, %9 : vector<8x32xf32>
    %11 = arith.truncf %10 : vector<8x32xf32> to vector<8x32xbf16>
    %12 = vector.extract_strided_slice %11 {offsets = [0, 0], sizes = [8, 8], strides = [1, 1]} : vector<8x32xbf16> to vector<8x8xbf16>
    %c0_7 = arith.constant 0 : index
    %c0_8 = arith.constant 0 : index
    %13 = vector.load %arg20[%c0_7, %c0_8] : memref<8x64xbf16, #tpu.memory_space<vmem>>, vector<8x8xbf16>
    %c0_9 = arith.constant 0 : index
    %c32 = arith.constant 32 : index
    %14 = vector.load %arg20[%c0_9, %c32] : memref<8x64xbf16, #tpu.memory_space<vmem>>, vector<8x8xbf16>
    %cst_10 = arith.constant dense<0.000000e+00> : vector<8x8xf32>
    %15 = tpu.matmul %12, %13, %cst_10 {dimension_numbers = #tpu.dot_dimension_numbers<[1], [1], [0], [0], [0, 0, 1, 0], [], []>} : vector<8x8xbf16>, vector<8x8xbf16>, vector<8x8xf32> -> vector<8x8xf32>
    %cst_11 = arith.constant dense<0xFF800000> : vector<8xf32>
    %16 = vector.multi_reduction <maximumf>, %15, %cst_11 [1] : vector<8x8xf32> to vector<8xf32>
    %17 = vector.shape_cast %16 : vector<8xf32> to vector<8x1xf32>
    %18 = vector.broadcast %17 : vector<8x1xf32> to vector<8x8xf32>
    %19 = arith.subf %15, %18 : vector<8x8xf32>
    %20 = math.exp %19 : vector<8x8xf32>
    %cst_12 = arith.constant dense<0.000000e+00> : vector<8xf32>
    %21 = vector.multi_reduction <add>, %20, %cst_12 [1] : vector<8x8xf32> to vector<8xf32>
    %22 = vector.shape_cast %21 : vector<8xf32> to vector<8x1xf32>
    %23 = vector.broadcast %22 : vector<8x1xf32> to vector<8x8xf32>
    %24 = arith.divf %20, %23 : vector<8x8xf32>
    %25 = arith.truncf %24 : vector<8x8xf32> to vector<8x8xbf16>
    %c0_13 = arith.constant 0 : index
    %c0_14 = arith.constant 0 : index
    %c0_15 = arith.constant 0 : index
    %c0_16 = arith.constant 0 : index
    %26 = vector.load %arg19[%c0_13, %c0_14, %c0_15, %c0_16] : memref<1x4x8x8xbf16, #tpu.memory_space<vmem>>, vector<1x1x8x8xbf16>
    %27 = vector.shape_cast %26 : vector<1x1x8x8xbf16> to vector<8x8xbf16>
    %28 = vector.shape_cast %25 : vector<8x8xbf16> to vector<1x1x8x8xbf16>
    tpu.vector_store %arg19[%c0_13, %c0_14, %c0_15, %c0_16], %28 {strides = array<i32>} : memref<1x4x8x8xbf16, #tpu.memory_space<vmem>>, vector<1x1x8x8xbf16>,
    %cst_17 = arith.constant dense<0.000000e+00> : vector<8x8xf32>
    %29 = tpu.matmul %25, %14, %cst_17 {dimension_numbers = #tpu.dot_dimension_numbers<[1], [0], [0], [1], [0, 0, 1, 1], [], []>} : vector<8x8xbf16>, vector<8x8xbf16>, vector<8x8xf32> -> vector<8x8xf32>
    %30 = arith.truncf %29 : vector<8x8xf32> to vector<8x8xbf16>
    %c0_18 = arith.constant 0 : index
    %c0_19 = arith.constant 0 : index
    %31 = vector.load %arg21[%c0_18, %c0_19] : memref<8x32xbf16, #tpu.memory_space<vmem>>, vector<8x8xbf16>
    tpu.vector_store %arg21[%c0_18, %c0_19], %30 {strides = array<i32>} : memref<8x32xbf16, #tpu.memory_space<vmem>>, vector<8x8xbf16>,
    %32 = vector.extract_strided_slice %11 {offsets = [0, 8], sizes = [8, 8], strides = [1, 1]} : vector<8x32xbf16> to vector<8x8xbf16>
    %c0_20 = arith.constant 0 : index
    %c8 = arith.constant 8 : index
    %33 = vector.load %arg20[%c0_20, %c8] : memref<8x64xbf16, #tpu.memory_space<vmem>>, vector<8x8xbf16>
    %c0_21 = arith.constant 0 : index
    %c40 = arith.constant 40 : index
    %34 = vector.load %arg20[%c0_21, %c40] : memref<8x64xbf16, #tpu.memory_space<vmem>>, vector<8x8xbf16>
    %cst_22 = arith.constant dense<0.000000e+00> : vector<8x8xf32>
    %35 = tpu.matmul %32, %33, %cst_22 {dimension_numbers = #tpu.dot_dimension_numbers<[1], [1], [0], [0], [0, 0, 1, 0], [], []>} : vector<8x8xbf16>, vector<8x8xbf16>, vector<8x8xf32> -> vector<8x8xf32>
    %cst_23 = arith.constant dense<0xFF800000> : vector<8xf32>
    %36 = vector.multi_reduction <maximumf>, %35, %cst_23 [1] : vector<8x8xf32> to vector<8xf32>
    %37 = vector.shape_cast %36 : vector<8xf32> to vector<8x1xf32>
    %38 = vector.broadcast %37 : vector<8x1xf32> to vector<8x8xf32>
    %39 = arith.subf %35, %38 : vector<8x8xf32>
    %40 = math.exp %39 : vector<8x8xf32>
    %cst_24 = arith.constant dense<0.000000e+00> : vector<8xf32>
    %41 = vector.multi_reduction <add>, %40, %cst_24 [1] : vector<8x8xf32> to vector<8xf32>
    %42 = vector.shape_cast %41 : vector<8xf32> to vector<8x1xf32>
    %43 = vector.broadcast %42 : vector<8x1xf32> to vector<8x8xf32>
    %44 = arith.divf %40, %43 : vector<8x8xf32>
    %45 = arith.truncf %44 : vector<8x8xf32> to vector<8x8xbf16>
    %c0_25 = arith.constant 0 : index
    %c1 = arith.constant 1 : index
    %c0_26 = arith.constant 0 : index
    %c0_27 = arith.constant 0 : index
    %46 = vector.load %arg19[%c0_25, %c1, %c0_26, %c0_27] : memref<1x4x8x8xbf16, #tpu.memory_space<vmem>>, vector<1x1x8x8xbf16>
    %47 = vector.shape_cast %46 : vector<1x1x8x8xbf16> to vector<8x8xbf16>
    %48 = vector.shape_cast %45 : vector<8x8xbf16> to vector<1x1x8x8xbf16>
    tpu.vector_store %arg19[%c0_25, %c1, %c0_26, %c0_27], %48 {strides = array<i32>} : memref<1x4x8x8xbf16, #tpu.memory_space<vmem>>, vector<1x1x8x8xbf16>,
    %cst_28 = arith.constant dense<0.000000e+00> : vector<8x8xf32>
    %49 = tpu.matmul %45, %34, %cst_28 {dimension_numbers = #tpu.dot_dimension_numbers<[1], [0], [0], [1], [0, 0, 1, 1], [], []>} : vector<8x8xbf16>, vector<8x8xbf16>, vector<8x8xf32> -> vector<8x8xf32>
    %50 = arith.truncf %49 : vector<8x8xf32> to vector<8x8xbf16>
    %c0_29 = arith.constant 0 : index
    %c8_30 = arith.constant 8 : index
    %51 = vector.load %arg21[%c0_29, %c8_30] : memref<8x32xbf16, #tpu.memory_space<vmem>>, vector<8x8xbf16>
    tpu.vector_store %arg21[%c0_29, %c8_30], %50 {strides = array<i32>} : memref<8x32xbf16, #tpu.memory_space<vmem>>, vector<8x8xbf16>,
    %52 = vector.extract_strided_slice %11 {offsets = [0, 16], sizes = [8, 8], strides = [1, 1]} : vector<8x32xbf16> to vector<8x8xbf16>
    %c0_31 = arith.constant 0 : index
    %c16 = arith.constant 16 : index
    %53 = vector.load %arg20[%c0_31, %c16] : memref<8x64xbf16, #tpu.memory_space<vmem>>, vector<8x8xbf16>
    %c0_32 = arith.constant 0 : index
    %c48 = arith.constant 48 : index
    %54 = vector.load %arg20[%c0_32, %c48] : memref<8x64xbf16, #tpu.memory_space<vmem>>, vector<8x8xbf16>
    %cst_33 = arith.constant dense<0.000000e+00> : vector<8x8xf32>
    %55 = tpu.matmul %52, %53, %cst_33 {dimension_numbers = #tpu.dot_dimension_numbers<[1], [1], [0], [0], [0, 0, 1, 0], [], []>} : vector<8x8xbf16>, vector<8x8xbf16>, vector<8x8xf32> -> vector<8x8xf32>
    %cst_34 = arith.constant dense<0xFF800000> : vector<8xf32>
    %56 = vector.multi_reduction <maximumf>, %55, %cst_34 [1] : vector<8x8xf32> to vector<8xf32>
    %57 = vector.shape_cast %56 : vector<8xf32> to vector<8x1xf32>
    %58 = vector.broadcast %57 : vector<8x1xf32> to vector<8x8xf32>
    %59 = arith.subf %55, %58 : vector<8x8xf32>
    %60 = math.exp %59 : vector<8x8xf32>
    %cst_35 = arith.constant dense<0.000000e+00> : vector<8xf32>
    %61 = vector.multi_reduction <add>, %60, %cst_35 [1] : vector<8x8xf32> to vector<8xf32>
    %62 = vector.shape_cast %61 : vector<8xf32> to vector<8x1xf32>
    %63 = vector.broadcast %62 : vector<8x1xf32> to vector<8x8xf32>
    %64 = arith.divf %60, %63 : vector<8x8xf32>
    %65 = arith.truncf %64 : vector<8x8xf32> to vector<8x8xbf16>
    %c0_36 = arith.constant 0 : index
    %c2 = arith.constant 2 : index
    %c0_37 = arith.constant 0 : index
    %c0_38 = arith.constant 0 : index
    %66 = vector.load %arg19[%c0_36, %c2, %c0_37, %c0_38] : memref<1x4x8x8xbf16, #tpu.memory_space<vmem>>, vector<1x1x8x8xbf16>
    %67 = vector.shape_cast %66 : vector<1x1x8x8xbf16> to vector<8x8xbf16>
    %68 = vector.shape_cast %65 : vector<8x8xbf16> to vector<1x1x8x8xbf16>
    tpu.vector_store %arg19[%c0_36, %c2, %c0_37, %c0_38], %68 {strides = array<i32>} : memref<1x4x8x8xbf16, #tpu.memory_space<vmem>>, vector<1x1x8x8xbf16>,
    %cst_39 = arith.constant dense<0.000000e+00> : vector<8x8xf32>
    %69 = tpu.matmul %65, %54, %cst_39 {dimension_numbers = #tpu.dot_dimension_numbers<[1], [0], [0], [1], [0, 0, 1, 1], [], []>} : vector<8x8xbf16>, vector<8x8xbf16>, vector<8x8xf32> -> vector<8x8xf32>
    %70 = arith.truncf %69 : vector<8x8xf32> to vector<8x8xbf16>
    %c0_40 = arith.constant 0 : index
    %c16_41 = arith.constant 16 : index
    %71 = vector.load %arg21[%c0_40, %c16_41] : memref<8x32xbf16, #tpu.memory_space<vmem>>, vector<8x8xbf16>
    tpu.vector_store %arg21[%c0_40, %c16_41], %70 {strides = array<i32>} : memref<8x32xbf16, #tpu.memory_space<vmem>>, vector<8x8xbf16>,
    %72 = vector.extract_strided_slice %11 {offsets = [0, 24], sizes = [8, 8], strides = [1, 1]} : vector<8x32xbf16> to vector<8x8xbf16>
    %c0_42 = arith.constant 0 : index
    %c24 = arith.constant 24 : index
    %73 = vector.load %arg20[%c0_42, %c24] : memref<8x64xbf16, #tpu.memory_space<vmem>>, vector<8x8xbf16>
    %c0_43 = arith.constant 0 : index
    %c56 = arith.constant 56 : index
    %74 = vector.load %arg20[%c0_43, %c56] : memref<8x64xbf16, #tpu.memory_space<vmem>>, vector<8x8xbf16>
    %cst_44 = arith.constant dense<0.000000e+00> : vector<8x8xf32>
    %75 = tpu.matmul %72, %73, %cst_44 {dimension_numbers = #tpu.dot_dimension_numbers<[1], [1], [0], [0], [0, 0, 1, 0], [], []>} : vector<8x8xbf16>, vector<8x8xbf16>, vector<8x8xf32> -> vector<8x8xf32>
    %cst_45 = arith.constant dense<0xFF800000> : vector<8xf32>
    %76 = vector.multi_reduction <maximumf>, %75, %cst_45 [1] : vector<8x8xf32> to vector<8xf32>
    %77 = vector.shape_cast %76 : vector<8xf32> to vector<8x1xf32>
    %78 = vector.broadcast %77 : vector<8x1xf32> to vector<8x8xf32>
    %79 = arith.subf %75, %78 : vector<8x8xf32>
    %80 = math.exp %79 : vector<8x8xf32>
    %cst_46 = arith.constant dense<0.000000e+00> : vector<8xf32>
    %81 = vector.multi_reduction <add>, %80, %cst_46 [1] : vector<8x8xf32> to vector<8xf32>
    %82 = vector.shape_cast %81 : vector<8xf32> to vector<8x1xf32>
    %83 = vector.broadcast %82 : vector<8x1xf32> to vector<8x8xf32>
    %84 = arith.divf %80, %83 : vector<8x8xf32>
    %85 = arith.truncf %84 : vector<8x8xf32> to vector<8x8xbf16>
    %c0_47 = arith.constant 0 : index
    %c3 = arith.constant 3 : index
    %c0_48 = arith.constant 0 : index
    %c0_49 = arith.constant 0 : index
    %86 = vector.load %arg19[%c0_47, %c3, %c0_48, %c0_49] : memref<1x4x8x8xbf16, #tpu.memory_space<vmem>>, vector<1x1x8x8xbf16>
    %87 = vector.shape_cast %86 : vector<1x1x8x8xbf16> to vector<8x8xbf16>
    %88 = vector.shape_cast %85 : vector<8x8xbf16> to vector<1x1x8x8xbf16>
    tpu.vector_store %arg19[%c0_47, %c3, %c0_48, %c0_49], %88 {strides = array<i32>} : memref<1x4x8x8xbf16, #tpu.memory_space<vmem>>, vector<1x1x8x8xbf16>,
    %cst_50 = arith.constant dense<0.000000e+00> : vector<8x8xf32>
    %89 = tpu.matmul %85, %74, %cst_50 {dimension_numbers = #tpu.dot_dimension_numbers<[1], [0], [0], [1], [0, 0, 1, 1], [], []>} : vector<8x8xbf16>, vector<8x8xbf16>, vector<8x8xf32> -> vector<8x8xf32>
    %90 = arith.truncf %89 : vector<8x8xf32> to vector<8x8xbf16>
    %c0_51 = arith.constant 0 : index
    %c24_52 = arith.constant 24 : index
    %91 = vector.load %arg21[%c0_51, %c24_52] : memref<8x32xbf16, #tpu.memory_space<vmem>>, vector<8x8xbf16>
    tpu.vector_store %arg21[%c0_51, %c24_52], %90 {strides = array<i32>} : memref<8x32xbf16, #tpu.memory_space<vmem>>, vector<8x8xbf16>,
    %c0_53 = arith.constant 0 : index
    %c0_54 = arith.constant 0 : index
    %92 = vector.load %arg21[%c0_53, %c0_54] : memref<8x32xbf16, #tpu.memory_space<vmem>>, vector<8x32xbf16>
    %c0_55 = arith.constant 0 : index
    %c0_56 = arith.constant 0 : index
    %93 = vector.load %arg6[%c0_55, %c0_56] : memref<32x32xbf16, #tpu.memory_space<vmem>>, vector<32x32xbf16>
    %cst_57 = arith.constant dense<0.000000e+00> : vector<8x32xf32>
    %94 = tpu.matmul %92, %93, %cst_57 {dimension_numbers = #tpu.dot_dimension_numbers<[1], [0], [0], [1], [0, 0, 1, 1], [], []>} : vector<8x32xbf16>, vector<32x32xbf16>, vector<8x32xf32> -> vector<8x32xf32>
    %c0_58 = arith.constant 0 : index
    %c0_59 = arith.constant 0 : index
    %95 = vector.load %arg11[%c0_58, %c0_59] : memref<1x32xf32, #tpu.memory_space<vmem>>, vector<1x32xf32>
    %96 = vector.broadcast %95 : vector<1x32xf32> to vector<8x32xf32>
    %97 = arith.addf %94, %96 : vector<8x32xf32>
    %98 = arith.addf %4, %97 : vector<8x32xf32>
    %c0_60 = arith.constant 0 : index
    %c0_61 = arith.constant 0 : index
    %99 = vector.load %arg14[%c0_60, %c0_61] : memref<1x32xf32, #tpu.memory_space<vmem>>, vector<1x32xf32>
    %c0_62 = arith.constant 0 : index
    %c0_63 = arith.constant 0 : index
    %100 = vector.load %arg15[%c0_62, %c0_63] : memref<1x32xf32, #tpu.memory_space<vmem>>, vector<1x32xf32>
    %cst_64 = arith.constant dense<0.000000e+00> : vector<8xf32>
    %101 = vector.multi_reduction <add>, %98, %cst_64 [1] : vector<8x32xf32> to vector<8xf32>
    %102 = vector.shape_cast %101 : vector<8xf32> to vector<8x1xf32>
    %cst_65 = arith.constant 3.200000e+01 : f32
    %103 = vector.broadcast %cst_65 : f32 to vector<8x1xf32>
    %104 = arith.divf %102, %103 : vector<8x1xf32>
    %105 = vector.broadcast %104 : vector<8x1xf32> to vector<8x32xf32>
    %106 = arith.subf %98, %105 : vector<8x32xf32>
    %107 = arith.mulf %106, %106 : vector<8x32xf32>
    %cst_66 = arith.constant dense<0.000000e+00> : vector<8xf32>
    %108 = vector.multi_reduction <add>, %107, %cst_66 [1] : vector<8x32xf32> to vector<8xf32>
    %109 = vector.shape_cast %108 : vector<8xf32> to vector<8x1xf32>
    %cst_67 = arith.constant 3.200000e+01 : f32
    %110 = vector.broadcast %cst_67 : f32 to vector<8x1xf32>
    %111 = arith.divf %109, %110 : vector<8x1xf32>
    %cst_68 = arith.constant 9.99999974E-6 : f32
    %112 = vector.broadcast %cst_68 : f32 to vector<8x1xf32>
    %113 = arith.addf %111, %112 : vector<8x1xf32>
    %114 = math.rsqrt %113 : vector<8x1xf32>
    %115 = vector.broadcast %104 : vector<8x1xf32> to vector<8x32xf32>
    %116 = arith.subf %98, %115 : vector<8x32xf32>
    %117 = vector.broadcast %114 : vector<8x1xf32> to vector<8x32xf32>
    %118 = arith.mulf %116, %117 : vector<8x32xf32>
    %119 = vector.broadcast %99 : vector<1x32xf32> to vector<8x32xf32>
    %120 = arith.mulf %118, %119 : vector<8x32xf32>
    %121 = vector.broadcast %100 : vector<1x32xf32> to vector<8x32xf32>
    %122 = arith.addf %120, %121 : vector<8x32xf32>
    %123 = arith.truncf %122 : vector<8x32xf32> to vector<8x32xbf16>
    %cst_69 = arith.constant 0.000000e+00 : f32
    %124 = vector.broadcast %cst_69 : f32 to vector<8x32xf32>
    %c0_70 = arith.constant 0 : index
    %c0_71 = arith.constant 0 : index
    %125 = vector.load %arg7[%c0_70, %c0_71] : memref<32x128xbf16, #tpu.memory_space<vmem>>, vector<32x128xbf16>
    %cst_72 = arith.constant dense<0.000000e+00> : vector<8x128xf32>
    %126 = tpu.matmul %123, %125, %cst_72 {dimension_numbers = #tpu.dot_dimension_numbers<[1], [0], [0], [1], [0, 0, 1, 1], [], []>} : vector<8x32xbf16>, vector<32x128xbf16>, vector<8x128xf32> -> vector<8x128xf32>
    %c0_73 = arith.constant 0 : index
    %c0_74 = arith.constant 0 : index
    %127 = vector.load %arg12[%c0_73, %c0_74] : memref<1x128xf32, #tpu.memory_space<vmem>>, vector<1x128xf32>
    %128 = vector.broadcast %127 : vector<1x128xf32> to vector<8x128xf32>
    %129 = arith.addf %126, %128 : vector<8x128xf32>
    %cst_75 = arith.constant 0.000000e+00 : f32
    %130 = vector.broadcast %cst_75 : f32 to vector<8x128xf32>
    %131 = arith.maximumf %129, %130 : vector<8x128xf32>
    %132 = arith.truncf %131 : vector<8x128xf32> to vector<8x128xbf16>
    %c0_76 = arith.constant 0 : index
    %c0_77 = arith.constant 0 : index
    %133 = vector.load %arg8[%c0_76, %c0_77] : memref<128x32xbf16, #tpu.memory_space<vmem>>, vector<128x32xbf16>
    %cst_78 = arith.constant dense<0.000000e+00> : vector<8x32xf32>
    %134 = tpu.matmul %132, %133, %cst_78 {dimension_numbers = #tpu.dot_dimension_numbers<[1], [0], [0], [1], [0, 0, 1, 1], [], []>} : vector<8x128xbf16>, vector<128x32xbf16>, vector<8x32xf32> -> vector<8x32xf32>
    %135 = arith.addf %124, %134 : vector<8x32xf32>
    %c0_79 = arith.constant 0 : index
    %c0_80 = arith.constant 0 : index
    %136 = vector.load %arg13[%c0_79, %c0_80] : memref<1x32xf32, #tpu.memory_space<vmem>>, vector<1x32xf32>
    %137 = vector.broadcast %136 : vector<1x32xf32> to vector<8x32xf32>
    %138 = arith.addf %135, %137 : vector<8x32xf32>
    %139 = arith.addf %122, %138 : vector<8x32xf32>
    %c0_81 = arith.constant 0 : index
    %c0_82 = arith.constant 0 : index
    %140 = vector.load %arg16[%c0_81, %c0_82] : memref<1x32xf32, #tpu.memory_space<vmem>>, vector<1x32xf32>
    %c0_83 = arith.constant 0 : index
    %c0_84 = arith.constant 0 : index
    %141 = vector.load %arg17[%c0_83, %c0_84] : memref<1x32xf32, #tpu.memory_space<vmem>>, vector<1x32xf32>
    %cst_85 = arith.constant dense<0.000000e+00> : vector<8xf32>
    %142 = vector.multi_reduction <add>, %139, %cst_85 [1] : vector<8x32xf32> to vector<8xf32>
    %143 = vector.shape_cast %142 : vector<8xf32> to vector<8x1xf32>
    %cst_86 = arith.constant 3.200000e+01 : f32
    %144 = vector.broadcast %cst_86 : f32 to vector<8x1xf32>
    %145 = arith.divf %143, %144 : vector<8x1xf32>
    %146 = vector.broadcast %145 : vector<8x1xf32> to vector<8x32xf32>
    %147 = arith.subf %139, %146 : vector<8x32xf32>
    %148 = arith.mulf %147, %147 : vector<8x32xf32>
    %cst_87 = arith.constant dense<0.000000e+00> : vector<8xf32>
    %149 = vector.multi_reduction <add>, %148, %cst_87 [1] : vector<8x32xf32> to vector<8xf32>
    %150 = vector.shape_cast %149 : vector<8xf32> to vector<8x1xf32>
    %cst_88 = arith.constant 3.200000e+01 : f32
    %151 = vector.broadcast %cst_88 : f32 to vector<8x1xf32>
    %152 = arith.divf %150, %151 : vector<8x1xf32>
    %cst_89 = arith.constant 9.99999974E-6 : f32
    %153 = vector.broadcast %cst_89 : f32 to vector<8x1xf32>
    %154 = arith.addf %152, %153 : vector<8x1xf32>
    %155 = math.rsqrt %154 : vector<8x1xf32>
    %156 = vector.broadcast %145 : vector<8x1xf32> to vector<8x32xf32>
    %157 = arith.subf %139, %156 : vector<8x32xf32>
    %158 = vector.broadcast %155 : vector<8x1xf32> to vector<8x32xf32>
    %159 = arith.mulf %157, %158 : vector<8x32xf32>
    %160 = vector.broadcast %140 : vector<1x32xf32> to vector<8x32xf32>
    %161 = arith.mulf %159, %160 : vector<8x32xf32>
    %162 = vector.broadcast %141 : vector<1x32xf32> to vector<8x32xf32>
    %163 = arith.addf %161, %162 : vector<8x32xf32>
    %c0_90 = arith.constant 0 : index
    %c0_91 = arith.constant 0 : index
    %c0_92 = arith.constant 0 : index
    %164 = vector.load %arg18[%c0_90, %c0_91, %c0_92] : memref<1x8x32xf32, #tpu.memory_space<vmem>>, vector<1x8x32xf32>
    %165 = vector.shape_cast %164 : vector<1x8x32xf32> to vector<8x32xf32>
    %166 = vector.shape_cast %163 : vector<8x32xf32> to vector<1x8x32xf32>
    tpu.vector_store %arg18[%c0_90, %c0_91, %c0_92], %166 {strides = array<i32>} : memref<1x8x32xf32, #tpu.memory_space<vmem>>, vector<1x8x32xf32>,
    return
  }
  func.func @transform_0(%arg0: i32, %arg1: i32) -> (i32, i32, i32) {
    %c0_i32 = arith.constant 0 : i32
    %c0_i32_0 = arith.constant 0 : i32
    return %arg0, %arg1, %c0_i32 : i32, i32, i32
  }
  func.func @transform_1(%arg0: i32, %arg1: i32) -> (i32, i32, i32) {
    %c0_i32 = arith.constant 0 : i32
    %c0_i32_0 = arith.constant 0 : i32
    %c0_i32_1 = arith.constant 0 : i32
    return %arg0, %c0_i32, %c0_i32_0 : i32, i32, i32
  }
  func.func @transform_2(%arg0: i32, %arg1: i32) -> (i32, i32) {
    %c0_i32 = arith.constant 0 : i32
    %c0_i32_0 = arith.constant 0 : i32
    %c0_i32_1 = arith.constant 0 : i32
    return %c0_i32, %c0_i32_0 : i32, i32
  }
  func.func @transform_3(%arg0: i32, %arg1: i32) -> (i32, i32) {
    %c0_i32 = arith.constant 0 : i32
    %c0_i32_0 = arith.constant 0 : i32
    %c0_i32_1 = arith.constant 0 : i32
    return %c0_i32, %c0_i32_0 : i32, i32
  }
  func.func @transform_4(%arg0: i32, %arg1: i32) -> (i32, i32) {
    %c0_i32 = arith.constant 0 : i32
    %c0_i32_0 = arith.constant 0 : i32
    %c0_i32_1 = arith.constant 0 : i32
    return %c0_i32, %c0_i32_0 : i32, i32
  }
  func.func @transform_5(%arg0: i32, %arg1: i32) -> (i32, i32) {
    %c0_i32 = arith.constant 0 : i32
    %c0_i32_0 = arith.constant 0 : i32
    %c0_i32_1 = arith.constant 0 : i32
    return %c0_i32, %c0_i32_0 : i32, i32
  }
  func.func @transform_6(%arg0: i32, %arg1: i32) -> (i32, i32) {
    %c0_i32 = arith.constant 0 : i32
    %c0_i32_0 = arith.constant 0 : i32
    %c0_i32_1 = arith.constant 0 : i32
    return %c0_i32, %c0_i32_0 : i32, i32
  }
  func.func @transform_7(%arg0: i32, %arg1: i32) -> (i32, i32) {
    %c0_i32 = arith.constant 0 : i32
    %c0_i32_0 = arith.constant 0 : i32
    %c0_i32_1 = arith.constant 0 : i32
    return %c0_i32, %c0_i32_0 : i32, i32
  }
  func.func @transform_8(%arg0: i32, %arg1: i32) -> (i32, i32) {
    %c0_i32 = arith.constant 0 : i32
    %c0_i32_0 = arith.constant 0 : i32
    %c0_i32_1 = arith.constant 0 : i32
    return %c0_i32, %c0_i32_0 : i32, i32
  }
  func.func @transform_9(%arg0: i32, %arg1: i32) -> (i32, i32) {
    %c0_i32 = arith.constant 0 : i32
    %c0_i32_0 = arith.constant 0 : i32
    %c0_i32_1 = arith.constant 0 : i32
    return %c0_i32, %c0_i32_0 : i32, i32
  }
  func.func @transform_10(%arg0: i32, %arg1: i32) -> (i32, i32) {
    %c0_i32 = arith.constant 0 : i32
    %c0_i32_0 = arith.constant 0 : i32
    %c0_i32_1 = arith.constant 0 : i32
    return %c0_i32, %c0_i32_0 : i32, i32
  }
  func.func @transform_11(%arg0: i32, %arg1: i32) -> (i32, i32) {
    %c0_i32 = arith.constant 0 : i32
    %c0_i32_0 = arith.constant 0 : i32
    %c0_i32_1 = arith.constant 0 : i32
    return %c0_i32, %c0_i32_0 : i32, i32
  }
  func.func @transform_12(%arg0: i32, %arg1: i32) -> (i32, i32) {
    %c0_i32 = arith.constant 0 : i32
    %c0_i32_0 = arith.constant 0 : i32
    %c0_i32_1 = arith.constant 0 : i32
    return %c0_i32, %c0_i32_0 : i32, i32
  }
  func.func @transform_13(%arg0: i32, %arg1: i32) -> (i32, i32) {
    %c0_i32 = arith.constant 0 : i32
    %c0_i32_0 = arith.constant 0 : i32
    %c0_i32_1 = arith.constant 0 : i32
    return %c0_i32, %c0_i32_0 : i32, i32
  }
  func.func @transform_14(%arg0: i32, %arg1: i32) -> (i32, i32) {
    %c0_i32 = arith.constant 0 : i32
    %c0_i32_0 = arith.constant 0 : i32
    %c0_i32_1 = arith.constant 0 : i32
    return %c0_i32, %c0_i32_0 : i32, i32
  }
  func.func @transform_15(%arg0: i32, %arg1: i32) -> (i32, i32) {
    %c0_i32 = arith.constant 0 : i32
    %c0_i32_0 = arith.constant 0 : i32
    %c0_i32_1 = arith.constant 0 : i32
    return %c0_i32, %c0_i32_0 : i32, i32
  }
  func.func @transform_16(%arg0: i32, %arg1: i32) -> (i32, i32, i32) {
    %c0_i32 = arith.constant 0 : i32
    %c0_i32_0 = arith.constant 0 : i32
    return %arg0, %arg1, %c0_i32 : i32, i32, i32
  }
  func.func @transform_17(%arg0: i32, %arg1: i32) -> (i32, i32, i32, i32) {
    %c0_i32 = arith.constant 0 : i32
    %c0_i32_0 = arith.constant 0 : i32
    %c0_i32_1 = arith.constant 0 : i32
    return %arg0, %c0_i32, %arg1, %c0_i32_0 : i32, i32, i32, i32
  }
}

</mosaic_0001>

<llo_original>
// kernel: tpu_custom_call.1
$region0: #{tpu_custom_call.1}
  #allocation0 [shape = 'u32[]', space=smem, size = 0x4, offset = 0x4, fixed_abs, tag = 'smem constant byte address 0x4 - core index']
  #allocation1 [shape = 'u32[144,128]{1,0:T(1,128)}', space=vmem, size = 0x12000, scoped, tag = 'internal scratch']
  #allocation2 [shape = 'bf16[8,64]{1,0:T(8,128)(2,1)}', space=vmem, size = 0x800, scoped, tag = 'scratch operand']
  #allocation3 [shape = 'bf16[8,32]{1,0:T(8,128)(2,1)}', space=vmem, size = 0x800, scoped, tag = 'scratch operand']
  %s0 = inlined_call_operand.vmem [shape: f32[2,8,32], index: 0, kind: input, shape index: {}]
  %s1 = inlined_call_operand.vmem [shape: f32[2,8,32], index: 1, kind: input, shape index: {}]
  %s2 = inlined_call_operand.vmem [shape: bf16[32,32], index: 2, kind: input, shape index: {}]
  %s3 = inlined_call_operand.vmem [shape: bf16[32,64], index: 3, kind: input, shape index: {}]
  %s4 = inlined_call_operand.vmem [shape: bf16[32,32], index: 4, kind: input, shape index: {}]
  %s5 = inlined_call_operand.hbm [shape: bf16[32,128], index: 5, kind: input, shape index: {}]
  %s6 = inlined_call_operand.vmem [shape: bf16[128,32], index: 6, kind: input, shape index: {}]
  %s7 = inlined_call_operand.vmem [shape: f32[1,32], index: 7, kind: input, shape index: {}]
  %s8 = inlined_call_operand.vmem [shape: f32[1,64], index: 8, kind: input, shape index: {}]
  %s9 = inlined_call_operand.vmem [shape: f32[1,32], index: 9, kind: input, shape index: {}]
  %s10 = inlined_call_operand.vmem [shape: f32[1,128], index: 10, kind: input, shape index: {}]
  %s11 = inlined_call_operand.vmem [shape: f32[1,32], index: 11, kind: input, shape index: {}]
  %s12 = inlined_call_operand.vmem [shape: f32[1,32], index: 12, kind: input, shape index: {}]
  %s13 = inlined_call_operand.vmem [shape: f32[1,32], index: 13, kind: input, shape index: {}]
  %s14 = inlined_call_operand.vmem [shape: f32[1,32], index: 14, kind: input, shape index: {}]
  %s15 = inlined_call_operand.vmem [shape: f32[1,32], index: 15, kind: input, shape index: {}]
  %s16 = inlined_call_operand.hbm [shape: f32[2,8,32], index: 16, kind: output, shape index: {0}]
  %s17 = inlined_call_operand.hbm [shape: bf16[2,4,8,8], index: 17, kind: output, shape index: {1}]
  %18 = xla_tuple %s16, %s17
  %s19 = sld [smem:[#allocation0]]
  $region113: #{tpu_custom_call.1} parent=0
    _
  %s21 = ssub.s32 1, %s19
  %s22 = scalar_select 0, %s21, %s19
  $region1: #{tpu_custom_call.1} parent=0
    #allocation4 [shape = 'u8[8192]{0}', space=vmem, size = 0x2000, scoped, tag = 'input window, operand 5, single buffered']
    #allocation5 [shape = 's32[2]{0}', space=sflag, size = 0x8, scoped, tag = 'scoped memory for tpu_custom_call.1']
    #allocation6 [shape = 's32[2]{0}', space=sflag, size = 0x8, scoped, tag = 'scoped memory for tpu_custom_call.1']
    #allocation7 [shape = 'u8[8192]{0}', space=vmem, size = 0x2000, scoped, tag = 'output window, operand 0']
    #allocation8 [shape = 'u8[16384]{0}', space=vmem, size = 0x4000, scoped, tag = 'output window, operand 1']
    #allocation9 [shape = 's32[2]{0}', space=sflag, size = 0x8, scoped, tag = 'scoped memory for tpu_custom_call.1']
    %23 = vsyncpa [#allocation5], 0
    %24 = vsyncpa [#allocation6], 0
    %s25 = scalar_lea.sflag [#allocation6], 1
    %26 = vsyncpa %s25, 0
    %27 = vsyncpa [#allocation9], 0
    %s28 = scalar_lea.sflag [#allocation9], 1
    %29 = vsyncpa %s28, 0
    loop: start=0, step=1, limit=4
    $region2: #{tpu_custom_call.1} parent=1 // loop_pre_header
      _
    $region3: #{tpu_custom_call.1} parent=1 // loop_header
      %s31 = sphi 0, %s35
      %p32 = scmp.ge.s32.totalorder %s31, 4
      %s38 = sphi 0, %s50
      %s39 = sphi 0, %s46
      %s40 = sphi 0, %s38
      %s41 = sphi 0, %s39
      %s42 = sphi 0, %s40
      %s43 = sphi 0, %s41
      %s55 = sphi 0, %s57
      %s58 = sphi 0, %s55
      %s59 = sphi 0, %s58
      %s75 = sphi 0, %s59
      %s81 = sphi 0, %s83
      %s84 = sphi 0, %s81
      %s85 = sphi 0, %s84
      %s101 = sphi 0, %s85
      %s105 = sphi 0, %s105
      %s107 = sphi 0, %s105
      %s108 = sphi 0, %s107
      %s122 = sphi 0, %s108
      %s126 = sphi 0, %s126
      %s128 = sphi 0, %s126
      %s129 = sphi 0, %s128
      %s143 = sphi 0, %s129
      %s147 = sphi 0, %s147
      %s149 = sphi 0, %s147
      %s150 = sphi 0, %s149
      %s164 = sphi 0, %s150
      %s168 = sphi 0, %s168
      %s170 = sphi 0, %s168
      %s171 = sphi 0, %s170
      %s185 = sphi 0, %s171
      %s189 = sphi 0, %s189
      %s191 = sphi 0, %s189
      %s192 = sphi 0, %s191
      %s206 = sphi 0, %s192
      %s210 = sphi 0, %s210
      %s212 = sphi 0, %s210
      %s213 = sphi 0, %s212
      %s227 = sphi 0, %s213
      %s231 = sphi 0, %s231
      %s233 = sphi 0, %s231
      %s234 = sphi 0, %s233
      %s248 = sphi 0, %s234
      %s252 = sphi 0, %s252
      %s254 = sphi 0, %s252
      %s255 = sphi 0, %s254
      %s269 = sphi 0, %s255
      %s273 = sphi 0, %s273
      %s275 = sphi 0, %s273
      %s276 = sphi 0, %s275
      %s290 = sphi 0, %s276
      %s294 = sphi 0, %s294
      %s296 = sphi 0, %s294
      %s297 = sphi 0, %s296
      %s311 = sphi 0, %s297
      %s315 = sphi 0, %s315
      %s317 = sphi 0, %s315
      %s318 = sphi 0, %s317
      %s332 = sphi 0, %s318
      %s336 = sphi 0, %s336
      %s338 = sphi 0, %s336
      %s339 = sphi 0, %s338
      %s353 = sphi 0, %s339
      %s357 = sphi 0, %s357
      %s359 = sphi 0, %s357
      %s360 = sphi 0, %s359
      %s374 = sphi 0, %s360
      %s378 = sphi 0, %s378
      %s380 = sphi 0, %s378
      %s381 = sphi 0, %s380
      %s395 = sphi 0, %s381
      %s403 = sphi 0, %s405
      %s406 = sphi 0, %s403
      %s407 = sphi 0, %s406
      %s423 = sphi 0, %s407
      %s431 = sphi 0, %s433
      %s434 = sphi 0, %s431
      %s435 = sphi 0, %s434
      %s451 = sphi 0, %s435
    $region4: #{tpu_custom_call.1} parent=1 // loop_header_branch
      %34 = sbr.rel (%p32) target = $region8
    $region5: #{tpu_custom_call.1} parent=1 // loop_body
      %s36 = ssub.s32 %s31, 1
      %s37 = ssub.s32 %s31, 2
      %s44 = sadd.s32 1, %s39
      %p45 = scmp.ge.s32.totalorder %s44, 1
      %s46 = scalar_select %p45, 0, %s44
      %s47 = sadd.s32 1, %s38
      %s48 = scalar_select %p45, %s47, %s38
      %p49 = scmp.ge.s32.totalorder %s48, 2
      %s50 = scalar_select %p49, 0, %s48
      %s51 = ssub.s32 %s38, %s50
      %s52 = ssub.s32 %s39, %s46
      %s53 = sor.u32 %s51, %s52
      %p54 = scmp.eq.s32.totalorder %s53, 0
      %s56 = sadd.s32 %s55, 1
      %s57 = scalar_select %p54, %s55, %s56
      %p60 = pneg %p54
      %p61 = scmp.eq.s32.totalorder %s31, 1
      %p62 = por %p60, %p61
      %p63 = scmp.ne.s32.totalorder %s55, %s58
      %p64 = scmp.eq.s32.totalorder %s31, 0
      %p65 = por %p63, %p64
      %p66 = scmp.ne.s32.totalorder %s55, %s58
      %p67 = scmp.eq.s32.totalorder %s36, 1
      %p68 = por %p66, %p67
      %p69 = scmp.ne.s32.totalorder %s58, %s59
      %p70 = scmp.eq.s32.totalorder %s36, 0
      %p71 = por %p69, %p70
      %p72 = scmp.ne.s32.totalorder %s58, %s59
      %p73 = scmp.eq.s32.totalorder %s37, 1
      %p74 = por %p72, %p73
      %p76 = scmp.ne.s32.totalorder %s59, %s75
      %p77 = scmp.eq.s32.totalorder %s37, 0
      %p78 = por %p76, %p77
      %s79 = ssub.s32 %s38, %s50
      %p80 = scmp.eq.s32.totalorder %s79, 0
      %s82 = sadd.s32 %s81, 1
      %s83 = scalar_select %p80, %s81, %s82
      %p86 = pneg %p80
      %p87 = scmp.eq.s32.totalorder %s31, 1
      %p88 = por %p86, %p87
      %p89 = scmp.ne.s32.totalorder %s81, %s84
      %p90 = scmp.eq.s32.totalorder %s31, 0
      %p91 = por %p89, %p90
      %p92 = scmp.ne.s32.totalorder %s81, %s84
      %p93 = scmp.eq.s32.totalorder %s36, 1
      %p94 = por %p92, %p93
      %p95 = scmp.ne.s32.totalorder %s84, %s85
      %p96 = scmp.eq.s32.totalorder %s36, 0
      %p97 = por %p95, %p96
      %p98 = scmp.ne.s32.totalorder %s84, %s85
      %p99 = scmp.eq.s32.totalorder %s37, 1
      %p100 = por %p98, %p99
      %p102 = scmp.ne.s32.totalorder %s85, %s101
      %p103 = scmp.eq.s32.totalorder %s37, 0
      %p104 = por %p102, %p103
      %s106 = sadd.s32 %s105, 1
      %p109 = scmp.eq.s32.totalorder %s31, 1
      %p110 = scmp.ne.s32.totalorder %s105, %s107
      %p111 = scmp.eq.s32.totalorder %s31, 0
      %p112 = por %p110, %p111
      %p113 = scmp.ne.s32.totalorder %s105, %s107
      %p114 = scmp.eq.s32.totalorder %s36, 1
      %p115 = por %p113, %p114
      %p116 = scmp.ne.s32.totalorder %s107, %s108
      %p117 = scmp.eq.s32.totalorder %s36, 0
      %p118 = por %p116, %p117
      %p119 = scmp.ne.s32.totalorder %s107, %s108
      %p120 = scmp.eq.s32.totalorder %s37, 1
      %p121 = por %p119, %p120
      %p123 = scmp.ne.s32.totalorder %s108, %s122
      %p124 = scmp.eq.s32.totalorder %s37, 0
      %p125 = por %p123, %p124
      %s127 = sadd.s32 %s126, 1
      %p130 = scmp.eq.s32.totalorder %s31, 1
      %p131 = scmp.ne.s32.totalorder %s126, %s128
      %p132 = scmp.eq.s32.totalorder %s31, 0
      %p133 = por %p131, %p132
      %p134 = scmp.ne.s32.totalorder %s126, %s128
      %p135 = scmp.eq.s32.totalorder %s36, 1
      %p136 = por %p134, %p135
      %p137 = scmp.ne.s32.totalorder %s128, %s129
      %p138 = scmp.eq.s32.totalorder %s36, 0
      %p139 = por %p137, %p138
      %p140 = scmp.ne.s32.totalorder %s128, %s129
      %p141 = scmp.eq.s32.totalorder %s37, 1
      %p142 = por %p140, %p141
      %p144 = scmp.ne.s32.totalorder %s129, %s143
      %p145 = scmp.eq.s32.totalorder %s37, 0
      %p146 = por %p144, %p145
      %s148 = sadd.s32 %s147, 1
      %p151 = scmp.eq.s32.totalorder %s31, 1
      %p152 = scmp.ne.s32.totalorder %s147, %s149
      %p153 = scmp.eq.s32.totalorder %s31, 0
      %p154 = por %p152, %p153
      %p155 = scmp.ne.s32.totalorder %s147, %s149
      %p156 = scmp.eq.s32.totalorder %s36, 1
      %p157 = por %p155, %p156
      %p158 = scmp.ne.s32.totalorder %s149, %s150
      %p159 = scmp.eq.s32.totalorder %s36, 0
      %p160 = por %p158, %p159
      %p161 = scmp.ne.s32.totalorder %s149, %s150
      %p162 = scmp.eq.s32.totalorder %s37, 1
      %p163 = por %p161, %p162
      %p165 = scmp.ne.s32.totalorder %s150, %s164
      %p166 = scmp.eq.s32.totalorder %s37, 0
      %p167 = por %p165, %p166
      %s169 = sadd.s32 %s168, 1
      %p172 = scmp.eq.s32.totalorder %s31, 1
      %p173 = scmp.ne.s32.totalorder %s168, %s170
      %p174 = scmp.eq.s32.totalorder %s31, 0
      %p175 = por %p173, %p174
      %p176 = scmp.ne.s32.totalorder %s168, %s170
      %p177 = scmp.eq.s32.totalorder %s36, 1
      %p178 = por %p176, %p177
      %p179 = scmp.ne.s32.totalorder %s170, %s171
      %p180 = scmp.eq.s32.totalorder %s36, 0
      %p181 = por %p179, %p180
      %p182 = scmp.ne.s32.totalorder %s170, %s171
      %p183 = scmp.eq.s32.totalorder %s37, 1
      %p184 = por %p182, %p183
      %p186 = scmp.ne.s32.totalorder %s171, %s185
      %p187 = scmp.eq.s32.totalorder %s37, 0
      %p188 = por %p186, %p187
      %s190 = sadd.s32 %s189, 1
      %p193 = scmp.eq.s32.totalorder %s31, 1
      %p194 = scmp.ne.s32.totalorder %s189, %s191
      %p195 = scmp.eq.s32.totalorder %s31, 0
      %p196 = por %p194, %p195
      %p197 = scmp.ne.s32.totalorder %s189, %s191
      %p198 = scmp.eq.s32.totalorder %s36, 1
      %p199 = por %p197, %p198
      %p200 = scmp.ne.s32.totalorder %s191, %s192
      %p201 = scmp.eq.s32.totalorder %s36, 0
      %p202 = por %p200, %p201
      %p203 = scmp.ne.s32.totalorder %s191, %s192
      %p204 = scmp.eq.s32.totalorder %s37, 1
      %p205 = por %p203, %p204
      %p207 = scmp.ne.s32.totalorder %s192, %s206
      %p208 = scmp.eq.s32.totalorder %s37, 0
      %p209 = por %p207, %p208
      %s211 = sadd.s32 %s210, 1
      %p214 = scmp.eq.s32.totalorder %s31, 1
      %p215 = scmp.ne.s32.totalorder %s210, %s212
      %p216 = scmp.eq.s32.totalorder %s31, 0
      %p217 = por %p215, %p216
      %p218 = scmp.ne.s32.totalorder %s210, %s212
      %p219 = scmp.eq.s32.totalorder %s36, 1
      %p220 = por %p218, %p219
      %p221 = scmp.ne.s32.totalorder %s212, %s213
      %p222 = scmp.eq.s32.totalorder %s36, 0
      %p223 = por %p221, %p222
      %p224 = scmp.ne.s32.totalorder %s212, %s213
      %p225 = scmp.eq.s32.totalorder %s37, 1
      %p226 = por %p224, %p225
      %p228 = scmp.ne.s32.totalorder %s213, %s227
      %p229 = scmp.eq.s32.totalorder %s37, 0
      %p230 = por %p228, %p229
      %s232 = sadd.s32 %s231, 1
      %p235 = scmp.eq.s32.totalorder %s31, 1
      %p236 = scmp.ne.s32.totalorder %s231, %s233
      %p237 = scmp.eq.s32.totalorder %s31, 0
      %p238 = por %p236, %p237
      %p239 = scmp.ne.s32.totalorder %s231, %s233
      %p240 = scmp.eq.s32.totalorder %s36, 1
      %p241 = por %p239, %p240
      %p242 = scmp.ne.s32.totalorder %s233, %s234
      %p243 = scmp.eq.s32.totalorder %s36, 0
      %p244 = por %p242, %p243
      %p245 = scmp.ne.s32.totalorder %s233, %s234
      %p246 = scmp.eq.s32.totalorder %s37, 1
      %p247 = por %p245, %p246
      %p249 = scmp.ne.s32.totalorder %s234, %s248
      %p250 = scmp.eq.s32.totalorder %s37, 0
      %p251 = por %p249, %p250
      %s253 = sadd.s32 %s252, 1
      %p256 = scmp.eq.s32.totalorder %s31, 1
      %p257 = scmp.ne.s32.totalorder %s252, %s254
      %p258 = scmp.eq.s32.totalorder %s31, 0
      %p259 = por %p257, %p258
      %p260 = scmp.ne.s32.totalorder %s252, %s254
      %p261 = scmp.eq.s32.totalorder %s36, 1
      %p262 = por %p260, %p261
      %p263 = scmp.ne.s32.totalorder %s254, %s255
      %p264 = scmp.eq.s32.totalorder %s36, 0
      %p265 = por %p263, %p264
      %p266 = scmp.ne.s32.totalorder %s254, %s255
      %p267 = scmp.eq.s32.totalorder %s37, 1
      %p268 = por %p266, %p267
      %p270 = scmp.ne.s32.totalorder %s255, %s269
      %p271 = scmp.eq.s32.totalorder %s37, 0
      %p272 = por %p270, %p271
      %s274 = sadd.s32 %s273, 1
      %p277 = scmp.eq.s32.totalorder %s31, 1
      %p278 = scmp.ne.s32.totalorder %s273, %s275
      %p279 = scmp.eq.s32.totalorder %s31, 0
      %p280 = por %p278, %p279
      %p281 = scmp.ne.s32.totalorder %s273, %s275
      %p282 = scmp.eq.s32.totalorder %s36, 1
      %p283 = por %p281, %p282
      %p284 = scmp.ne.s32.totalorder %s275, %s276
      %p285 = scmp.eq.s32.totalorder %s36, 0
      %p286 = por %p284, %p285
      %p287 = scmp.ne.s32.totalorder %s275, %s276
      %p288 = scmp.eq.s32.totalorder %s37, 1
      %p289 = por %p287, %p288
      %p291 = scmp.ne.s32.totalorder %s276, %s290
      %p292 = scmp.eq.s32.totalorder %s37, 0
      %p293 = por %p291, %p292
      %s295 = sadd.s32 %s294, 1
      %p298 = scmp.eq.s32.totalorder %s31, 1
      %p299 = scmp.ne.s32.totalorder %s294, %s296
      %p300 = scmp.eq.s32.totalorder %s31, 0
      %p301 = por %p299, %p300
      %p302 = scmp.ne.s32.totalorder %s294, %s296
      %p303 = scmp.eq.s32.totalorder %s36, 1
      %p304 = por %p302, %p303
      %p305 = scmp.ne.s32.totalorder %s296, %s297
      %p306 = scmp.eq.s32.totalorder %s36, 0
      %p307 = por %p305, %p306
      %p308 = scmp.ne.s32.totalorder %s296, %s297
      %p309 = scmp.eq.s32.totalorder %s37, 1
      %p310 = por %p308, %p309
      %p312 = scmp.ne.s32.totalorder %s297, %s311
      %p313 = scmp.eq.s32.totalorder %s37, 0
      %p314 = por %p312, %p313
      %s316 = sadd.s32 %s315, 1
      %p319 = scmp.eq.s32.totalorder %s31, 1
      %p320 = scmp.ne.s32.totalorder %s315, %s317
      %p321 = scmp.eq.s32.totalorder %s31, 0
      %p322 = por %p320, %p321
      %p323 = scmp.ne.s32.totalorder %s315, %s317
      %p324 = scmp.eq.s32.totalorder %s36, 1
      %p325 = por %p323, %p324
      %p326 = scmp.ne.s32.totalorder %s317, %s318
      %p327 = scmp.eq.s32.totalorder %s36, 0
      %p328 = por %p326, %p327
      %p329 = scmp.ne.s32.totalorder %s317, %s318
      %p330 = scmp.eq.s32.totalorder %s37, 1
      %p331 = por %p329, %p330
      %p333 = scmp.ne.s32.totalorder %s318, %s332
      %p334 = scmp.eq.s32.totalorder %s37, 0
      %p335 = por %p333, %p334
      %s337 = sadd.s32 %s336, 1
      %p340 = scmp.eq.s32.totalorder %s31, 1
      %p341 = scmp.ne.s32.totalorder %s336, %s338
      %p342 = scmp.eq.s32.totalorder %s31, 0
      %p343 = por %p341, %p342
      %p344 = scmp.ne.s32.totalorder %s336, %s338
      %p345 = scmp.eq.s32.totalorder %s36, 1
      %p346 = por %p344, %p345
      %p347 = scmp.ne.s32.totalorder %s338, %s339
      %p348 = scmp.eq.s32.totalorder %s36, 0
      %p349 = por %p347, %p348
      %p350 = scmp.ne.s32.totalorder %s338, %s339
      %p351 = scmp.eq.s32.totalorder %s37, 1
      %p352 = por %p350, %p351
      %p354 = scmp.ne.s32.totalorder %s339, %s353
      %p355 = scmp.eq.s32.totalorder %s37, 0
      %p356 = por %p354, %p355
      %s358 = sadd.s32 %s357, 1
      %p361 = scmp.eq.s32.totalorder %s31, 1
      %p362 = scmp.ne.s32.totalorder %s357, %s359
      %p363 = scmp.eq.s32.totalorder %s31, 0
      %p364 = por %p362, %p363
      %p365 = scmp.ne.s32.totalorder %s357, %s359
      %p366 = scmp.eq.s32.totalorder %s36, 1
      %p367 = por %p365, %p366
      %p368 = scmp.ne.s32.totalorder %s359, %s360
      %p369 = scmp.eq.s32.totalorder %s36, 0
      %p370 = por %p368, %p369
      %p371 = scmp.ne.s32.totalorder %s359, %s360
      %p372 = scmp.eq.s32.totalorder %s37, 1
      %p373 = por %p371, %p372
      %p375 = scmp.ne.s32.totalorder %s360, %s374
      %p376 = scmp.eq.s32.totalorder %s37, 0
      %p377 = por %p375, %p376
      %s379 = sadd.s32 %s378, 1
      %p382 = scmp.eq.s32.totalorder %s31, 1
      %p383 = scmp.ne.s32.totalorder %s378, %s380
      %p384 = scmp.eq.s32.totalorder %s31, 0
      %p385 = por %p383, %p384
      %p386 = scmp.ne.s32.totalorder %s378, %s380
      %p387 = scmp.eq.s32.totalorder %s36, 1
      %p388 = por %p386, %p387
      %p389 = scmp.ne.s32.totalorder %s380, %s381
      %p390 = scmp.eq.s32.totalorder %s36, 0
      %p391 = por %p389, %p390
      %p392 = scmp.ne.s32.totalorder %s380, %s381
      %p393 = scmp.eq.s32.totalorder %s37, 1
      %p394 = por %p392, %p393
      %p396 = scmp.ne.s32.totalorder %s381, %s395
      %p397 = scmp.eq.s32.totalorder %s37, 0
      %p398 = por %p396, %p397
      %s399 = ssub.s32 %s38, %s50
      %s400 = ssub.s32 %s39, %s46
      %s401 = sor.u32 %s399, %s400
      %p402 = scmp.eq.s32.totalorder %s401, 0
      %s404 = sadd.s32 %s403, 1
      %s405 = scalar_select %p402, %s403, %s404
      %p408 = pneg %p402
      %p409 = scmp.eq.s32.totalorder %s31, 1
      %p410 = por %p408, %p409
      %p411 = scmp.ne.s32.totalorder %s403, %s406
      %p412 = scmp.eq.s32.totalorder %s31, 0
      %p413 = por %p411, %p412
      %p414 = scmp.ne.s32.totalorder %s403, %s406
      %p415 = scmp.eq.s32.totalorder %s36, 1
      %p416 = por %p414, %p415
      %p417 = scmp.ne.s32.totalorder %s406, %s407
      %p418 = scmp.eq.s32.totalorder %s36, 0
      %p419 = por %p417, %p418
      %p420 = scmp.ne.s32.totalorder %s406, %s407
      %p421 = scmp.eq.s32.totalorder %s37, 1
      %p422 = por %p420, %p421
      %p424 = scmp.ne.s32.totalorder %s407, %s423
      %p425 = scmp.eq.s32.totalorder %s37, 0
      %p426 = por %p424, %p425
      %s427 = ssub.s32 %s38, %s50
      %s428 = ssub.s32 %s39, %s46
      %s429 = sor.u32 %s427, %s428
      %p430 = scmp.eq.s32.totalorder %s429, 0
      %s432 = sadd.s32 %s431, 1
      %s433 = scalar_select %p430, %s431, %s432
      %p436 = pneg %p430
      %p437 = scmp.eq.s32.totalorder %s31, 1
      %p438 = por %p436, %p437
      %p439 = scmp.ne.s32.totalorder %s431, %s434
      %p440 = scmp.eq.s32.totalorder %s31, 0
      %p441 = por %p439, %p440
      %p442 = scmp.ne.s32.totalorder %s431, %s434
      %p443 = scmp.eq.s32.totalorder %s36, 1
      %p444 = por %p442, %p443
      %p445 = scmp.ne.s32.totalorder %s434, %s435
      %p446 = scmp.eq.s32.totalorder %s36, 0
      %p447 = por %p445, %p446
      %p448 = scmp.ne.s32.totalorder %s434, %s435
      %p449 = scmp.eq.s32.totalorder %s37, 1
      %p450 = por %p448, %p449
      %p452 = scmp.ne.s32.totalorder %s435, %s451
      %p453 = scmp.eq.s32.totalorder %s37, 0
      %p454 = por %p452, %p453
      %p455 = scmp.le.s32.totalorder 1, %s31
      %p456 = scmp.lt.s32.totalorder %s31, 3
      %p457 = pnand %p455, %p456
      %p458 = pneg %p457
      // Predicated region
      $region9: #{tpu_custom_call.1} parent=5 // pred_check
        _
      $region10: #{tpu_custom_call.1} parent=5 // pred_check_branch
        %460 = sbr.rel (%p457) target = $region12
      $region11: #{tpu_custom_call.1} parent=5 // pred_region
        %s461 = ssub.s32 %s31, 1
        // Predicated region
        $region13: #{tpu_custom_call.1} parent=11 // pred_check
          %p462 = pneg %p118
        $region14: #{tpu_custom_call.1} parent=11 // pred_check_branch
          %464 = sbr.rel (%p462) target = $region16
        $region15: #{tpu_custom_call.1} parent=11 // pred_region
          _
        $region16: #{tpu_custom_call.1} parent=11 // pred_fallthru
          _
        // Predicated region
        $region17: #{tpu_custom_call.1} parent=11 // pred_check
          %p465 = pneg %p139
        $region18: #{tpu_custom_call.1} parent=11 // pred_check_branch
          %467 = sbr.rel (%p465) target = $region20
        $region19: #{tpu_custom_call.1} parent=11 // pred_region
          _
        $region20: #{tpu_custom_call.1} parent=11 // pred_fallthru
          _
        // Predicated region
        $region21: #{tpu_custom_call.1} parent=11 // pred_check
          %p468 = pneg %p160
        $region22: #{tpu_custom_call.1} parent=11 // pred_check_branch
          %470 = sbr.rel (%p468) target = $region24
        $region23: #{tpu_custom_call.1} parent=11 // pred_region
          _
        $region24: #{tpu_custom_call.1} parent=11 // pred_fallthru
          _
        // Predicated region
        $region25: #{tpu_custom_call.1} parent=11 // pred_check
          %p471 = pneg %p181
        $region26: #{tpu_custom_call.1} parent=11 // pred_check_branch
          %473 = sbr.rel (%p471) target = $region28
        $region27: #{tpu_custom_call.1} parent=11 // pred_region
          %s475 = ssub.s32 256, 256
          %476 = vsyncadd [#allocation5], %s475
          %s477 = sshll.u32 [#allocation4], 4
          %s478 = int_to_ptr.vmem [resolvable:$true] %s477
          %483 = dma.hbm_to_vmem [thread:$0]  %s5, 256, %s478, [#allocation5], 64, 64, 4
        $region28: #{tpu_custom_call.1} parent=11 // pred_fallthru
          _
        // Predicated region
        $region29: #{tpu_custom_call.1} parent=11 // pred_check
          %p484 = pneg %p202
        $region30: #{tpu_custom_call.1} parent=11 // pred_check_branch
          %486 = sbr.rel (%p484) target = $region32
        $region31: #{tpu_custom_call.1} parent=11 // pred_region
          _
        $region32: #{tpu_custom_call.1} parent=11 // pred_fallthru
          _
        // Predicated region
        $region33: #{tpu_custom_call.1} parent=11 // pred_check
          %p487 = pneg %p223
        $region34: #{tpu_custom_call.1} parent=11 // pred_check_branch
          %489 = sbr.rel (%p487) target = $region36
        $region35: #{tpu_custom_call.1} parent=11 // pred_region
          _
        $region36: #{tpu_custom_call.1} parent=11 // pred_fallthru
          _
        // Predicated region
        $region37: #{tpu_custom_call.1} parent=11 // pred_check
          %p490 = pneg %p244
        $region38: #{tpu_custom_call.1} parent=11 // pred_check_branch
          %492 = sbr.rel (%p490) target = $region40
        $region39: #{tpu_custom_call.1} parent=11 // pred_region
          _
        $region40: #{tpu_custom_call.1} parent=11 // pred_fallthru
          _
        // Predicated region
        $region41: #{tpu_custom_call.1} parent=11 // pred_check
          %p493 = pneg %p265
        $region42: #{tpu_custom_call.1} parent=11 // pred_check_branch
          %495 = sbr.rel (%p493) target = $region44
        $region43: #{tpu_custom_call.1} parent=11 // pred_region
          _
        $region44: #{tpu_custom_call.1} parent=11 // pred_fallthru
          _
        // Predicated region
        $region45: #{tpu_custom_call.1} parent=11 // pred_check
          %p496 = pneg %p286
        $region46: #{tpu_custom_call.1} parent=11 // pred_check_branch
          %498 = sbr.rel (%p496) target = $region48
        $region47: #{tpu_custom_call.1} parent=11 // pred_region
          _
        $region48: #{tpu_custom_call.1} parent=11 // pred_fallthru
          _
        // Predicated region
        $region49: #{tpu_custom_call.1} parent=11 // pred_check
          %p499 = pneg %p307
        $region50: #{tpu_custom_call.1} parent=11 // pred_check_branch
          %501 = sbr.rel (%p499) target = $region52
        $region51: #{tpu_custom_call.1} parent=11 // pred_region
          _
        $region52: #{tpu_custom_call.1} parent=11 // pred_fallthru
          _
        // Predicated region
        $region53: #{tpu_custom_call.1} parent=11 // pred_check
          %p502 = pneg %p328
        $region54: #{tpu_custom_call.1} parent=11 // pred_check_branch
          %504 = sbr.rel (%p502) target = $region56
        $region55: #{tpu_custom_call.1} parent=11 // pred_region
          _
        $region56: #{tpu_custom_call.1} parent=11 // pred_fallthru
          _
        // Predicated region
        $region57: #{tpu_custom_call.1} parent=11 // pred_check
          %p505 = pneg %p349
        $region58: #{tpu_custom_call.1} parent=11 // pred_check_branch
          %507 = sbr.rel (%p505) target = $region60
        $region59: #{tpu_custom_call.1} parent=11 // pred_region
          _
        $region60: #{tpu_custom_call.1} parent=11 // pred_fallthru
          _
        // Predicated region
        $region61: #{tpu_custom_call.1} parent=11 // pred_check
          %p508 = pneg %p370
        $region62: #{tpu_custom_call.1} parent=11 // pred_check_branch
          %510 = sbr.rel (%p508) target = $region64
        $region63: #{tpu_custom_call.1} parent=11 // pred_region
          _
        $region64: #{tpu_custom_call.1} parent=11 // pred_fallthru
          _
        // Predicated region
        $region65: #{tpu_custom_call.1} parent=11 // pred_check
          %p511 = pneg %p391
        $region66: #{tpu_custom_call.1} parent=11 // pred_check_branch
          %513 = sbr.rel (%p511) target = $region68
        $region67: #{tpu_custom_call.1} parent=11 // pred_region
          _
        $region68: #{tpu_custom_call.1} parent=11 // pred_fallthru
          _
      $region12: #{tpu_custom_call.1} parent=5 // pred_fallthru
        _
      %p514 = scmp.lt.s32.totalorder %s31, 2
      // Predicated region
      $region69: #{tpu_custom_call.1} parent=5 // pred_check
        %p515 = pneg %p514
      $region70: #{tpu_custom_call.1} parent=5 // pred_check_branch
        %517 = sbr.rel (%p515) target = $region72
      $region71: #{tpu_custom_call.1} parent=5 // pred_region
        // Predicated region
        $region73: #{tpu_custom_call.1} parent=71 // pred_check
          %p518 = pneg %p65
        $region74: #{tpu_custom_call.1} parent=71 // pred_check_branch
          %520 = sbr.rel (%p518) target = $region76
        $region75: #{tpu_custom_call.1} parent=71 // pred_region
          %p521 = scmp.lt.s32.totalorder %s38, 1
          %s522 = scalar_select %p521, %s38, 1
          %p523 = scmp.lt.s32.totalorder %s39, 0
          %s524 = scalar_select %p523, %s39, 0
          %s525 = sadd.s32 %s524, %s522
          %s526 = smul.addr %s525, 8
          %s527 = scalar_lea.vmem %s0, %s526
        $region76: #{tpu_custom_call.1} parent=71 // pred_fallthru
          _
        // Predicated region
        $region77: #{tpu_custom_call.1} parent=71 // pred_check
          %p528 = pneg %p91
        $region78: #{tpu_custom_call.1} parent=71 // pred_check_branch
          %530 = sbr.rel (%p528) target = $region80
        $region79: #{tpu_custom_call.1} parent=71 // pred_region
          %p531 = scmp.lt.s32.totalorder %s38, 1
          %s532 = scalar_select %p531, %s38, 1
          %s533 = smul.addr %s532, 8
          %s534 = scalar_lea.vmem %s1, %s533
        $region80: #{tpu_custom_call.1} parent=71 // pred_fallthru
          _
      $region72: #{tpu_custom_call.1} parent=5 // pred_fallthru
        _
      %p535 = scmp.le.s32.totalorder 1, %s31
      %p536 = scmp.lt.s32.totalorder %s31, 3
      %p537 = pnand %p535, %p536
      %p538 = pneg %p537
      // Predicated region
      $region81: #{tpu_custom_call.1} parent=5 // pred_check
        _
      $region82: #{tpu_custom_call.1} parent=5 // pred_check_branch
        %540 = sbr.rel (%p537) target = $region84
      $region83: #{tpu_custom_call.1} parent=5 // pred_region
        %s541 = ssub.s32 %s31, 1
        // Predicated region
        $region85: #{tpu_custom_call.1} parent=83 // pred_check
          %p542 = pneg %p181
        $region86: #{tpu_custom_call.1} parent=83 // pred_check_branch
          %544 = sbr.rel (%p542) target = $region88
        $region87: #{tpu_custom_call.1} parent=83 // pred_region
          %545 = dma.done [#allocation5], 256
        $region88: #{tpu_custom_call.1} parent=83 // pred_fallthru
          _
        %p546 = scmp.lt.s32.totalorder %s40, 1
        %s547 = scalar_select %p546, %s40, 1
        %p548 = scmp.lt.s32.totalorder %s41, 0
        %s549 = scalar_select %p548, %s41, 0
        %s550 = sadd.s32 %s549, %s547
        %s551 = smul.addr %s550, 8
        %s552 = scalar_lea.vmem %s0, %s551
        %p553 = pneg %p71
        %p554 = pneg %p68
        %p555 = scmp.lt.s32.totalorder %s40, 1
        %s556 = scalar_select %p555, %s40, 1
        %s557 = smul.addr %s556, 8
        %s558 = scalar_lea.vmem %s1, %s557
        %p559 = pneg %p97
        %p560 = pneg %p94
        %p561 = pneg %p118
        %p562 = pneg %p115
        %p563 = pneg %p139
        %p564 = pneg %p136
        %p565 = pneg %p160
        %p566 = pneg %p157
        %p567 = pneg %p181
        %p568 = pneg %p178
        %p569 = pneg %p202
        %p570 = pneg %p199
        %p571 = pneg %p223
        %p572 = pneg %p220
        %p573 = pneg %p244
        %p574 = pneg %p241
        %p575 = pneg %p265
        %p576 = pneg %p262
        %p577 = pneg %p286
        %p578 = pneg %p283
        %p579 = pneg %p307
        %p580 = pneg %p304
        %p581 = pneg %p328
        %p582 = pneg %p325
        %p583 = pneg %p349
        %p584 = pneg %p346
        %p585 = pneg %p370
        %p586 = pneg %p367
        %p587 = pneg %p391
        %p588 = pneg %p388
        %p589 = pneg %p419
        %p590 = pneg %p416
        %s591 = sand.u32 %s406, 1
        %s592 = scalar_lea.sflag [#allocation6], %s591
        %s593 = sand.u32 %s406, 1
        %s594 = smul.addr %s593, 8
        %s595 = scalar_lea.vmem [#allocation7], %s594
        %p596 = pneg %p447
        %p597 = pneg %p444
        %s598 = sand.u32 %s434, 1
        %s599 = scalar_lea.sflag [#allocation9], %s598
        %s600 = sand.u32 %s434, 1
        %s601 = smul.addr %s600, 16
        %s602 = scalar_lea.vmem [#allocation8], %s601
        %p603 = scmp.lt.s32.totalorder %s40, 1
        %s604 = scalar_select %p603, %s40, 1
        %p605 = scmp.lt.s32.totalorder %s41, 0
        %s606 = scalar_select %p605, %s41, 0
        %s607 = sadd.s32 %s606, %s604
        %s608 = smul.addr %s607, 8
        %s609 = scalar_lea.vmem %s0, %s608
        %p610 = scmp.lt.s32.totalorder %s40, 1
        %s611 = scalar_select %p610, %s40, 1
        %s612 = smul.addr %s611, 8
        %s613 = scalar_lea.vmem %s1, %s612
        %p615 = scmp.eq.s32.totalorder %s41, 0
        // Predicated region
        $region89: #{tpu_custom_call.1} parent=83 // pred_check
          %p616 = pneg %p615
        $region90: #{tpu_custom_call.1} parent=83 // pred_check_branch
          %618 = sbr.rel (%p616) target = $region92
        $region91: #{tpu_custom_call.1} parent=83 // pred_region
          %v619 = vld [vmem:[%s613] sm:$0xff]
          %v620 = vpack.c.bf16 %v619, %v619
          %v621 = vld [vmem:[%s3] sm:$0xf]
          %v622 = vld [vmem:[%s3 + $0x4] sm:$0xf]
          %v623 = vld [vmem:[%s3 + $0x8] sm:$0xf]
          %v624 = vld [vmem:[%s3 + $0xc] sm:$0xf]
          %v625 = vld [vmem:[%s8] sm:$0x1]
          %v627 = vlaneseq
          %v628 = vshrl.u32 %v627, 7
          %v629 = vsub.s32 0, %v628
          %v630 = vrot.slane %v625, %v629
          %v636 = vunpack.c.l.b16 %v621
          %v637 = vunpack.c.l.b16 %v622
          %v638 = vunpack.c.l.b16 %v623
          %v639 = vunpack.c.l.b16 %v624
          %v640 = vpack.c.b16 %v637, %v636
          %v641 = vpack.c.b16 %v639, %v638
          %vm644 = vcmask 261120
          %v646 = vsel %vm644, %v620, 0
          %648 = vmatprep.subr.bf16.mxu0 0
          %649 = vmatpush1.bf16.msra.mxu0 0
          %650 = vmatprep.subr.bf16.mxu0 0
          %651 = vmatpush1.bf16.msra.mxu0 0
          %652 = vmatprep.subr.bf16.mxu0 0
          %653 = vmatpush1.bf16.msra.mxu0 0
          %654 = vmatprep.subr.bf16.mxu0 0
          %655 = vmatpush1.bf16.msra.mxu0 0
          %656 = vmatprep.subr.bf16.mxu0 0
          %657 = vmatpush1.bf16.msra.mxu0 0
          %658 = vmatprep.subr.bf16.mxu0 0
          %659 = vmatpush1.bf16.msra.mxu0 0
          %660 = vmatprep.subr.bf16.mxu0 0
          %661 = vmatpush1.bf16.msra.mxu0 %v641
          %662 = vmatprep.subr.bf16.mxu0 0
          %663 = vmatpush1.bf16.msra.mxu0 %v640
          %664 = vmatprep.subr.bf16.mxu0 0
          %665 = vmatpush2.bf16.msra.mxu0 0
          %666 = vmatprep.subr.bf16.mxu0 0
          %667 = vmatpush2.bf16.msra.mxu0 0
          %668 = vmatprep.subr.bf16.mxu0 0
          %669 = vmatpush2.bf16.msra.mxu0 0
          %670 = vmatprep.subr.bf16.mxu0 0
          %671 = vmatpush2.bf16.msra.mxu0 0
          %672 = vmatprep.subr.bf16.mxu0 0
          %673 = vmatpush2.bf16.msra.mxu0 0
          %674 = vmatprep.subr.bf16.mxu0 0
          %675 = vmatpush2.bf16.msra.mxu0 0
          %676 = vmatprep.subr.bf16.mxu0 0
          %677 = vmatpush2.bf16.msra.mxu0 0
          %678 = vmatprep.subr.bf16.mxu0 0
          %679 = vmatpush2.bf16.msra.mxu0 0
          %680 = vmatprep.mubr.bf16.mxu0 0
          %681 = vmatmul.mubr.bf16.gmra.mxu0 %v646
          %v682 = vpop.f32.mrf.mxu0
          %v683 = vadd.f32 %v630, %v682
          %v684 = vpop.f32.mrf.mxu0
          %v685 = vpop.f32.mrf.mxu0
          %v686 = vpop.f32.mrf.mxu0
          %687 = vdwg.mxu0
          %v688 = vpack.c.bf16 %v683, %v683
          %vm689 = vcmask 519168
          %690 = vst.msk [vmem:[#allocation2] sm:$0xf] %vm689, %v688
        $region92: #{tpu_custom_call.1} parent=83 // pred_fallthru
          _
        %v691 = vld [vmem:[%s609] sm:$0xff]
        %v692 = vpack.c.bf16 %v691, %v691
        %v693 = vld [vmem:[%s2] sm:$0xf]
        %v694 = vld [vmem:[%s2 + $0x4] sm:$0xf]
        %v695 = vld [vmem:[%s2 + $0x8] sm:$0xf]
        %v696 = vld [vmem:[%s2 + $0xc] sm:$0xf]
        %v697 = vld [vmem:[%s7] sm:$0x1]
        %v699 = vlaneseq
        %v700 = vshrl.u32 %v699, 7
        %v701 = vsub.s32 0, %v700
        %v702 = vrot.slane %v697, %v701
        %v708 = vunpack.c.l.b16 %v693
        %v709 = vunpack.c.l.b16 %v694
        %v710 = vunpack.c.l.b16 %v695
        %v711 = vunpack.c.l.b16 %v696
        %v712 = vpack.c.b16 %v709, %v708
        %v713 = vpack.c.b16 %v711, %v710
        %vm716 = vcmask 261120
        %v718 = vsel %vm716, %v692, 0
        %720 = vmatprep.subr.bf16.mxu0 0
        %721 = vmatpush1.bf16.msra.mxu0 0
        %722 = vmatprep.subr.bf16.mxu0 0
        %723 = vmatpush1.bf16.msra.mxu0 0
        %724 = vmatprep.subr.bf16.mxu0 0
        %725 = vmatpush1.bf16.msra.mxu0 0
        %726 = vmatprep.subr.bf16.mxu0 0
        %727 = vmatpush1.bf16.msra.mxu0 0
        %728 = vmatprep.subr.bf16.mxu0 0
        %729 = vmatpush1.bf16.msra.mxu0 0
        %730 = vmatprep.subr.bf16.mxu0 0
        %731 = vmatpush1.bf16.msra.mxu0 0
        %732 = vmatprep.subr.bf16.mxu0 0
        %733 = vmatpush1.bf16.msra.mxu0 %v713
        %734 = vmatprep.subr.bf16.mxu0 0
        %735 = vmatpush1.bf16.msra.mxu0 %v712
        %736 = vmatprep.subr.bf16.mxu0 0
        %737 = vmatpush2.bf16.msra.mxu0 0
        %738 = vmatprep.subr.bf16.mxu0 0
        %739 = vmatpush2.bf16.msra.mxu0 0
        %740 = vmatprep.subr.bf16.mxu0 0
        %741 = vmatpush2.bf16.msra.mxu0 0
        %742 = vmatprep.subr.bf16.mxu0 0
        %743 = vmatpush2.bf16.msra.mxu0 0
        %744 = vmatprep.subr.bf16.mxu0 0
        %745 = vmatpush2.bf16.msra.mxu0 0
        %746 = vmatprep.subr.bf16.mxu0 0
        %747 = vmatpush2.bf16.msra.mxu0 0
        %748 = vmatprep.subr.bf16.mxu0 0
        %749 = vmatpush2.bf16.msra.mxu0 0
        %750 = vmatprep.subr.bf16.mxu0 0
        %751 = vmatpush2.bf16.msra.mxu0 0
        %752 = vmatprep.mubr.bf16.mxu0 0
        %753 = vmatmul.mubr.bf16.gmra.mxu0 %v718
        %v754 = vpop.f32.mrf.mxu0
        %v755 = vadd.f32 %v702, %v754
        %v756 = vpop.f32.mrf.mxu0
        %v757 = vpop.f32.mrf.mxu0
        %v758 = vpop.f32.mrf.mxu0
        %759 = vdwg.mxu0
        %v760 = vpack.c.bf16 %v755, %v755
        %v761 = vld [vmem:[#allocation2] sm:$0xf]
        %vm762 = vcmask 64512
        %v764 = vsel %vm762, %v760, 0
        %v767 = vsel %vm762, %v761, 0
        %769 = vmatprep.subr.bf16.mxu0 0
        %770 = vmatpush1.bf16.xpose.msra.mxu0 0
        %771 = vmatprep.subr.bf16.mxu0 0
        %772 = vmatpush1.bf16.xpose.msra.mxu0 0
        %773 = vmatprep.subr.bf16.mxu0 0
        %774 = vmatpush1.bf16.xpose.msra.mxu0 0
        %775 = vmatprep.subr.bf16.mxu0 0
        %776 = vmatpush1.bf16.xpose.msra.mxu0 0
        %777 = vmatprep.subr.bf16.mxu0 0
        %778 = vmatpush1.bf16.xpose.msra.mxu0 0
        %779 = vmatprep.subr.bf16.mxu0 0
        %780 = vmatpush1.bf16.xpose.msra.mxu0 0
        %781 = vmatprep.subr.bf16.mxu0 0
        %782 = vmatpush1.bf16.xpose.msra.mxu0 0
        %783 = vmatprep.subr.bf16.mxu0 0
        %784 = vmatpush1.bf16.xpose.msra.mxu0 %v767
        %785 = vmatprep.subr.bf16.mxu0 0
        %786 = vmatpush2.bf16.xpose.msra.mxu0 0
        %787 = vmatprep.subr.bf16.mxu0 0
        %788 = vmatpush2.bf16.xpose.msra.mxu0 0
        %789 = vmatprep.subr.bf16.mxu0 0
        %790 = vmatpush2.bf16.xpose.msra.mxu0 0
        %791 = vmatprep.subr.bf16.mxu0 0
        %792 = vmatpush2.bf16.xpose.msra.mxu0 0
        %793 = vmatprep.subr.bf16.mxu0 0
        %794 = vmatpush2.bf16.xpose.msra.mxu0 0
        %795 = vmatprep.subr.bf16.mxu0 0
        %796 = vmatpush2.bf16.xpose.msra.mxu0 0
        %797 = vmatprep.subr.bf16.mxu0 0
        %798 = vmatpush2.bf16.xpose.msra.mxu0 0
        %799 = vmatprep.subr.bf16.mxu0 0
        %800 = vmatpush2.bf16.xpose.msra.mxu0 0
        %801 = vmatprep.mubr.bf16.mxu0 0
        %802 = vmatmul.mubr.bf16.gmra.mxu0 %v764
        %v803 = vpop.f32.mrf.mxu0
        %v804 = vadd.f32 0.0, %v803
        %v805 = vpop.f32.mrf.mxu0
        %v806 = vpop.f32.mrf.mxu0
        %v807 = vpop.f32.mrf.mxu0
        %808 = vdwg.mxu0
        %v809 = vsel %vm762, %v804, -inf
        %810 = vmax.xlane.f32.xlu0 %v809
        %v811 = vpop.xlane.xlu0 %810
        %v812 = vsub.f32 %v804, %v811
        %v813 = vmul.f32 %v812, 1.442695
        %v814 = vpow.pop %v813
        %v815 = vsel %vm762, %v814, 0.0
        %816 = vadd.xlane.f32.xlu0 %v815
        %v817 = vpop.xlane.xlu0 %816
        %v818 = vrcp.pop %v817
        %v819 = vmul.f32 %v814, %v818
        %v820 = vpack.c.bf16 %v819, %v819
        %vm821 = vcmask 60416
        %822 = vst.msk [vmem:[%s602] sm:$0xf] %vm821, %v820
        %v824 = vunpack.c.l.b16 %v761
        %v825 = vpack.c.b16 %v824, %v824
        %826 = vrot.lane.b32.xlu0 %v825, 96
        %v827 = vpop.permute.xlu0 %826
        %v829 = vsel %vm762, %v820, 0
        %vm831 = vcmask 1043456
        %v833 = vsel %vm831, %v827, 0
        %835 = vmatprep.subr.bf16.mxu0 0
        %836 = vmatpush1.bf16.msra.mxu0 0
        %837 = vmatprep.subr.bf16.mxu0 0
        %838 = vmatpush1.bf16.msra.mxu0 0
        %839 = vmatprep.subr.bf16.mxu0 0
        %840 = vmatpush1.bf16.msra.mxu0 0
        %841 = vmatprep.subr.bf16.mxu0 0
        %842 = vmatpush1.bf16.msra.mxu0 0
        %843 = vmatprep.subr.bf16.mxu0 0
        %844 = vmatpush1.bf16.msra.mxu0 0
        %845 = vmatprep.subr.bf16.mxu0 0
        %846 = vmatpush1.bf16.msra.mxu0 0
        %847 = vmatprep.subr.bf16.mxu0 0
        %848 = vmatpush1.bf16.msra.mxu0 0
        %849 = vmatprep.subr.bf16.mxu0 0
        %850 = vmatpush1.bf16.msra.mxu0 %v833
        %851 = vmatprep.subr.bf16.mxu0 0
        %852 = vmatpush2.bf16.msra.mxu0 0
        %853 = vmatprep.subr.bf16.mxu0 0
        %854 = vmatpush2.bf16.msra.mxu0 0
        %855 = vmatprep.subr.bf16.mxu0 0
        %856 = vmatpush2.bf16.msra.mxu0 0
        %857 = vmatprep.subr.bf16.mxu0 0
        %858 = vmatpush2.bf16.msra.mxu0 0
        %859 = vmatprep.subr.bf16.mxu0 0
        %860 = vmatpush2.bf16.msra.mxu0 0
        %861 = vmatprep.subr.bf16.mxu0 0
        %862 = vmatpush2.bf16.msra.mxu0 0
        %863 = vmatprep.subr.bf16.mxu0 0
        %864 = vmatpush2.bf16.msra.mxu0 0
        %865 = vmatprep.subr.bf16.mxu0 0
        %866 = vmatpush2.bf16.msra.mxu0 0
        %867 = vmatprep.mubr.bf16.mxu0 0
        %868 = vmatmul.mubr.bf16.gmra.mxu0 %v829
        %v869 = vpop.f32.mrf.mxu0
        %v870 = vadd.f32 0.0, %v869
        %v871 = vpop.f32.mrf.mxu0
        %v872 = vpop.f32.mrf.mxu0
        %v873 = vpop.f32.mrf.mxu0
        %874 = vdwg.mxu0
        %v875 = vpack.c.bf16 %v870, %v870
        %876 = vst.msk [vmem:[#allocation3] sm:$0xf] %vm821, %v875
        %v877 = vld [vmem:[#allocation2] sm:$0xf]
        %879 = vrot.lane.b32.xlu0 %v760, 120
        %v880 = vpop.permute.xlu0 %879
        %v882 = vunpack.c.l.b16 %v877
        %v883 = vpack.c.b16 %v882, %v882
        %884 = vrot.lane.b32.xlu0 %v883, 120
        %v885 = vpop.permute.xlu0 %884
        %v887 = vsel %vm762, %v880, 0
        %v890 = vsel %vm762, %v885, 0
        %892 = vmatprep.subr.bf16.mxu0 0
        %893 = vmatpush1.bf16.xpose.msra.mxu0 0
        %894 = vmatprep.subr.bf16.mxu0 0
        %895 = vmatpush1.bf16.xpose.msra.mxu0 0
        %896 = vmatprep.subr.bf16.mxu0 0
        %897 = vmatpush1.bf16.xpose.msra.mxu0 0
        %898 = vmatprep.subr.bf16.mxu0 0
        %899 = vmatpush1.bf16.xpose.msra.mxu0 0
        %900 = vmatprep.subr.bf16.mxu0 0
        %901 = vmatpush1.bf16.xpose.msra.mxu0 0
        %902 = vmatprep.subr.bf16.mxu0 0
        %903 = vmatpush1.bf16.xpose.msra.mxu0 0
        %904 = vmatprep.subr.bf16.mxu0 0
        %905 = vmatpush1.bf16.xpose.msra.mxu0 0
        %906 = vmatprep.subr.bf16.mxu0 0
        %907 = vmatpush1.bf16.xpose.msra.mxu0 %v890
        %908 = vmatprep.subr.bf16.mxu0 0
        %909 = vmatpush2.bf16.xpose.msra.mxu0 0
        %910 = vmatprep.subr.bf16.mxu0 0
        %911 = vmatpush2.bf16.xpose.msra.mxu0 0
        %912 = vmatprep.subr.bf16.mxu0 0
        %913 = vmatpush2.bf16.xpose.msra.mxu0 0
        %914 = vmatprep.subr.bf16.mxu0 0
        %915 = vmatpush2.bf16.xpose.msra.mxu0 0
        %916 = vmatprep.subr.bf16.mxu0 0
        %917 = vmatpush2.bf16.xpose.msra.mxu0 0
        %918 = vmatprep.subr.bf16.mxu0 0
        %919 = vmatpush2.bf16.xpose.msra.mxu0 0
        %920 = vmatprep.subr.bf16.mxu0 0
        %921 = vmatpush2.bf16.xpose.msra.mxu0 0
        %922 = vmatprep.subr.bf16.mxu0 0
        %923 = vmatpush2.bf16.xpose.msra.mxu0 0
        %924 = vmatprep.mubr.bf16.mxu0 0
        %925 = vmatmul.mubr.bf16.gmra.mxu0 %v887
        %v926 = vpop.f32.mrf.mxu0
        %v927 = vadd.f32 0.0, %v926
        %v928 = vpop.f32.mrf.mxu0
        %v929 = vpop.f32.mrf.mxu0
        %v930 = vpop.f32.mrf.mxu0
        %931 = vdwg.mxu0
        %v932 = vsel %vm762, %v927, -inf
        %933 = vmax.xlane.f32.xlu0 %v932
        %v934 = vpop.xlane.xlu0 %933
        %v935 = vsub.f32 %v927, %v934
        %v936 = vmul.f32 %v935, 1.442695
        %v937 = vpow.pop %v936
        %v938 = vsel %vm762, %v937, 0.0
        %939 = vadd.xlane.f32.xlu0 %v938
        %v940 = vpop.xlane.xlu0 %939
        %v941 = vrcp.pop %v940
        %v942 = vmul.f32 %v937, %v941
        %v943 = vpack.c.bf16 %v942, %v942
        %s944 = scalar_lea.vmem %s602, 4 [#allocation8]
        %945 = vst.msk [vmem:[%s944] sm:$0xf] %vm821, %v943
        %946 = vrot.lane.b32.xlu0 %v883, 88
        %v947 = vpop.permute.xlu0 %946
        %v949 = vsel %vm762, %v943, 0
        %v952 = vsel %vm831, %v947, 0
        %954 = vmatprep.subr.bf16.mxu0 0
        %955 = vmatpush1.bf16.msra.mxu0 0
        %956 = vmatprep.subr.bf16.mxu0 0
        %957 = vmatpush1.bf16.msra.mxu0 0
        %958 = vmatprep.subr.bf16.mxu0 0
        %959 = vmatpush1.bf16.msra.mxu0 0
        %960 = vmatprep.subr.bf16.mxu0 0
        %961 = vmatpush1.bf16.msra.mxu0 0
        %962 = vmatprep.subr.bf16.mxu0 0
        %963 = vmatpush1.bf16.msra.mxu0 0
        %964 = vmatprep.subr.bf16.mxu0 0
        %965 = vmatpush1.bf16.msra.mxu0 0
        %966 = vmatprep.subr.bf16.mxu0 0
        %967 = vmatpush1.bf16.msra.mxu0 0
        %968 = vmatprep.subr.bf16.mxu0 0
        %969 = vmatpush1.bf16.msra.mxu0 %v952
        %970 = vmatprep.subr.bf16.mxu0 0
        %971 = vmatpush2.bf16.msra.mxu0 0
        %972 = vmatprep.subr.bf16.mxu0 0
        %973 = vmatpush2.bf16.msra.mxu0 0
        %974 = vmatprep.subr.bf16.mxu0 0
        %975 = vmatpush2.bf16.msra.mxu0 0
        %976 = vmatprep.subr.bf16.mxu0 0
        %977 = vmatpush2.bf16.msra.mxu0 0
        %978 = vmatprep.subr.bf16.mxu0 0
        %979 = vmatpush2.bf16.msra.mxu0 0
        %980 = vmatprep.subr.bf16.mxu0 0
        %981 = vmatpush2.bf16.msra.mxu0 0
        %982 = vmatprep.subr.bf16.mxu0 0
        %983 = vmatpush2.bf16.msra.mxu0 0
        %984 = vmatprep.subr.bf16.mxu0 0
        %985 = vmatpush2.bf16.msra.mxu0 0
        %986 = vmatprep.mubr.bf16.mxu0 0
        %987 = vmatmul.mubr.bf16.gmra.mxu0 %v949
        %v988 = vpop.f32.mrf.mxu0
        %v989 = vadd.f32 0.0, %v988
        %v990 = vpop.f32.mrf.mxu0
        %v991 = vpop.f32.mrf.mxu0
        %v992 = vpop.f32.mrf.mxu0
        %993 = vdwg.mxu0
        %v994 = vpack.c.bf16 %v989, %v989
        %v996 = vunpack.c.l.b16 %v994
        %v997 = vpack.c.b16 %v996, %v996
        %998 = vrot.lane.b32.xlu0 %v997, 8
        %v999 = vpop.permute.xlu0 %998
        %vm1001 = vcmask 126016
        %1002 = vst.msk [vmem:[#allocation3] sm:$0xf] %vm1001, %v999
        %v1003 = vld [vmem:[#allocation2] sm:$0xf]
        %1004 = vrot.lane.b32.xlu0 %v760, 112
        %v1005 = vpop.permute.xlu0 %1004
        %v1007 = vunpack.c.l.b16 %v1003
        %v1008 = vpack.c.b16 %v1007, %v1007
        %1009 = vrot.lane.b32.xlu0 %v1008, 112
        %v1010 = vpop.permute.xlu0 %1009
        %v1012 = vsel %vm762, %v1005, 0
        %v1015 = vsel %vm762, %v1010, 0
        %1017 = vmatprep.subr.bf16.mxu0 0
        %1018 = vmatpush1.bf16.xpose.msra.mxu0 0
        %1019 = vmatprep.subr.bf16.mxu0 0
        %1020 = vmatpush1.bf16.xpose.msra.mxu0 0
        %1021 = vmatprep.subr.bf16.mxu0 0
        %1022 = vmatpush1.bf16.xpose.msra.mxu0 0
        %1023 = vmatprep.subr.bf16.mxu0 0
        %1024 = vmatpush1.bf16.xpose.msra.mxu0 0
        %1025 = vmatprep.subr.bf16.mxu0 0
        %1026 = vmatpush1.bf16.xpose.msra.mxu0 0
        %1027 = vmatprep.subr.bf16.mxu0 0
        %1028 = vmatpush1.bf16.xpose.msra.mxu0 0
        %1029 = vmatprep.subr.bf16.mxu0 0
        %1030 = vmatpush1.bf16.xpose.msra.mxu0 0
        %1031 = vmatprep.subr.bf16.mxu0 0
        %1032 = vmatpush1.bf16.xpose.msra.mxu0 %v1015
        %1033 = vmatprep.subr.bf16.mxu0 0
        %1034 = vmatpush2.bf16.xpose.msra.mxu0 0
        %1035 = vmatprep.subr.bf16.mxu0 0
        %1036 = vmatpush2.bf16.xpose.msra.mxu0 0
        %1037 = vmatprep.subr.bf16.mxu0 0
        %1038 = vmatpush2.bf16.xpose.msra.mxu0 0
        %1039 = vmatprep.subr.bf16.mxu0 0
        %1040 = vmatpush2.bf16.xpose.msra.mxu0 0
        %1041 = vmatprep.subr.bf16.mxu0 0
        %1042 = vmatpush2.bf16.xpose.msra.mxu0 0
        %1043 = vmatprep.subr.bf16.mxu0 0
        %1044 = vmatpush2.bf16.xpose.msra.mxu0 0
        %1045 = vmatprep.subr.bf16.mxu0 0
        %1046 = vmatpush2.bf16.xpose.msra.mxu0 0
        %1047 = vmatprep.subr.bf16.mxu0 0
        %1048 = vmatpush2.bf16.xpose.msra.mxu0 0
        %1049 = vmatprep.mubr.bf16.mxu0 0
        %1050 = vmatmul.mubr.bf16.gmra.mxu0 %v1012
        %v1051 = vpop.f32.mrf.mxu0
        %v1052 = vadd.f32 0.0, %v1051
        %v1053 = vpop.f32.mrf.mxu0
        %v1054 = vpop.f32.mrf.mxu0
        %v1055 = vpop.f32.mrf.mxu0
        %1056 = vdwg.mxu0
        %v1057 = vsel %vm762, %v1052, -inf
        %1058 = vmax.xlane.f32.xlu0 %v1057
        %v1059 = vpop.xlane.xlu0 %1058
        %v1060 = vsub.f32 %v1052, %v1059
        %v1061 = vmul.f32 %v1060, 1.442695
        %v1062 = vpow.pop %v1061
        %v1063 = vsel %vm762, %v1062, 0.0
        %1064 = vadd.xlane.f32.xlu0 %v1063
        %v1065 = vpop.xlane.xlu0 %1064
        %v1066 = vrcp.pop %v1065
        %v1067 = vmul.f32 %v1062, %v1066
        %v1068 = vpack.c.bf16 %v1067, %v1067
        %s1069 = scalar_lea.vmem %s602, 8 [#allocation8]
        %1070 = vst.msk [vmem:[%s1069] sm:$0xf] %vm821, %v1068
        %1071 = vrot.lane.b32.xlu0 %v1008, 80
        %v1072 = vpop.permute.xlu0 %1071
        %v1074 = vsel %vm762, %v1068, 0
        %v1077 = vsel %vm831, %v1072, 0
        %1079 = vmatprep.subr.bf16.mxu0 0
        %1080 = vmatpush1.bf16.msra.mxu0 0
        %1081 = vmatprep.subr.bf16.mxu0 0
        %1082 = vmatpush1.bf16.msra.mxu0 0
        %1083 = vmatprep.subr.bf16.mxu0 0
        %1084 = vmatpush1.bf16.msra.mxu0 0
        %1085 = vmatprep.subr.bf16.mxu0 0
        %1086 = vmatpush1.bf16.msra.mxu0 0
        %1087 = vmatprep.subr.bf16.mxu0 0
        %1088 = vmatpush1.bf16.msra.mxu0 0
        %1089 = vmatprep.subr.bf16.mxu0 0
        %1090 = vmatpush1.bf16.msra.mxu0 0
        %1091 = vmatprep.subr.bf16.mxu0 0
        %1092 = vmatpush1.bf16.msra.mxu0 0
        %1093 = vmatprep.subr.bf16.mxu0 0
        %1094 = vmatpush1.bf16.msra.mxu0 %v1077
        %1095 = vmatprep.subr.bf16.mxu0 0
        %1096 = vmatpush2.bf16.msra.mxu0 0
        %1097 = vmatprep.subr.bf16.mxu0 0
        %1098 = vmatpush2.bf16.msra.mxu0 0
        %1099 = vmatprep.subr.bf16.mxu0 0
        %1100 = vmatpush2.bf16.msra.mxu0 0
        %1101 = vmatprep.subr.bf16.mxu0 0
        %1102 = vmatpush2.bf16.msra.mxu0 0
        %1103 = vmatprep.subr.bf16.mxu0 0
        %1104 = vmatpush2.bf16.msra.mxu0 0
        %1105 = vmatprep.subr.bf16.mxu0 0
        %1106 = vmatpush2.bf16.msra.mxu0 0
        %1107 = vmatprep.subr.bf16.mxu0 0
        %1108 = vmatpush2.bf16.msra.mxu0 0
        %1109 = vmatprep.subr.bf16.mxu0 0
        %1110 = vmatpush2.bf16.msra.mxu0 0
        %1111 = vmatprep.mubr.bf16.mxu0 0
        %1112 = vmatmul.mubr.bf16.gmra.mxu0 %v1074
        %v1113 = vpop.f32.mrf.mxu0
        %v1114 = vadd.f32 0.0, %v1113
        %v1115 = vpop.f32.mrf.mxu0
        %v1116 = vpop.f32.mrf.mxu0
        %v1117 = vpop.f32.mrf.mxu0
        %1118 = vdwg.mxu0
        %v1119 = vpack.c.bf16 %v1114, %v1114
        %v1121 = vunpack.c.l.b16 %v1119
        %v1122 = vpack.c.b16 %v1121, %v1121
        %1123 = vrot.lane.b32.xlu0 %v1122, 16
        %v1124 = vpop.permute.xlu0 %1123
        %vm1126 = vcmask 191616
        %1127 = vst.msk [vmem:[#allocation3] sm:$0xf] %vm1126, %v1124
        %v1128 = vld [vmem:[#allocation2] sm:$0xf]
        %1129 = vrot.lane.b32.xlu0 %v760, 104
        %v1130 = vpop.permute.xlu0 %1129
        %v1132 = vunpack.c.l.b16 %v1128
        %v1133 = vpack.c.b16 %v1132, %v1132
        %1134 = vrot.lane.b32.xlu0 %v1133, 104
        %v1135 = vpop.permute.xlu0 %1134
        %v1137 = vsel %vm762, %v1130, 0
        %v1140 = vsel %vm762, %v1135, 0
        %1142 = vmatprep.subr.bf16.mxu0 0
        %1143 = vmatpush1.bf16.xpose.msra.mxu0 0
        %1144 = vmatprep.subr.bf16.mxu0 0
        %1145 = vmatpush1.bf16.xpose.msra.mxu0 0
        %1146 = vmatprep.subr.bf16.mxu0 0
        %1147 = vmatpush1.bf16.xpose.msra.mxu0 0
        %1148 = vmatprep.subr.bf16.mxu0 0
        %1149 = vmatpush1.bf16.xpose.msra.mxu0 0
        %1150 = vmatprep.subr.bf16.mxu0 0
        %1151 = vmatpush1.bf16.xpose.msra.mxu0 0
        %1152 = vmatprep.subr.bf16.mxu0 0
        %1153 = vmatpush1.bf16.xpose.msra.mxu0 0
        %1154 = vmatprep.subr.bf16.mxu0 0
        %1155 = vmatpush1.bf16.xpose.msra.mxu0 0
        %1156 = vmatprep.subr.bf16.mxu0 0
        %1157 = vmatpush1.bf16.xpose.msra.mxu0 %v1140
        %1158 = vmatprep.subr.bf16.mxu0 0
        %1159 = vmatpush2.bf16.xpose.msra.mxu0 0
        %1160 = vmatprep.subr.bf16.mxu0 0
        %1161 = vmatpush2.bf16.xpose.msra.mxu0 0
        %1162 = vmatprep.subr.bf16.mxu0 0
        %1163 = vmatpush2.bf16.xpose.msra.mxu0 0
        %1164 = vmatprep.subr.bf16.mxu0 0
        %1165 = vmatpush2.bf16.xpose.msra.mxu0 0
        %1166 = vmatprep.subr.bf16.mxu0 0
        %1167 = vmatpush2.bf16.xpose.msra.mxu0 0
        %1168 = vmatprep.subr.bf16.mxu0 0
        %1169 = vmatpush2.bf16.xpose.msra.mxu0 0
        %1170 = vmatprep.subr.bf16.mxu0 0
        %1171 = vmatpush2.bf16.xpose.msra.mxu0 0
        %1172 = vmatprep.subr.bf16.mxu0 0
        %1173 = vmatpush2.bf16.xpose.msra.mxu0 0
        %1174 = vmatprep.mubr.bf16.mxu0 0
        %1175 = vmatmul.mubr.bf16.gmra.mxu0 %v1137
        %v1176 = vpop.f32.mrf.mxu0
        %v1177 = vadd.f32 0.0, %v1176
        %v1178 = vpop.f32.mrf.mxu0
        %v1179 = vpop.f32.mrf.mxu0
        %v1180 = vpop.f32.mrf.mxu0
        %1181 = vdwg.mxu0
        %v1182 = vsel %vm762, %v1177, -inf
        %1183 = vmax.xlane.f32.xlu0 %v1182
        %v1184 = vpop.xlane.xlu0 %1183
        %v1185 = vsub.f32 %v1177, %v1184
        %v1186 = vmul.f32 %v1185, 1.442695
        %v1187 = vpow.pop %v1186
        %v1188 = vsel %vm762, %v1187, 0.0
        %1189 = vadd.xlane.f32.xlu0 %v1188
        %v1190 = vpop.xlane.xlu0 %1189
        %v1191 = vrcp.pop %v1190
        %v1192 = vmul.f32 %v1187, %v1191
        %v1193 = vpack.c.bf16 %v1192, %v1192
        %s1194 = scalar_lea.vmem %s602, 12 [#allocation8]
        %1195 = vst.msk [vmem:[%s1194] sm:$0xf] %vm821, %v1193
        %1196 = vrot.lane.b32.xlu0 %v1133, 72
        %v1197 = vpop.permute.xlu0 %1196
        %v1199 = vsel %vm762, %v1193, 0
        %v1202 = vsel %vm831, %v1197, 0
        %1204 = vmatprep.subr.bf16.mxu0 0
        %1205 = vmatpush1.bf16.msra.mxu0 0
        %1206 = vmatprep.subr.bf16.mxu0 0
        %1207 = vmatpush1.bf16.msra.mxu0 0
        %1208 = vmatprep.subr.bf16.mxu0 0
        %1209 = vmatpush1.bf16.msra.mxu0 0
        %1210 = vmatprep.subr.bf16.mxu0 0
        %1211 = vmatpush1.bf16.msra.mxu0 0
        %1212 = vmatprep.subr.bf16.mxu0 0
        %1213 = vmatpush1.bf16.msra.mxu0 0
        %1214 = vmatprep.subr.bf16.mxu0 0
        %1215 = vmatpush1.bf16.msra.mxu0 0
        %1216 = vmatprep.subr.bf16.mxu0 0
        %1217 = vmatpush1.bf16.msra.mxu0 0
        %1218 = vmatprep.subr.bf16.mxu0 0
        %1219 = vmatpush1.bf16.msra.mxu0 %v1202
        %1220 = vmatprep.subr.bf16.mxu0 0
        %1221 = vmatpush2.bf16.msra.mxu0 0
        %1222 = vmatprep.subr.bf16.mxu0 0
        %1223 = vmatpush2.bf16.msra.mxu0 0
        %1224 = vmatprep.subr.bf16.mxu0 0
        %1225 = vmatpush2.bf16.msra.mxu0 0
        %1226 = vmatprep.subr.bf16.mxu0 0
        %1227 = vmatpush2.bf16.msra.mxu0 0
        %1228 = vmatprep.subr.bf16.mxu0 0
        %1229 = vmatpush2.bf16.msra.mxu0 0
        %1230 = vmatprep.subr.bf16.mxu0 0
        %1231 = vmatpush2.bf16.msra.mxu0 0
        %1232 = vmatprep.subr.bf16.mxu0 0
        %1233 = vmatpush2.bf16.msra.mxu0 0
        %1234 = vmatprep.subr.bf16.mxu0 0
        %1235 = vmatpush2.bf16.msra.mxu0 0
        %1236 = vmatprep.mubr.bf16.mxu0 0
        %1237 = vmatmul.mubr.bf16.gmra.mxu0 %v1199
        %v1238 = vpop.f32.mrf.mxu0
        %v1239 = vadd.f32 0.0, %v1238
        %v1240 = vpop.f32.mrf.mxu0
        %v1241 = vpop.f32.mrf.mxu0
        %v1242 = vpop.f32.mrf.mxu0
        %1243 = vdwg.mxu0
        %v1244 = vpack.c.bf16 %v1239, %v1239
        %v1246 = vunpack.c.l.b16 %v1244
        %v1247 = vpack.c.b16 %v1246, %v1246
        %1248 = vrot.lane.b32.xlu0 %v1247, 24
        %v1249 = vpop.permute.xlu0 %1248
        %vm1251 = vcmask 257216
        %1252 = vst.msk [vmem:[#allocation3] sm:$0xf] %vm1251, %v1249
        %v1253 = vld [vmem:[#allocation3] sm:$0xf]
        %v1254 = vld [vmem:[%s4] sm:$0xf]
        %v1255 = vld [vmem:[%s4 + $0x4] sm:$0xf]
        %v1256 = vld [vmem:[%s4 + $0x8] sm:$0xf]
        %v1257 = vld [vmem:[%s4 + $0xc] sm:$0xf]
        %v1258 = vld [vmem:[%s9] sm:$0x1]
        %v1260 = vlaneseq
        %v1261 = vshrl.u32 %v1260, 7
        %v1262 = vsub.s32 0, %v1261
        %v1263 = vrot.slane %v1258, %v1262
        %v1269 = vunpack.c.l.b16 %v1254
        %v1270 = vunpack.c.l.b16 %v1255
        %v1271 = vunpack.c.l.b16 %v1256
        %v1272 = vunpack.c.l.b16 %v1257
        %v1273 = vpack.c.b16 %v1270, %v1269
        %v1274 = vpack.c.b16 %v1272, %v1271
        %v1278 = vsel %vm716, %v1253, 0
        %1280 = vmatprep.subr.bf16.mxu0 0
        %1281 = vmatpush1.bf16.msra.mxu0 0
        %1282 = vmatprep.subr.bf16.mxu0 0
        %1283 = vmatpush1.bf16.msra.mxu0 0
        %1284 = vmatprep.subr.bf16.mxu0 0
        %1285 = vmatpush1.bf16.msra.mxu0 0
        %1286 = vmatprep.subr.bf16.mxu0 0
        %1287 = vmatpush1.bf16.msra.mxu0 0
        %1288 = vmatprep.subr.bf16.mxu0 0
        %1289 = vmatpush1.bf16.msra.mxu0 0
        %1290 = vmatprep.subr.bf16.mxu0 0
        %1291 = vmatpush1.bf16.msra.mxu0 0
        %1292 = vmatprep.subr.bf16.mxu0 0
        %1293 = vmatpush1.bf16.msra.mxu0 %v1274
        %1294 = vmatprep.subr.bf16.mxu0 0
        %1295 = vmatpush1.bf16.msra.mxu0 %v1273
        %1296 = vmatprep.subr.bf16.mxu0 0
        %1297 = vmatpush2.bf16.msra.mxu0 0
        %1298 = vmatprep.subr.bf16.mxu0 0
        %1299 = vmatpush2.bf16.msra.mxu0 0
        %1300 = vmatprep.subr.bf16.mxu0 0
        %1301 = vmatpush2.bf16.msra.mxu0 0
        %1302 = vmatprep.subr.bf16.mxu0 0
        %1303 = vmatpush2.bf16.msra.mxu0 0
        %1304 = vmatprep.subr.bf16.mxu0 0
        %1305 = vmatpush2.bf16.msra.mxu0 0
        %1306 = vmatprep.subr.bf16.mxu0 0
        %1307 = vmatpush2.bf16.msra.mxu0 0
        %1308 = vmatprep.subr.bf16.mxu0 0
        %1309 = vmatpush2.bf16.msra.mxu0 0
        %1310 = vmatprep.subr.bf16.mxu0 0
        %1311 = vmatpush2.bf16.msra.mxu0 0
        %1312 = vmatprep.mubr.bf16.mxu0 0
        %1313 = vmatmul.mubr.bf16.gmra.mxu0 %v1278
        %v1314 = vpop.f32.mrf.mxu0
        %v1315 = vadd.f32 %v1263, %v1314
        %v1316 = vpop.f32.mrf.mxu0
        %v1317 = vpop.f32.mrf.mxu0
        %v1318 = vpop.f32.mrf.mxu0
        %1319 = vdwg.mxu0
        %v1320 = vadd.f32 %v691, %v1315
        %v1321 = vld [vmem:[%s12] sm:$0x1]
        %v1322 = vld [vmem:[%s13] sm:$0x1]
        %v1323 = vsel %vm716, %v1320, 0.0
        %1324 = vadd.xlane.f32.xlu0 %v1323
        %v1325 = vpop.xlane.xlu0 %1324
        %v1326 = vrcp.pop 32.0
        %v1327 = vmul.f32 %v1325, %v1326
        %v1328 = vsub.f32 %v1320, %v1327
        %v1329 = vmul.f32 %v1328, %v1328
        %v1330 = vsel %vm716, %v1329, 0.0
        %1331 = vadd.xlane.f32.xlu0 %v1330
        %v1332 = vpop.xlane.xlu0 %1331
        %v1333 = vmul.f32 %v1332, %v1326
        %v1334 = vadd.f32 %v1333, 1e-05
        %v1335 = vrsqrt.pop %v1334
        %v1336 = vmul.f32 %v1328, %v1335
        %v1338 = vlaneseq
        %v1339 = vshrl.u32 %v1338, 7
        %v1340 = vsub.s32 0, %v1339
        %v1341 = vrot.slane %v1321, %v1340
        %v1343 = vmul.f32 %v1336, %v1341
        %v1345 = vlaneseq
        %v1346 = vshrl.u32 %v1345, 7
        %v1347 = vsub.s32 0, %v1346
        %v1348 = vrot.slane %v1322, %v1347
        %v1350 = vadd.f32 %v1343, %v1348
        %v1351 = vpack.c.bf16 %v1350, %v1350
        %v1352 = vld [vmem:[#allocation4] sm:$0xf]
        %v1353 = vld [vmem:[#allocation4 + $0x4] sm:$0xf]
        %v1354 = vld [vmem:[#allocation4 + $0x8] sm:$0xf]
        %v1355 = vld [vmem:[#allocation4 + $0xc] sm:$0xf]
        %v1356 = vld [vmem:[%s10] sm:$0x1]
        %v1358 = vlaneseq
        %v1359 = vshrl.u32 %v1358, 7
        %v1360 = vsub.s32 0, %v1359
        %v1361 = vrot.slane %v1356, %v1360
        %v1367 = vunpack.c.l.b16 %v1352
        %v1368 = vunpack.c.l.b16 %v1353
        %v1369 = vunpack.c.l.b16 %v1354
        %v1370 = vunpack.c.l.b16 %v1355
        %v1371 = vpack.c.b16 %v1368, %v1367
        %v1372 = vpack.c.b16 %v1370, %v1369
        %v1376 = vsel %vm716, %v1351, 0
        %1378 = vmatprep.subr.bf16.mxu0 0
        %1379 = vmatpush1.bf16.msra.mxu0 0
        %1380 = vmatprep.subr.bf16.mxu0 0
        %1381 = vmatpush1.bf16.msra.mxu0 0
        %1382 = vmatprep.subr.bf16.mxu0 0
        %1383 = vmatpush1.bf16.msra.mxu0 0
        %1384 = vmatprep.subr.bf16.mxu0 0
        %1385 = vmatpush1.bf16.msra.mxu0 0
        %1386 = vmatprep.subr.bf16.mxu0 0
        %1387 = vmatpush1.bf16.msra.mxu0 0
        %1388 = vmatprep.subr.bf16.mxu0 0
        %1389 = vmatpush1.bf16.msra.mxu0 0
        %1390 = vmatprep.subr.bf16.mxu0 0
        %1391 = vmatpush1.bf16.msra.mxu0 %v1372
        %1392 = vmatprep.subr.bf16.mxu0 0
        %1393 = vmatpush1.bf16.msra.mxu0 %v1371
        %1394 = vmatprep.subr.bf16.mxu0 0
        %1395 = vmatpush2.bf16.msra.mxu0 0
        %1396 = vmatprep.subr.bf16.mxu0 0
        %1397 = vmatpush2.bf16.msra.mxu0 0
        %1398 = vmatprep.subr.bf16.mxu0 0
        %1399 = vmatpush2.bf16.msra.mxu0 0
        %1400 = vmatprep.subr.bf16.mxu0 0
        %1401 = vmatpush2.bf16.msra.mxu0 0
        %1402 = vmatprep.subr.bf16.mxu0 0
        %1403 = vmatpush2.bf16.msra.mxu0 0
        %1404 = vmatprep.subr.bf16.mxu0 0
        %1405 = vmatpush2.bf16.msra.mxu0 0
        %1406 = vmatprep.subr.bf16.mxu0 0
        %1407 = vmatpush2.bf16.msra.mxu0 0
        %1408 = vmatprep.subr.bf16.mxu0 0
        %1409 = vmatpush2.bf16.msra.mxu0 0
        %1410 = vmatprep.mubr.bf16.mxu0 0
        %1411 = vmatmul.mubr.bf16.gmra.mxu0 %v1376
        %v1412 = vpop.f32.mrf.mxu0
        %v1413 = vadd.f32 %v1361, %v1412
        %v1414 = vpop.f32.mrf.mxu0
        %v1415 = vpop.f32.mrf.mxu0
        %v1416 = vpop.f32.mrf.mxu0
        %1417 = vdwg.mxu0
        %v1418 = vmax.f32 %v1413, 0.0
        %v1419 = vpack.c.bf16 %v1418, %v1418
        %v1420 = vld [vmem:[%s6] sm:$0xf]
        %v1421 = vld [vmem:[%s6 + $0x4] sm:$0xf]
        %v1422 = vld [vmem:[%s6 + $0x8] sm:$0xf]
        %v1423 = vld [vmem:[%s6 + $0xc] sm:$0xf]
        %v1424 = vld [vmem:[%s6 + $0x10] sm:$0xf]
        %v1425 = vld [vmem:[%s6 + $0x14] sm:$0xf]
        %v1426 = vld [vmem:[%s6 + $0x18] sm:$0xf]
        %v1427 = vld [vmem:[%s6 + $0x1c] sm:$0xf]
        %v1428 = vld [vmem:[%s6 + $0x20] sm:$0xf]
        %v1429 = vld [vmem:[%s6 + $0x24] sm:$0xf]
        %v1430 = vld [vmem:[%s6 + $0x28] sm:$0xf]
        %v1431 = vld [vmem:[%s6 + $0x2c] sm:$0xf]
        %v1432 = vld [vmem:[%s6 + $0x30] sm:$0xf]
        %v1433 = vld [vmem:[%s6 + $0x34] sm:$0xf]
        %v1434 = vld [vmem:[%s6 + $0x38] sm:$0xf]
        %v1435 = vld [vmem:[%s6 + $0x3c] sm:$0xf]
        %v1436 = vld [vmem:[%s11] sm:$0x1]
        %v1438 = vlaneseq
        %v1439 = vshrl.u32 %v1438, 7
        %v1440 = vsub.s32 0, %v1439
        %v1441 = vrot.slane %v1436, %v1440
        %v1459 = vunpack.c.l.b16 %v1420
        %v1460 = vunpack.c.l.b16 %v1421
        %v1461 = vunpack.c.l.b16 %v1422
        %v1462 = vunpack.c.l.b16 %v1423
        %v1463 = vunpack.c.l.b16 %v1424
        %v1464 = vunpack.c.l.b16 %v1425
        %v1465 = vunpack.c.l.b16 %v1426
        %v1466 = vunpack.c.l.b16 %v1427
        %v1467 = vunpack.c.l.b16 %v1428
        %v1468 = vunpack.c.l.b16 %v1429
        %v1469 = vunpack.c.l.b16 %v1430
        %v1470 = vunpack.c.l.b16 %v1431
        %v1471 = vunpack.c.l.b16 %v1432
        %v1472 = vunpack.c.l.b16 %v1433
        %v1473 = vunpack.c.l.b16 %v1434
        %v1474 = vunpack.c.l.b16 %v1435
        %v1475 = vpack.c.b16 %v1460, %v1459
        %v1476 = vpack.c.b16 %v1462, %v1461
        %v1477 = vpack.c.b16 %v1464, %v1463
        %v1478 = vpack.c.b16 %v1466, %v1465
        %v1479 = vpack.c.b16 %v1468, %v1467
        %v1480 = vpack.c.b16 %v1470, %v1469
        %v1481 = vpack.c.b16 %v1472, %v1471
        %v1482 = vpack.c.b16 %v1474, %v1473
        %1491 = vmatprep.subr.bf16.mxu0 0
        %1492 = vmatpush1.bf16.msra.mxu0 %v1482
        %1493 = vmatprep.subr.bf16.mxu0 0
        %1494 = vmatpush1.bf16.msra.mxu0 %v1481
        %1495 = vmatprep.subr.bf16.mxu0 0
        %1496 = vmatpush1.bf16.msra.mxu0 %v1480
        %1497 = vmatprep.subr.bf16.mxu0 0
        %1498 = vmatpush1.bf16.msra.mxu0 %v1479
        %1499 = vmatprep.subr.bf16.mxu0 0
        %1500 = vmatpush1.bf16.msra.mxu0 %v1478
        %1501 = vmatprep.subr.bf16.mxu0 0
        %1502 = vmatpush1.bf16.msra.mxu0 %v1477
        %1503 = vmatprep.subr.bf16.mxu0 0
        %1504 = vmatpush1.bf16.msra.mxu0 %v1476
        %1505 = vmatprep.subr.bf16.mxu0 0
        %1506 = vmatpush1.bf16.msra.mxu0 %v1475
        %1507 = vmatprep.subr.bf16.mxu0 0
        %1508 = vmatpush2.bf16.msra.mxu0 0
        %1509 = vmatprep.subr.bf16.mxu0 0
        %1510 = vmatpush2.bf16.msra.mxu0 0
        %1511 = vmatprep.subr.bf16.mxu0 0
        %1512 = vmatpush2.bf16.msra.mxu0 0
        %1513 = vmatprep.subr.bf16.mxu0 0
        %1514 = vmatpush2.bf16.msra.mxu0 0
        %1515 = vmatprep.subr.bf16.mxu0 0
        %1516 = vmatpush2.bf16.msra.mxu0 0
        %1517 = vmatprep.subr.bf16.mxu0 0
        %1518 = vmatpush2.bf16.msra.mxu0 0
        %1519 = vmatprep.subr.bf16.mxu0 0
        %1520 = vmatpush2.bf16.msra.mxu0 0
        %1521 = vmatprep.subr.bf16.mxu0 0
        %1522 = vmatpush2.bf16.msra.mxu0 0
        %1523 = vmatprep.mubr.bf16.mxu0 0
        %1524 = vmatmul.mubr.bf16.gmra.mxu0 %v1419
        %v1525 = vpop.f32.mrf.mxu0
        %v1526 = vadd.f32 %v1441, %v1525
        %v1527 = vpop.f32.mrf.mxu0
        %v1528 = vpop.f32.mrf.mxu0
        %v1529 = vpop.f32.mrf.mxu0
        %1530 = vdwg.mxu0
        %v1531 = vadd.f32 %v1350, %v1526
        %v1532 = vld [vmem:[%s14] sm:$0x1]
        %v1533 = vld [vmem:[%s15] sm:$0x1]
        %v1534 = vsel %vm716, %v1531, 0.0
        %1535 = vadd.xlane.f32.xlu0 %v1534
        %v1536 = vpop.xlane.xlu0 %1535
        %v1537 = vmul.f32 %v1536, %v1326
        %v1538 = vsub.f32 %v1531, %v1537
        %v1539 = vmul.f32 %v1538, %v1538
        %v1540 = vsel %vm716, %v1539, 0.0
        %1541 = vadd.xlane.f32.xlu0 %v1540
        %v1542 = vpop.xlane.xlu0 %1541
        %v1543 = vmul.f32 %v1542, %v1326
        %v1544 = vadd.f32 %v1543, 1e-05
        %v1545 = vrsqrt.pop %v1544
        %v1546 = vmul.f32 %v1538, %v1545
        %v1548 = vlaneseq
        %v1549 = vshrl.u32 %v1548, 7
        %v1550 = vsub.s32 0, %v1549
        %v1551 = vrot.slane %v1532, %v1550
        %v1553 = vmul.f32 %v1546, %v1551
        %v1555 = vlaneseq
        %v1556 = vshrl.u32 %v1555, 7
        %v1557 = vsub.s32 0, %v1556
        %v1558 = vrot.slane %v1533, %v1557
        %v1560 = vadd.f32 %v1553, %v1558
        %1561 = vst.msk [vmem:[%s595] sm:$0xff] %vm716, %v1560
        %s1562 = sand.u32 %s406, 1
        %s1563 = scalar_lea.sflag [#allocation6], %s1562
        %s1564 = sand.u32 %s406, 1
        %s1565 = smul.addr %s1564, 8
        %s1566 = scalar_lea.vmem [#allocation7], %s1565
        %s1567 = sand.u32 %s434, 1
        %s1568 = scalar_lea.sflag [#allocation9], %s1567
        %s1569 = sand.u32 %s434, 1
        %s1570 = smul.addr %s1569, 16
        %s1571 = scalar_lea.vmem [#allocation8], %s1570
        // Predicated region
        $region93: #{tpu_custom_call.1} parent=83 // pred_check
          %p1572 = pneg %p416
        $region94: #{tpu_custom_call.1} parent=83 // pred_check_branch
          %1574 = sbr.rel (%p1572) target = $region96
        $region95: #{tpu_custom_call.1} parent=83 // pred_region
          %s1576 = ssub.s32 128, 128
          %1577 = vsyncadd %s1563, %s1576
          %s1578 = sadd.s32 %s41, %s40
          %s1579 = smul.addr %s1578, 128
          %s1580 = scalar_lea.hbm %s16, %s1579
          %s1582 = sshll.u32 %s1566, 4
          %s1583 = int_to_ptr.vmem [resolvable:$true] %s1582
          %1585 = dma.vmem_to_hbm [thread:$0]  %s1583, 128, %s1580, %s1563
        $region96: #{tpu_custom_call.1} parent=83 // pred_fallthru
          _
        // Predicated region
        $region97: #{tpu_custom_call.1} parent=83 // pred_check
          %p1586 = pneg %p444
        $region98: #{tpu_custom_call.1} parent=83 // pred_check_branch
          %1588 = sbr.rel (%p1586) target = $region100
        $region99: #{tpu_custom_call.1} parent=83 // pred_region
          %s1590 = ssub.s32 256, 256
          %1591 = vsyncadd %s1568, %s1590
          %s1592 = smul.addr %s40, 4
          %s1593 = sadd.s32 %s41, %s1592
          %s1594 = smul.addr %s1593, 64
          %s1595 = scalar_lea.hbm %s17, %s1594
          %s1596 = sshll.u32 %s1571, 4
          %s1597 = int_to_ptr.vmem [resolvable:$true] %s1596
          %1602 = dma.vmem_to_hbm [thread:$0]  %s1597, 256, %s1595, %s1568, 64, 64, 4
        $region100: #{tpu_custom_call.1} parent=83 // pred_fallthru
          _
      $region84: #{tpu_custom_call.1} parent=5 // pred_fallthru
        _
      %p1603 = scmp.le.s32.totalorder 2, %s31
      // Predicated region
      $region101: #{tpu_custom_call.1} parent=5 // pred_check
        %p1604 = pneg %p1603
      $region102: #{tpu_custom_call.1} parent=5 // pred_check_branch
        %1606 = sbr.rel (%p1604) target = $region104
      $region103: #{tpu_custom_call.1} parent=5 // pred_region
        %s1607 = ssub.s32 %s31, 2
        // Predicated region
        $region105: #{tpu_custom_call.1} parent=103 // pred_check
          %p1608 = pneg %p422
        $region106: #{tpu_custom_call.1} parent=103 // pred_check_branch
          %1610 = sbr.rel (%p1608) target = $region108
        $region107: #{tpu_custom_call.1} parent=103 // pred_region
          %s1611 = sand.u32 %s407, 1
          %s1612 = scalar_lea.sflag [#allocation6], %s1611
          %s1613 = sand.u32 %s407, 1
          %s1614 = smul.addr %s1613, 8
          %s1615 = scalar_lea.vmem [#allocation7], %s1614
          %1616 = dma.done %s1612, 128
        $region108: #{tpu_custom_call.1} parent=103 // pred_fallthru
          _
        // Predicated region
        $region109: #{tpu_custom_call.1} parent=103 // pred_check
          %p1617 = pneg %p450
        $region110: #{tpu_custom_call.1} parent=103 // pred_check_branch
          %1619 = sbr.rel (%p1617) target = $region112
        $region111: #{tpu_custom_call.1} parent=103 // pred_region
          %s1620 = sand.u32 %s435, 1
          %s1621 = scalar_lea.sflag [#allocation9], %s1620
          %s1622 = sand.u32 %s435, 1
          %s1623 = smul.addr %s1622, 16
          %s1624 = scalar_lea.vmem [#allocation8], %s1623
          %1625 = dma.done %s1621, 256
        $region112: #{tpu_custom_call.1} parent=103 // pred_fallthru
          _
      $region104: #{tpu_custom_call.1} parent=5 // pred_fallthru
        _
    $region6: #{tpu_custom_call.1} parent=1 // loop_footer
      %s35 = sadd.s32 1, %s31
    $region7: #{tpu_custom_call.1} parent=1 // loop_footer_branch
      %30 = sbr.rel target = $region3
    $region8: #{tpu_custom_call.1} parent=1 // loop_exit
      _
    %1626 = vsyncpa [#allocation5], 1
    %s1627 = scalar_lea.sflag [#allocation5], 1
    %1628 = vsyncpa %s1627, 1
    %1629 = vsyncpa [#allocation6], 1
    %s1630 = scalar_lea.sflag [#allocation6], 1
    %1631 = vsyncpa %s1630, 1
    %1632 = vsyncpa [#allocation9], 1
    %s1633 = scalar_lea.sflag [#allocation9], 1
    %1634 = vsyncpa %s1633, 1

// kernel: tpu_custom_call.1
$region0: #{tpu_custom_call.1}
  #allocation0 [shape = 'u32[]', space=smem, size = 0x4, offset = 0x4, fixed_abs, tag = 'smem constant byte address 0x4 - core index']
  #allocation1 [shape = 'u32[144,128]{1,0:T(1,128)}', space=vmem, size = 0x12000, scoped, tag = 'internal scratch']
  #allocation2 [shape = 'bf16[8,64]{1,0:T(8,128)(2,1)}', space=vmem, size = 0x800, scoped, tag = 'scratch operand']
  #allocation3 [shape = 'bf16[8,32]{1,0:T(8,128)(2,1)}', space=vmem, size = 0x800, scoped, tag = 'scratch operand']
  %s0 = inlined_call_operand.vmem [shape: f32[2,8,32], index: 0, kind: input, shape index: {}]
  %s1 = inlined_call_operand.vmem [shape: f32[2,8,32], index: 1, kind: input, shape index: {}]
  %s2 = inlined_call_operand.vmem [shape: bf16[32,32], index: 2, kind: input, shape index: {}]
  %s3 = inlined_call_operand.vmem [shape: bf16[32,64], index: 3, kind: input, shape index: {}]
  %s4 = inlined_call_operand.vmem [shape: bf16[32,32], index: 4, kind: input, shape index: {}]
  %s5 = inlined_call_operand.hbm [shape: bf16[32,128], index: 5, kind: input, shape index: {}]
  %s6 = inlined_call_operand.vmem [shape: bf16[128,32], index: 6, kind: input, shape index: {}]
  %s7 = inlined_call_operand.vmem [shape: f32[1,32], index: 7, kind: input, shape index: {}]
  %s8 = inlined_call_operand.vmem [shape: f32[1,64], index: 8, kind: input, shape index: {}]
  %s9 = inlined_call_operand.vmem [shape: f32[1,32], index: 9, kind: input, shape index: {}]
  %s10 = inlined_call_operand.vmem [shape: f32[1,128], index: 10, kind: input, shape index: {}]
  %s11 = inlined_call_operand.vmem [shape: f32[1,32], index: 11, kind: input, shape index: {}]
  %s12 = inlined_call_operand.vmem [shape: f32[1,32], index: 12, kind: input, shape index: {}]
  %s13 = inlined_call_operand.vmem [shape: f32[1,32], index: 13, kind: input, shape index: {}]
  %s14 = inlined_call_operand.vmem [shape: f32[1,32], index: 14, kind: input, shape index: {}]
  %s15 = inlined_call_operand.vmem [shape: f32[1,32], index: 15, kind: input, shape index: {}]
  %s16 = inlined_call_operand.hbm [shape: f32[2,8,32], index: 16, kind: output, shape index: {0}]
  %s17 = inlined_call_operand.hbm [shape: bf16[2,4,8,8], index: 17, kind: output, shape index: {1}]
  %18 = xla_tuple %s16, %s17
  %s19 = sld [smem:[#allocation0]]
  $region113: #{tpu_custom_call.1} parent=0
    _
  %s21 = ssub.s32 1, %s19
  %s22 = scalar_select 0, %s21, %s19
  $region1: #{tpu_custom_call.1} parent=0
    #allocation4 [shape = 'u8[8192]{0}', space=vmem, size = 0x2000, scoped, tag = 'input window, operand 5, single buffered']
    #allocation5 [shape = 's32[2]{0}', space=sflag, size = 0x8, scoped, tag = 'scoped memory for tpu_custom_call.1']
    #allocation6 [shape = 's32[2]{0}', space=sflag, size = 0x8, scoped, tag = 'scoped memory for tpu_custom_call.1']
    #allocation7 [shape = 'u8[8192]{0}', space=vmem, size = 0x2000, scoped, tag = 'output window, operand 0']
    #allocation8 [shape = 'u8[16384]{0}', space=vmem, size = 0x4000, scoped, tag = 'output window, operand 1']
    #allocation9 [shape = 's32[2]{0}', space=sflag, size = 0x8, scoped, tag = 'scoped memory for tpu_custom_call.1']
    %23 = vsyncpa [#allocation5], 0
    %24 = vsyncpa [#allocation6], 0
    %s25 = scalar_lea.sflag [#allocation6], 1
    %26 = vsyncpa %s25, 0
    %27 = vsyncpa [#allocation9], 0
    %s28 = scalar_lea.sflag [#allocation9], 1
    %29 = vsyncpa %s28, 0
    loop: start=0, step=1, limit=4
    $region2: #{tpu_custom_call.1} parent=1 // loop_pre_header
      _
    $region3: #{tpu_custom_call.1} parent=1 // loop_header
      %s31 = sphi 0, %s35
      %p32 = scmp.ge.s32.totalorder %s31, 4
      %s38 = sphi 0, %s50
      %s39 = sphi 0, %s46
      %s40 = sphi 0, %s38
      %s41 = sphi 0, %s39
      %s42 = sphi 0, %s40
      %s43 = sphi 0, %s41
      %s55 = sphi 0, %s57
      %s58 = sphi 0, %s55
      %s59 = sphi 0, %s58
      %s75 = sphi 0, %s59
      %s81 = sphi 0, %s83
      %s84 = sphi 0, %s81
      %s85 = sphi 0, %s84
      %s101 = sphi 0, %s85
      %s105 = sphi 0, %s105
      %s107 = sphi 0, %s105
      %s108 = sphi 0, %s107
      %s122 = sphi 0, %s108
      %s126 = sphi 0, %s126
      %s128 = sphi 0, %s126
      %s129 = sphi 0, %s128
      %s143 = sphi 0, %s129
      %s147 = sphi 0, %s147
      %s149 = sphi 0, %s147
      %s150 = sphi 0, %s149
      %s164 = sphi 0, %s150
      %s168 = sphi 0, %s168
      %s170 = sphi 0, %s168
      %s171 = sphi 0, %s170
      %s185 = sphi 0, %s171
      %s189 = sphi 0, %s189
      %s191 = sphi 0, %s189
      %s192 = sphi 0, %s191
      %s206 = sphi 0, %s192
      %s210 = sphi 0, %s210
      %s212 = sphi 0, %s210
      %s213 = sphi 0, %s212
      %s227 = sphi 0, %s213
      %s231 = sphi 0, %s231
      %s233 = sphi 0, %s231
      %s234 = sphi 0, %s233
      %s248 = sphi 0, %s234
      %s252 = sphi 0, %s252
      %s254 = sphi 0, %s252
      %s255 = sphi 0, %s254
      %s269 = sphi 0, %s255
      %s273 = sphi 0, %s273
      %s275 = sphi 0, %s273
      %s276 = sphi 0, %s275
      %s290 = sphi 0, %s276
      %s294 = sphi 0, %s294
      %s296 = sphi 0, %s294
      %s297 = sphi 0, %s296
      %s311 = sphi 0, %s297
      %s315 = sphi 0, %s315
      %s317 = sphi 0, %s315
      %s318 = sphi 0, %s317
      %s332 = sphi 0, %s318
      %s336 = sphi 0, %s336
      %s338 = sphi 0, %s336
      %s339 = sphi 0, %s338
      %s353 = sphi 0, %s339
      %s357 = sphi 0, %s357
      %s359 = sphi 0, %s357
      %s360 = sphi 0, %s359
      %s374 = sphi 0, %s360
      %s378 = sphi 0, %s378
      %s380 = sphi 0, %s378
      %s381 = sphi 0, %s380
      %s395 = sphi 0, %s381
      %s403 = sphi 0, %s405
      %s406 = sphi 0, %s403
      %s407 = sphi 0, %s406
      %s423 = sphi 0, %s407
      %s431 = sphi 0, %s433
      %s434 = sphi 0, %s431
      %s435 = sphi 0, %s434
      %s451 = sphi 0, %s435
    $region4: #{tpu_custom_call.1} parent=1 // loop_header_branch
      %34 = sbr.rel (%p32) target = $region8
    $region5: #{tpu_custom_call.1} parent=1 // loop_body
      %s36 = ssub.s32 %s31, 1
      %s37 = ssub.s32 %s31, 2
      %s44 = sadd.s32 1, %s39
      %p45 = scmp.ge.s32.totalorder %s44, 1
      %s46 = scalar_select %p45, 0, %s44
      %s47 = sadd.s32 1, %s38
      %s48 = scalar_select %p45, %s47, %s38
      %p49 = scmp.ge.s32.totalorder %s48, 2
      %s50 = scalar_select %p49, 0, %s48
      %s51 = ssub.s32 %s38, %s50
      %s52 = ssub.s32 %s39, %s46
      %s53 = sor.u32 %s51, %s52
      %p54 = scmp.eq.s32.totalorder %s53, 0
      %s56 = sadd.s32 %s55, 1
      %s57 = scalar_select %p54, %s55, %s56
      %p60 = pneg %p54
      %p61 = scmp.eq.s32.totalorder %s31, 1
      %p62 = por %p60, %p61
      %p63 = scmp.ne.s32.totalorder %s55, %s58
      %p64 = scmp.eq.s32.totalorder %s31, 0
      %p65 = por %p63, %p64
      %p66 = scmp.ne.s32.totalorder %s55, %s58
      %p67 = scmp.eq.s32.totalorder %s36, 1
      %p68 = por %p66, %p67
      %p69 = scmp.ne.s32.totalorder %s58, %s59
      %p70 = scmp.eq.s32.totalorder %s36, 0
      %p71 = por %p69, %p70
      %p72 = scmp.ne.s32.totalorder %s58, %s59
      %p73 = scmp.eq.s32.totalorder %s37, 1
      %p74 = por %p72, %p73
      %p76 = scmp.ne.s32.totalorder %s59, %s75
      %p77 = scmp.eq.s32.totalorder %s37, 0
      %p78 = por %p76, %p77
      %s79 = ssub.s32 %s38, %s50
      %p80 = scmp.eq.s32.totalorder %s79, 0
      %s82 = sadd.s32 %s81, 1
      %s83 = scalar_select %p80, %s81, %s82
      %p86 = pneg %p80
      %p87 = scmp.eq.s32.totalorder %s31, 1
      %p88 = por %p86, %p87
      %p89 = scmp.ne.s32.totalorder %s81, %s84
      %p90 = scmp.eq.s32.totalorder %s31, 0
      %p91 = por %p89, %p90
      %p92 = scmp.ne.s32.totalorder %s81, %s84
      %p93 = scmp.eq.s32.totalorder %s36, 1
      %p94 = por %p92, %p93
      %p95 = scmp.ne.s32.totalorder %s84, %s85
      %p96 = scmp.eq.s32.totalorder %s36, 0
      %p97 = por %p95, %p96
      %p98 = scmp.ne.s32.totalorder %s84, %s85
      %p99 = scmp.eq.s32.totalorder %s37, 1
      %p100 = por %p98, %p99
      %p102 = scmp.ne.s32.totalorder %s85, %s101
      %p103 = scmp.eq.s32.totalorder %s37, 0
      %p104 = por %p102, %p103
      %s106 = sadd.s32 %s105, 1
      %p109 = scmp.eq.s32.totalorder %s31, 1
      %p110 = scmp.ne.s32.totalorder %s105, %s107
      %p111 = scmp.eq.s32.totalorder %s31, 0
      %p112 = por %p110, %p111
      %p113 = scmp.ne.s32.totalorder %s105, %s107
      %p114 = scmp.eq.s32.totalorder %s36, 1
      %p115 = por %p113, %p114
      %p116 = scmp.ne.s32.totalorder %s107, %s108
      %p117 = scmp.eq.s32.totalorder %s36, 0
      %p118 = por %p116, %p117
      %p119 = scmp.ne.s32.totalorder %s107, %s108
      %p120 = scmp.eq.s32.totalorder %s37, 1
      %p121 = por %p119, %p120
      %p123 = scmp.ne.s32.totalorder %s108, %s122
      %p124 = scmp.eq.s32.totalorder %s37, 0
      %p125 = por %p123, %p124
      %s127 = sadd.s32 %s126, 1
      %p130 = scmp.eq.s32.totalorder %s31, 1
      %p131 = scmp.ne.s32.totalorder %s126, %s128
      %p132 = scmp.eq.s32.totalorder %s31, 0
      %p133 = por %p131, %p132
      %p134 = scmp.ne.s32.totalorder %s126, %s128
      %p135 = scmp.eq.s32.totalorder %s36, 1
      %p136 = por %p134, %p135
      %p137 = scmp.ne.s32.totalorder %s128, %s129
      %p138 = scmp.eq.s32.totalorder %s36, 0
      %p139 = por %p137, %p138
      %p140 = scmp.ne.s32.totalorder %s128, %s129
      %p141 = scmp.eq.s32.totalorder %s37, 1
      %p142 = por %p140, %p141
      %p144 = scmp.ne.s32.totalorder %s129, %s143
      %p145 = scmp.eq.s32.totalorder %s37, 0
      %p146 = por %p144, %p145
      %s148 = sadd.s32 %s147, 1
      %p151 = scmp.eq.s32.totalorder %s31, 1
      %p152 = scmp.ne.s32.totalorder %s147, %s149
      %p153 = scmp.eq.s32.totalorder %s31, 0
      %p154 = por %p152, %p153
      %p155 = scmp.ne.s32.totalorder %s147, %s149
      %p156 = scmp.eq.s32.totalorder %s36, 1
      %p157 = por %p155, %p156
      %p158 = scmp.ne.s32.totalorder %s149, %s150
      %p159 = scmp.eq.s32.totalorder %s36, 0
      %p160 = por %p158, %p159
      %p161 = scmp.ne.s32.totalorder %s149, %s150
      %p162 = scmp.eq.s32.totalorder %s37, 1
      %p163 = por %p161, %p162
      %p165 = scmp.ne.s32.totalorder %s150, %s164
      %p166 = scmp.eq.s32.totalorder %s37, 0
      %p167 = por %p165, %p166
      %s169 = sadd.s32 %s168, 1
      %p172 = scmp.eq.s32.totalorder %s31, 1
      %p173 = scmp.ne.s32.totalorder %s168, %s170
      %p174 = scmp.eq.s32.totalorder %s31, 0
      %p175 = por %p173, %p174
      %p176 = scmp.ne.s32.totalorder %s168, %s170
      %p177 = scmp.eq.s32.totalorder %s36, 1
      %p178 = por %p176, %p177
      %p179 = scmp.ne.s32.totalorder %s170, %s171
      %p180 = scmp.eq.s32.totalorder %s36, 0
      %p181 = por %p179, %p180
      %p182 = scmp.ne.s32.totalorder %s170, %s171
      %p183 = scmp.eq.s32.totalorder %s37, 1
      %p184 = por %p182, %p183
      %p186 = scmp.ne.s32.totalorder %s171, %s185
      %p187 = scmp.eq.s32.totalorder %s37, 0
      %p188 = por %p186, %p187
      %s190 = sadd.s32 %s189, 1
      %p193 = scmp.eq.s32.totalorder %s31, 1
      %p194 = scmp.ne.s32.totalorder %s189, %s191
      %p195 = scmp.eq.s32.totalorder %s31, 0
      %p196 = por %p194, %p195
      %p197 = scmp.ne.s32.totalorder %s189, %s191
      %p198 = scmp.eq.s32.totalorder %s36, 1
      %p199 = por %p197, %p198
      %p200 = scmp.ne.s32.totalorder %s191, %s192
      %p201 = scmp.eq.s32.totalorder %s36, 0
      %p202 = por %p200, %p201
      %p203 = scmp.ne.s32.totalorder %s191, %s192
      %p204 = scmp.eq.s32.totalorder %s37, 1
      %p205 = por %p203, %p204
      %p207 = scmp.ne.s32.totalorder %s192, %s206
      %p208 = scmp.eq.s32.totalorder %s37, 0
      %p209 = por %p207, %p208
      %s211 = sadd.s32 %s210, 1
      %p214 = scmp.eq.s32.totalorder %s31, 1
      %p215 = scmp.ne.s32.totalorder %s210, %s212
      %p216 = scmp.eq.s32.totalorder %s31, 0
      %p217 = por %p215, %p216
      %p218 = scmp.ne.s32.totalorder %s210, %s212
      %p219 = scmp.eq.s32.totalorder %s36, 1
      %p220 = por %p218, %p219
      %p221 = scmp.ne.s32.totalorder %s212, %s213
      %p222 = scmp.eq.s32.totalorder %s36, 0
      %p223 = por %p221, %p222
      %p224 = scmp.ne.s32.totalorder %s212, %s213
      %p225 = scmp.eq.s32.totalorder %s37, 1
      %p226 = por %p224, %p225
      %p228 = scmp.ne.s32.totalorder %s213, %s227
      %p229 = scmp.eq.s32.totalorder %s37, 0
      %p230 = por %p228, %p229
      %s232 = sadd.s32 %s231, 1
      %p235 = scmp.eq.s32.totalorder %s31, 1
      %p236 = scmp.ne.s32.totalorder %s231, %s233
      %p237 = scmp.eq.s32.totalorder %s31, 0
      %p238 = por %p236, %p237
      %p239 = scmp.ne.s32.totalorder %s231, %s233
      %p240 = scmp.eq.s32.totalorder %s36, 1
      %p241 = por %p239, %p240
      %p242 = scmp.ne.s32.totalorder %s233, %s234
      %p243 = scmp.eq.s32.totalorder %s36, 0
      %p244 = por %p242, %p243
      %p245 = scmp.ne.s32.totalorder %s233, %s234
      %p246 = scmp.eq.s32.totalorder %s37, 1
      %p247 = por %p245, %p246
      %p249 = scmp.ne.s32.totalorder %s234, %s248
      %p250 = scmp.eq.s32.totalorder %s37, 0
      %p251 = por %p249, %p250
      %s253 = sadd.s32 %s252, 1
      %p256 = scmp.eq.s32.totalorder %s31, 1
      %p257 = scmp.ne.s32.totalorder %s252, %s254
      %p258 = scmp.eq.s32.totalorder %s31, 0
      %p259 = por %p257, %p258
      %p260 = scmp.ne.s32.totalorder %s252, %s254
      %p261 = scmp.eq.s32.totalorder %s36, 1
      %p262 = por %p260, %p261
      %p263 = scmp.ne.s32.totalorder %s254, %s255
      %p264 = scmp.eq.s32.totalorder %s36, 0
      %p265 = por %p263, %p264
      %p266 = scmp.ne.s32.totalorder %s254, %s255
      %p267 = scmp.eq.s32.totalorder %s37, 1
      %p268 = por %p266, %p267
      %p270 = scmp.ne.s32.totalorder %s255, %s269
      %p271 = scmp.eq.s32.totalorder %s37, 0
      %p272 = por %p270, %p271
      %s274 = sadd.s32 %s273, 1
      %p277 = scmp.eq.s32.totalorder %s31, 1
      %p278 = scmp.ne.s32.totalorder %s273, %s275
      %p279 = scmp.eq.s32.totalorder %s31, 0
      %p280 = por %p278, %p279
      %p281 = scmp.ne.s32.totalorder %s273, %s275
      %p282 = scmp.eq.s32.totalorder %s36, 1
      %p283 = por %p281, %p282
      %p284 = scmp.ne.s32.totalorder %s275, %s276
      %p285 = scmp.eq.s32.totalorder %s36, 0
      %p286 = por %p284, %p285
      %p287 = scmp.ne.s32.totalorder %s275, %s276
      %p288 = scmp.eq.s32.totalorder %s37, 1
      %p289 = por %p287, %p288
      %p291 = scmp.ne.s32.totalorder %s276, %s290
      %p292 = scmp.eq.s32.totalorder %s37, 0
      %p293 = por %p291, %p292
      %s295 = sadd.s32 %s294, 1
      %p298 = scmp.eq.s32.totalorder %s31, 1
      %p299 = scmp.ne.s32.totalorder %s294, %s296
      %p300 = scmp.eq.s32.totalorder %s31, 0
      %p301 = por %p299, %p300
      %p302 = scmp.ne.s32.totalorder %s294, %s296
      %p303 = scmp.eq.s32.totalorder %s36, 1
      %p304 = por %p302, %p303
      %p305 = scmp.ne.s32.totalorder %s296, %s297
      %p306 = scmp.eq.s32.totalorder %s36, 0
      %p307 = por %p305, %p306
      %p308 = scmp.ne.s32.totalorder %s296, %s297
      %p309 = scmp.eq.s32.totalorder %s37, 1
      %p310 = por %p308, %p309
      %p312 = scmp.ne.s32.totalorder %s297, %s311
      %p313 = scmp.eq.s32.totalorder %s37, 0
      %p314 = por %p312, %p313
      %s316 = sadd.s32 %s315, 1
      %p319 = scmp.eq.s32.totalorder %s31, 1
      %p320 = scmp.ne.s32.totalorder %s315, %s317
      %p321 = scmp.eq.s32.totalorder %s31, 0
      %p322 = por %p320, %p321
      %p323 = scmp.ne.s32.totalorder %s315, %s317
      %p324 = scmp.eq.s32.totalorder %s36, 1
      %p325 = por %p323, %p324
      %p326 = scmp.ne.s32.totalorder %s317, %s318
      %p327 = scmp.eq.s32.totalorder %s36, 0
      %p328 = por %p326, %p327
      %p329 = scmp.ne.s32.totalorder %s317, %s318
      %p330 = scmp.eq.s32.totalorder %s37, 1
      %p331 = por %p329, %p330
      %p333 = scmp.ne.s32.totalorder %s318, %s332
      %p334 = scmp.eq.s32.totalorder %s37, 0
      %p335 = por %p333, %p334
      %s337 = sadd.s32 %s336, 1
      %p340 = scmp.eq.s32.totalorder %s31, 1
      %p341 = scmp.ne.s32.totalorder %s336, %s338
      %p342 = scmp.eq.s32.totalorder %s31, 0
      %p343 = por %p341, %p342
      %p344 = scmp.ne.s32.totalorder %s336, %s338
      %p345 = scmp.eq.s32.totalorder %s36, 1
      %p346 = por %p344, %p345
      %p347 = scmp.ne.s32.totalorder %s338, %s339
      %p348 = scmp.eq.s32.totalorder %s36, 0
      %p349 = por %p347, %p348
      %p350 = scmp.ne.s32.totalorder %s338, %s339
      %p351 = scmp.eq.s32.totalorder %s37, 1
      %p352 = por %p350, %p351
      %p354 = scmp.ne.s32.totalorder %s339, %s353
      %p355 = scmp.eq.s32.totalorder %s37, 0
      %p356 = por %p354, %p355
      %s358 = sadd.s32 %s357, 1
      %p361 = scmp.eq.s32.totalorder %s31, 1
      %p362 = scmp.ne.s32.totalorder %s357, %s359
      %p363 = scmp.eq.s32.totalorder %s31, 0
      %p364 = por %p362, %p363
      %p365 = scmp.ne.s32.totalorder %s357, %s359
      %p366 = scmp.eq.s32.totalorder %s36, 1
      %p367 = por %p365, %p366
      %p368 = scmp.ne.s32.totalorder %s359, %s360
      %p369 = scmp.eq.s32.totalorder %s36, 0
      %p370 = por %p368, %p369
      %p371 = scmp.ne.s32.totalorder %s359, %s360
      %p372 = scmp.eq.s32.totalorder %s37, 1
      %p373 = por %p371, %p372
      %p375 = scmp.ne.s32.totalorder %s360, %s374
      %p376 = scmp.eq.s32.totalorder %s37, 0
      %p377 = por %p375, %p376
      %s379 = sadd.s32 %s378, 1
      %p382 = scmp.eq.s32.totalorder %s31, 1
      %p383 = scmp.ne.s32.totalorder %s378, %s380
      %p384 = scmp.eq.s32.totalorder %s31, 0
      %p385 = por %p383, %p384
      %p386 = scmp.ne.s32.totalorder %s378, %s380
      %p387 = scmp.eq.s32.totalorder %s36, 1
      %p388 = por %p386, %p387
      %p389 = scmp.ne.s32.totalorder %s380, %s381
      %p390 = scmp.eq.s32.totalorder %s36, 0
      %p391 = por %p389, %p390
      %p392 = scmp.ne.s32.totalorder %s380, %s381
      %p393 = scmp.eq.s32.totalorder %s37, 1
      %p394 = por %p392, %p393
      %p396 = scmp.ne.s32.totalorder %s381, %s395
      %p397 = scmp.eq.s32.totalorder %s37, 0
      %p398 = por %p396, %p397
      %s399 = ssub.s32 %s38, %s50
      %s400 = ssub.s32 %s39, %s46
      %s401 = sor.u32 %s399, %s400
      %p402 = scmp.eq.s32.totalorder %s401, 0
      %s404 = sadd.s32 %s403, 1
      %s405 = scalar_select %p402, %s403, %s404
      %p408 = pneg %p402
      %p409 = scmp.eq.s32.totalorder %s31, 1
      %p410 = por %p408, %p409
      %p411 = scmp.ne.s32.totalorder %s403, %s406
      %p412 = scmp.eq.s32.totalorder %s31, 0
      %p413 = por %p411, %p412
      %p414 = scmp.ne.s32.totalorder %s403, %s406
      %p415 = scmp.eq.s32.totalorder %s36, 1
      %p416 = por %p414, %p415
      %p417 = scmp.ne.s32.totalorder %s406, %s407
      %p418 = scmp.eq.s32.totalorder %s36, 0
      %p419 = por %p417, %p418
      %p420 = scmp.ne.s32.totalorder %s406, %s407
      %p421 = scmp.eq.s32.totalorder %s37, 1
      %p422 = por %p420, %p421
      %p424 = scmp.ne.s32.totalorder %s407, %s423
      %p425 = scmp.eq.s32.totalorder %s37, 0
      %p426 = por %p424, %p425
      %s427 = ssub.s32 %s38, %s50
      %s428 = ssub.s32 %s39, %s46
      %s429 = sor.u32 %s427, %s428
      %p430 = scmp.eq.s32.totalorder %s429, 0
      %s432 = sadd.s32 %s431, 1
      %s433 = scalar_select %p430, %s431, %s432
      %p436 = pneg %p430
      %p437 = scmp.eq.s32.totalorder %s31, 1
      %p438 = por %p436, %p437
      %p439 = scmp.ne.s32.totalorder %s431, %s434
      %p440 = scmp.eq.s32.totalorder %s31, 0
      %p441 = por %p439, %p440
      %p442 = scmp.ne.s32.totalorder %s431, %s434
      %p443 = scmp.eq.s32.totalorder %s36, 1
      %p444 = por %p442, %p443
      %p445 = scmp.ne.s32.totalorder %s434, %s435
      %p446 = scmp.eq.s32.totalorder %s36, 0
      %p447 = por %p445, %p446
      %p448 = scmp.ne.s32.totalorder %s434, %s435
      %p449 = scmp.eq.s32.totalorder %s37, 1
      %p450 = por %p448, %p449
      %p452 = scmp.ne.s32.totalorder %s435, %s451
      %p453 = scmp.eq.s32.totalorder %s37, 0
      %p454 = por %p452, %p453
      %p455 = scmp.le.s32.totalorder 1, %s31
      %p456 = scmp.lt.s32.totalorder %s31, 3
      %p457 = pnand %p455, %p456
      %p458 = pneg %p457
      // Predicated region
      $region9: #{tpu_custom_call.1} parent=5 // pred_check
        _
      $region10: #{tpu_custom_call.1} parent=5 // pred_check_branch
        %460 = sbr.rel (%p457) target = $region12
      $region11: #{tpu_custom_call.1} parent=5 // pred_region
        %s461 = ssub.s32 %s31, 1
        // Predicated region
        $region13: #{tpu_custom_call.1} parent=11 // pred_check
          %p462 = pneg %p118
        $region14: #{tpu_custom_call.1} parent=11 // pred_check_branch
          %464 = sbr.rel (%p462) target = $region16
        $region15: #{tpu_custom_call.1} parent=11 // pred_region
          _
        $region16: #{tpu_custom_call.1} parent=11 // pred_fallthru
          _
        // Predicated region
        $region17: #{tpu_custom_call.1} parent=11 // pred_check
          %p465 = pneg %p139
        $region18: #{tpu_custom_call.1} parent=11 // pred_check_branch
          %467 = sbr.rel (%p465) target = $region20
        $region19: #{tpu_custom_call.1} parent=11 // pred_region
          _
        $region20: #{tpu_custom_call.1} parent=11 // pred_fallthru
          _
        // Predicated region
        $region21: #{tpu_custom_call.1} parent=11 // pred_check
          %p468 = pneg %p160
        $region22: #{tpu_custom_call.1} parent=11 // pred_check_branch
          %470 = sbr.rel (%p468) target = $region24
        $region23: #{tpu_custom_call.1} parent=11 // pred_region
          _
        $region24: #{tpu_custom_call.1} parent=11 // pred_fallthru
          _
        // Predicated region
        $region25: #{tpu_custom_call.1} parent=11 // pred_check
          %p471 = pneg %p181
        $region26: #{tpu_custom_call.1} parent=11 // pred_check_branch
          %473 = sbr.rel (%p471) target = $region28
        $region27: #{tpu_custom_call.1} parent=11 // pred_region
          %s475 = ssub.s32 256, 256
          %476 = vsyncadd [#allocation5], %s475
          %s477 = sshll.u32 [#allocation4], 4
          %s478 = int_to_ptr.vmem [resolvable:$true] %s477
          %483 = dma.hbm_to_vmem [thread:$0]  %s5, 256, %s478, [#allocation5], 64, 64, 4
        $region28: #{tpu_custom_call.1} parent=11 // pred_fallthru
          _
        // Predicated region
        $region29: #{tpu_custom_call.1} parent=11 // pred_check
          %p484 = pneg %p202
        $region30: #{tpu_custom_call.1} parent=11 // pred_check_branch
          %486 = sbr.rel (%p484) target = $region32
        $region31: #{tpu_custom_call.1} parent=11 // pred_region
          _
        $region32: #{tpu_custom_call.1} parent=11 // pred_fallthru
          _
        // Predicated region
        $region33: #{tpu_custom_call.1} parent=11 // pred_check
          %p487 = pneg %p223
        $region34: #{tpu_custom_call.1} parent=11 // pred_check_branch
          %489 = sbr.rel (%p487) target = $region36
        $region35: #{tpu_custom_call.1} parent=11 // pred_region
          _
        $region36: #{tpu_custom_call.1} parent=11 // pred_fallthru
          _
        // Predicated region
        $region37: #{tpu_custom_call.1} parent=11 // pred_check
          %p490 = pneg %p244
        $region38: #{tpu_custom_call.1} parent=11 // pred_check_branch
          %492 = sbr.rel (%p490) target = $region40
        $region39: #{tpu_custom_call.1} parent=11 // pred_region
          _
        $region40: #{tpu_custom_call.1} parent=11 // pred_fallthru
          _
        // Predicated region
        $region41: #{tpu_custom_call.1} parent=11 // pred_check
          %p493 = pneg %p265
        $region42: #{tpu_custom_call.1} parent=11 // pred_check_branch
          %495 = sbr.rel (%p493) target = $region44
        $region43: #{tpu_custom_call.1} parent=11 // pred_region
          _
        $region44: #{tpu_custom_call.1} parent=11 // pred_fallthru
          _
        // Predicated region
        $region45: #{tpu_custom_call.1} parent=11 // pred_check
          %p496 = pneg %p286
        $region46: #{tpu_custom_call.1} parent=11 // pred_check_branch
          %498 = sbr.rel (%p496) target = $region48
        $region47: #{tpu_custom_call.1} parent=11 // pred_region
          _
        $region48: #{tpu_custom_call.1} parent=11 // pred_fallthru
          _
        // Predicated region
        $region49: #{tpu_custom_call.1} parent=11 // pred_check
          %p499 = pneg %p307
        $region50: #{tpu_custom_call.1} parent=11 // pred_check_branch
          %501 = sbr.rel (%p499) target = $region52
        $region51: #{tpu_custom_call.1} parent=11 // pred_region
          _
        $region52: #{tpu_custom_call.1} parent=11 // pred_fallthru
          _
        // Predicated region
        $region53: #{tpu_custom_call.1} parent=11 // pred_check
          %p502 = pneg %p328
        $region54: #{tpu_custom_call.1} parent=11 // pred_check_branch
          %504 = sbr.rel (%p502) target = $region56
        $region55: #{tpu_custom_call.1} parent=11 // pred_region
          _
        $region56: #{tpu_custom_call.1} parent=11 // pred_fallthru
          _
        // Predicated region
        $region57: #{tpu_custom_call.1} parent=11 // pred_check
          %p505 = pneg %p349
        $region58: #{tpu_custom_call.1} parent=11 // pred_check_branch
          %507 = sbr.rel (%p505) target = $region60
        $region59: #{tpu_custom_call.1} parent=11 // pred_region
          _
        $region60: #{tpu_custom_call.1} parent=11 // pred_fallthru
          _
        // Predicated region
        $region61: #{tpu_custom_call.1} parent=11 // pred_check
          %p508 = pneg %p370
        $region62: #{tpu_custom_call.1} parent=11 // pred_check_branch
          %510 = sbr.rel (%p508) target = $region64
        $region63: #{tpu_custom_call.1} parent=11 // pred_region
          _
        $region64: #{tpu_custom_call.1} parent=11 // pred_fallthru
          _
        // Predicated region
        $region65: #{tpu_custom_call.1} parent=11 // pred_check
          %p511 = pneg %p391
        $region66: #{tpu_custom_call.1} parent=11 // pred_check_branch
          %513 = sbr.rel (%p511) target = $region68
        $region67: #{tpu_custom_call.1} parent=11 // pred_region
          _
        $region68: #{tpu_custom_call.1} parent=11 // pred_fallthru
          _
      $region12: #{tpu_custom_call.1} parent=5 // pred_fallthru
        _
      %p514 = scmp.lt.s32.totalorder %s31, 2
      // Predicated region
      $region69: #{tpu_custom_call.1} parent=5 // pred_check
        %p515 = pneg %p514
      $region70: #{tpu_custom_call.1} parent=5 // pred_check_branch
        %517 = sbr.rel (%p515) target = $region72
      $region71: #{tpu_custom_call.1} parent=5 // pred_region
        // Predicated region
        $region73: #{tpu_custom_call.1} parent=71 // pred_check
          %p518 = pneg %p65
        $region74: #{tpu_custom_call.1} parent=71 // pred_check_branch
          %520 = sbr.rel (%p518) target = $region76
        $region75: #{tpu_custom_call.1} parent=71 // pred_region
          %p521 = scmp.lt.s32.totalorder %s38, 1
          %s522 = scalar_select %p521, %s38, 1
          %p523 = scmp.lt.s32.totalorder %s39, 0
          %s524 = scalar_select %p523, %s39, 0
          %s525 = sadd.s32 %s524, %s522
          %s526 = smul.addr %s525, 8
          %s527 = scalar_lea.vmem %s0, %s526
        $region76: #{tpu_custom_call.1} parent=71 // pred_fallthru
          _
        // Predicated region
        $region77: #{tpu_custom_call.1} parent=71 // pred_check
          %p528 = pneg %p91
        $region78: #{tpu_custom_call.1} parent=71 // pred_check_branch
          %530 = sbr.rel (%p528) target = $region80
        $region79: #{tpu_custom_call.1} parent=71 // pred_region
          %p531 = scmp.lt.s32.totalorder %s38, 1
          %s532 = scalar_select %p531, %s38, 1
          %s533 = smul.addr %s532, 8
          %s534 = scalar_lea.vmem %s1, %s533
        $region80: #{tpu_custom_call.1} parent=71 // pred_fallthru
          _
      $region72: #{tpu_custom_call.1} parent=5 // pred_fallthru
        _
      %p535 = scmp.le.s32.totalorder 1, %s31
      %p536 = scmp.lt.s32.totalorder %s31, 3
      %p537 = pnand %p535, %p536
      %p538 = pneg %p537
      // Predicated region
      $region81: #{tpu_custom_call.1} parent=5 // pred_check
        _
      $region82: #{tpu_custom_call.1} parent=5 // pred_check_branch
        %540 = sbr.rel (%p537) target = $region84
      $region83: #{tpu_custom_call.1} parent=5 // pred_region
        %s541 = ssub.s32 %s31, 1
        // Predicated region
        $region85: #{tpu_custom_call.1} parent=83 // pred_check
          %p542 = pneg %p181
        $region86: #{tpu_custom_call.1} parent=83 // pred_check_branch
          %544 = sbr.rel (%p542) target = $region88
        $region87: #{tpu_custom_call.1} parent=83 // pred_region
          %545 = dma.done [#allocation5], 256
        $region88: #{tpu_custom_call.1} parent=83 // pred_fallthru
          _
        %p546 = scmp.lt.s32.totalorder %s40, 1
        %s547 = scalar_select %p546, %s40, 1
        %p548 = scmp.lt.s32.totalorder %s41, 0
        %s549 = scalar_select %p548, %s41, 0
        %s550 = sadd.s32 %s549, %s547
        %s551 = smul.addr %s550, 8
        %s552 = scalar_lea.vmem %s0, %s551
        %p553 = pneg %p71
        %p554 = pneg %p68
        %p555 = scmp.lt.s32.totalorder %s40, 1
        %s556 = scalar_select %p555, %s40, 1
        %s557 = smul.addr %s556, 8
        %s558 = scalar_lea.vmem %s1, %s557
        %p559 = pneg %p97
        %p560 = pneg %p94
        %p561 = pneg %p118
        %p562 = pneg %p115
        %p563 = pneg %p139
        %p564 = pneg %p136
        %p565 = pneg %p160
        %p566 = pneg %p157
        %p567 = pneg %p181
        %p568 = pneg %p178
        %p569 = pneg %p202
        %p570 = pneg %p199
        %p571 = pneg %p223
        %p572 = pneg %p220
        %p573 = pneg %p244
        %p574 = pneg %p241
        %p575 = pneg %p265
        %p576 = pneg %p262
        %p577 = pneg %p286
        %p578 = pneg %p283
        %p579 = pneg %p307
        %p580 = pneg %p304
        %p581 = pneg %p328
        %p582 = pneg %p325
        %p583 = pneg %p349
        %p584 = pneg %p346
        %p585 = pneg %p370
        %p586 = pneg %p367
        %p587 = pneg %p391
        %p588 = pneg %p388
        %p589 = pneg %p419
        %p590 = pneg %p416
        %s591 = sand.u32 %s406, 1
        %s592 = scalar_lea.sflag [#allocation6], %s591
        %s593 = sand.u32 %s406, 1
        %s594 = smul.addr %s593, 8
        %s595 = scalar_lea.vmem [#allocation7], %s594
        %p596 = pneg %p447
        %p597 = pneg %p444
        %s598 = sand.u32 %s434, 1
        %s599 = scalar_lea.sflag [#allocation9], %s598
        %s600 = sand.u32 %s434, 1
        %s601 = smul.addr %s600, 16
        %s602 = scalar_lea.vmem [#allocation8], %s601
        %p603 = scmp.lt.s32.totalorder %s40, 1
        %s604 = scalar_select %p603, %s40, 1
        %p605 = scmp.lt.s32.totalorder %s41, 0
        %s606 = scalar_select %p605, %s41, 0
        %s607 = sadd.s32 %s606, %s604
        %s608 = smul.addr %s607, 8
        %s609 = scalar_lea.vmem %s0, %s608
        %p610 = scmp.lt.s32.totalorder %s40, 1
        %s611 = scalar_select %p610, %s40, 1
        %s612 = smul.addr %s611, 8
        %s613 = scalar_lea.vmem %s1, %s612
        %p615 = scmp.eq.s32.totalorder %s41, 0
        // Predicated region
        $region89: #{tpu_custom_call.1} parent=83 // pred_check
          %p616 = pneg %p615
        $region90: #{tpu_custom_call.1} parent=83 // pred_check_branch
          %618 = sbr.rel (%p616) target = $region92
        $region91: #{tpu_custom_call.1} parent=83 // pred_region
          %v619 = vld [vmem:[%s613] sm:$0xff]
          %v620 = vpack.c.bf16 %v619, %v619
          %v621 = vld [vmem:[%s3] sm:$0xf]
          %v622 = vld [vmem:[%s3 + $0x4] sm:$0xf]
          %v623 = vld [vmem:[%s3 + $0x8] sm:$0xf]
          %v624 = vld [vmem:[%s3 + $0xc] sm:$0xf]
          %v625 = vld [vmem:[%s8] sm:$0x1]
          %v627 = vlaneseq
          %v628 = vshrl.u32 %v627, 7
          %v629 = vsub.s32 0, %v628
          %v630 = vrot.slane %v625, %v629
          %v636 = vunpack.c.l.b16 %v621
          %v637 = vunpack.c.l.b16 %v622
          %v638 = vunpack.c.l.b16 %v623
          %v639 = vunpack.c.l.b16 %v624
          %v640 = vpack.c.b16 %v637, %v636
          %v641 = vpack.c.b16 %v639, %v638
          %vm644 = vcmask 261120
          %v646 = vsel %vm644, %v620, 0
          %648 = vmatprep.subr.bf16.mxu0 0
          %649 = vmatpush1.bf16.msra.mxu0 0
          %650 = vmatprep.subr.bf16.mxu0 0
          %651 = vmatpush1.bf16.msra.mxu0 0
          %652 = vmatprep.subr.bf16.mxu0 0
          %653 = vmatpush1.bf16.msra.mxu0 0
          %654 = vmatprep.subr.bf16.mxu0 0
          %655 = vmatpush1.bf16.msra.mxu0 0
          %656 = vmatprep.subr.bf16.mxu0 0
          %657 = vmatpush1.bf16.msra.mxu0 0
          %658 = vmatprep.subr.bf16.mxu0 0
          %659 = vmatpush1.bf16.msra.mxu0 0
          %660 = vmatprep.subr.bf16.mxu0 0
          %661 = vmatpush1.bf16.msra.mxu0 %v641
          %662 = vmatprep.subr.bf16.mxu0 0
          %663 = vmatpush1.bf16.msra.mxu0 %v640
          %664 = vmatprep.subr.bf16.mxu0 0
          %665 = vmatpush2.bf16.msra.mxu0 0
          %666 = vmatprep.subr.bf16.mxu0 0
          %667 = vmatpush2.bf16.msra.mxu0 0
          %668 = vmatprep.subr.bf16.mxu0 0
          %669 = vmatpush2.bf16.msra.mxu0 0
          %670 = vmatprep.subr.bf16.mxu0 0
          %671 = vmatpush2.bf16.msra.mxu0 0
          %672 = vmatprep.subr.bf16.mxu0 0
          %673 = vmatpush2.bf16.msra.mxu0 0
          %674 = vmatprep.subr.bf16.mxu0 0
          %675 = vmatpush2.bf16.msra.mxu0 0
          %676 = vmatprep.subr.bf16.mxu0 0
          %677 = vmatpush2.bf16.msra.mxu0 0
          %678 = vmatprep.subr.bf16.mxu0 0
          %679 = vmatpush2.bf16.msra.mxu0 0
          %680 = vmatprep.mubr.bf16.mxu0 0
          %681 = vmatmul.mubr.bf16.gmra.mxu0 %v646
          %v682 = vpop.f32.mrf.mxu0
          %v683 = vadd.f32 %v630, %v682
          %v684 = vpop.f32.mrf.mxu0
          %v685 = vpop.f32.mrf.mxu0
          %v686 = vpop.f32.mrf.mxu0
          %687 = vdwg.mxu0
          %v688 = vpack.c.bf16 %v683, %v683
          %vm689 = vcmask 519168
          %690 = vst.msk [vmem:[#allocation2] sm:$0xf] %vm689, %v688
        $region92: #{tpu_custom_call.1} parent=83 // pred_fallthru
          _
        %v691 = vld [vmem:[%s609] sm:$0xff]
        %v692 = vpack.c.bf16 %v691, %v691
        %v693 = vld [vmem:[%s2] sm:$0xf]
        %v694 = vld [vmem:[%s2 + $0x4] sm:$0xf]
        %v695 = vld [vmem:[%s2 + $0x8] sm:$0xf]
        %v696 = vld [vmem:[%s2 + $0xc] sm:$0xf]
        %v697 = vld [vmem:[%s7] sm:$0x1]
        %v699 = vlaneseq
        %v700 = vshrl.u32 %v699, 7
        %v701 = vsub.s32 0, %v700
        %v702 = vrot.slane %v697, %v701
        %v708 = vunpack.c.l.b16 %v693
        %v709 = vunpack.c.l.b16 %v694
        %v710 = vunpack.c.l.b16 %v695
        %v711 = vunpack.c.l.b16 %v696
        %v712 = vpack.c.b16 %v709, %v708
        %v713 = vpack.c.b16 %v711, %v710
        %vm716 = vcmask 261120
        %v718 = vsel %vm716, %v692, 0
        %720 = vmatprep.subr.bf16.mxu0 0
        %721 = vmatpush1.bf16.msra.mxu0 0
        %722 = vmatprep.subr.bf16.mxu0 0
        %723 = vmatpush1.bf16.msra.mxu0 0
        %724 = vmatprep.subr.bf16.mxu0 0
        %725 = vmatpush1.bf16.msra.mxu0 0
        %726 = vmatprep.subr.bf16.mxu0 0
        %727 = vmatpush1.bf16.msra.mxu0 0
        %728 = vmatprep.subr.bf16.mxu0 0
        %729 = vmatpush1.bf16.msra.mxu0 0
        %730 = vmatprep.subr.bf16.mxu0 0
        %731 = vmatpush1.bf16.msra.mxu0 0
        %732 = vmatprep.subr.bf16.mxu0 0
        %733 = vmatpush1.bf16.msra.mxu0 %v713
        %734 = vmatprep.subr.bf16.mxu0 0
        %735 = vmatpush1.bf16.msra.mxu0 %v712
        %736 = vmatprep.subr.bf16.mxu0 0
        %737 = vmatpush2.bf16.msra.mxu0 0
        %738 = vmatprep.subr.bf16.mxu0 0
        %739 = vmatpush2.bf16.msra.mxu0 0
        %740 = vmatprep.subr.bf16.mxu0 0
        %741 = vmatpush2.bf16.msra.mxu0 0
        %742 = vmatprep.subr.bf16.mxu0 0
        %743 = vmatpush2.bf16.msra.mxu0 0
        %744 = vmatprep.subr.bf16.mxu0 0
        %745 = vmatpush2.bf16.msra.mxu0 0
        %746 = vmatprep.subr.bf16.mxu0 0
        %747 = vmatpush2.bf16.msra.mxu0 0
        %748 = vmatprep.subr.bf16.mxu0 0
        %749 = vmatpush2.bf16.msra.mxu0 0
        %750 = vmatprep.subr.bf16.mxu0 0
        %751 = vmatpush2.bf16.msra.mxu0 0
        %752 = vmatprep.mubr.bf16.mxu0 0
        %753 = vmatmul.mubr.bf16.gmra.mxu0 %v718
        %v754 = vpop.f32.mrf.mxu0
        %v755 = vadd.f32 %v702, %v754
        %v756 = vpop.f32.mrf.mxu0
        %v757 = vpop.f32.mrf.mxu0
        %v758 = vpop.f32.mrf.mxu0
        %759 = vdwg.mxu0
        %v760 = vpack.c.bf16 %v755, %v755
        %v761 = vld [vmem:[#allocation2] sm:$0xf]
        %vm762 = vcmask 64512
        %v764 = vsel %vm762, %v760, 0
        %v767 = vsel %vm762, %v761, 0
        %769 = vmatprep.subr.bf16.mxu0 0
        %770 = vmatpush1.bf16.xpose.msra.mxu0 0
        %771 = vmatprep.subr.bf16.mxu0 0
        %772 = vmatpush1.bf16.xpose.msra.mxu0 0
        %773 = vmatprep.subr.bf16.mxu0 0
        %774 = vmatpush1.bf16.xpose.msra.mxu0 0
        %775 = vmatprep.subr.bf16.mxu0 0
        %776 = vmatpush1.bf16.xpose.msra.mxu0 0
        %777 = vmatprep.subr.bf16.mxu0 0
        %778 = vmatpush1.bf16.xpose.msra.mxu0 0
        %779 = vmatprep.subr.bf16.mxu0 0
        %780 = vmatpush1.bf16.xpose.msra.mxu0 0
        %781 = vmatprep.subr.bf16.mxu0 0
        %782 = vmatpush1.bf16.xpose.msra.mxu0 0
        %783 = vmatprep.subr.bf16.mxu0 0
        %784 = vmatpush1.bf16.xpose.msra.mxu0 %v767
        %785 = vmatprep.subr.bf16.mxu0 0
        %786 = vmatpush2.bf16.xpose.msra.mxu0 0
        %787 = vmatprep.subr.bf16.mxu0 0
        %788 = vmatpush2.bf16.xpose.msra.mxu0 0
        %789 = vmatprep.subr.bf16.mxu0 0
        %790 = vmatpush2.bf16.xpose.msra.mxu0 0
        %791 = vmatprep.subr.bf16.mxu0 0
        %792 = vmatpush2.bf16.xpose.msra.mxu0 0
        %793 = vmatprep.subr.bf16.mxu0 0
        %794 = vmatpush2.bf16.xpose.msra.mxu0 0
        %795 = vmatprep.subr.bf16.mxu0 0
        %796 = vmatpush2.bf16.xpose.msra.mxu0 0
        %797 = vmatprep.subr.bf16.mxu0 0
        %798 = vmatpush2.bf16.xpose.msra.mxu0 0
        %799 = vmatprep.subr.bf16.mxu0 0
        %800 = vmatpush2.bf16.xpose.msra.mxu0 0
        %801 = vmatprep.mubr.bf16.mxu0 0
        %802 = vmatmul.mubr.bf16.gmra.mxu0 %v764
        %v803 = vpop.f32.mrf.mxu0
        %v804 = vadd.f32 0.0, %v803
        %v805 = vpop.f32.mrf.mxu0
        %v806 = vpop.f32.mrf.mxu0
        %v807 = vpop.f32.mrf.mxu0
        %808 = vdwg.mxu0
        %v809 = vsel %vm762, %v804, -inf
        %810 = vmax.xlane.f32.xlu0 %v809
        %v811 = vpop.xlane.xlu0 %810
        %v812 = vsub.f32 %v804, %v811
        %v813 = vmul.f32 %v812, 1.442695
        %v814 = vpow.pop %v813
        %v815 = vsel %vm762, %v814, 0.0
        %816 = vadd.xlane.f32.xlu0 %v815
        %v817 = vpop.xlane.xlu0 %816
        %v818 = vrcp.pop %v817
        %v819 = vmul.f32 %v814, %v818
        %v820 = vpack.c.bf16 %v819, %v819
        %vm821 = vcmask 60416
        %822 = vst.msk [vmem:[%s602] sm:$0xf] %vm821, %v820
        %v824 = vunpack.c.l.b16 %v761
        %v825 = vpack.c.b16 %v824, %v824
        %826 = vrot.lane.b32.xlu0 %v825, 96
        %v827 = vpop.permute.xlu0 %826
        %v829 = vsel %vm762, %v820, 0
        %vm831 = vcmask 1043456
        %v833 = vsel %vm831, %v827, 0
        %835 = vmatprep.subr.bf16.mxu0 0
        %836 = vmatpush1.bf16.msra.mxu0 0
        %837 = vmatprep.subr.bf16.mxu0 0
        %838 = vmatpush1.bf16.msra.mxu0 0
        %839 = vmatprep.subr.bf16.mxu0 0
        %840 = vmatpush1.bf16.msra.mxu0 0
        %841 = vmatprep.subr.bf16.mxu0 0
        %842 = vmatpush1.bf16.msra.mxu0 0
        %843 = vmatprep.subr.bf16.mxu0 0
        %844 = vmatpush1.bf16.msra.mxu0 0
        %845 = vmatprep.subr.bf16.mxu0 0
        %846 = vmatpush1.bf16.msra.mxu0 0
        %847 = vmatprep.subr.bf16.mxu0 0
        %848 = vmatpush1.bf16.msra.mxu0 0
        %849 = vmatprep.subr.bf16.mxu0 0
        %850 = vmatpush1.bf16.msra.mxu0 %v833
        %851 = vmatprep.subr.bf16.mxu0 0
        %852 = vmatpush2.bf16.msra.mxu0 0
        %853 = vmatprep.subr.bf16.mxu0 0
        %854 = vmatpush2.bf16.msra.mxu0 0
        %855 = vmatprep.subr.bf16.mxu0 0
        %856 = vmatpush2.bf16.msra.mxu0 0
        %857 = vmatprep.subr.bf16.mxu0 0
        %858 = vmatpush2.bf16.msra.mxu0 0
        %859 = vmatprep.subr.bf16.mxu0 0
        %860 = vmatpush2.bf16.msra.mxu0 0
        %861 = vmatprep.subr.bf16.mxu0 0
        %862 = vmatpush2.bf16.msra.mxu0 0
        %863 = vmatprep.subr.bf16.mxu0 0
        %864 = vmatpush2.bf16.msra.mxu0 0
        %865 = vmatprep.subr.bf16.mxu0 0
        %866 = vmatpush2.bf16.msra.mxu0 0
        %867 = vmatprep.mubr.bf16.mxu0 0
        %868 = vmatmul.mubr.bf16.gmra.mxu0 %v829
        %v869 = vpop.f32.mrf.mxu0
        %v870 = vadd.f32 0.0, %v869
        %v871 = vpop.f32.mrf.mxu0
        %v872 = vpop.f32.mrf.mxu0
        %v873 = vpop.f32.mrf.mxu0
        %874 = vdwg.mxu0
        %v875 = vpack.c.bf16 %v870, %v870
        %876 = vst.msk [vmem:[#allocation3] sm:$0xf] %vm821, %v875
        %v877 = vld [vmem:[#allocation2] sm:$0xf]
        %879 = vrot.lane.b32.xlu0 %v760, 120
        %v880 = vpop.permute.xlu0 %879
        %v882 = vunpack.c.l.b16 %v877
        %v883 = vpack.c.b16 %v882, %v882
        %884 = vrot.lane.b32.xlu0 %v883, 120
        %v885 = vpop.permute.xlu0 %884
        %v887 = vsel %vm762, %v880, 0
        %v890 = vsel %vm762, %v885, 0
        %892 = vmatprep.subr.bf16.mxu0 0
        %893 = vmatpush1.bf16.xpose.msra.mxu0 0
        %894 = vmatprep.subr.bf16.mxu0 0
        %895 = vmatpush1.bf16.xpose.msra.mxu0 0
        %896 = vmatprep.subr.bf16.mxu0 0
        %897 = vmatpush1.bf16.xpose.msra.mxu0 0
        %898 = vmatprep.subr.bf16.mxu0 0
        %899 = vmatpush1.bf16.xpose.msra.mxu0 0
        %900 = vmatprep.subr.bf16.mxu0 0
        %901 = vmatpush1.bf16.xpose.msra.mxu0 0
        %902 = vmatprep.subr.bf16.mxu0 0
        %903 = vmatpush1.bf16.xpose.msra.mxu0 0
        %904 = vmatprep.subr.bf16.mxu0 0
        %905 = vmatpush1.bf16.xpose.msra.mxu0 0
        %906 = vmatprep.subr.bf16.mxu0 0
        %907 = vmatpush1.bf16.xpose.msra.mxu0 %v890
        %908 = vmatprep.subr.bf16.mxu0 0
        %909 = vmatpush2.bf16.xpose.msra.mxu0 0
        %910 = vmatprep.subr.bf16.mxu0 0
        %911 = vmatpush2.bf16.xpose.msra.mxu0 0
        %912 = vmatprep.subr.bf16.mxu0 0
        %913 = vmatpush2.bf16.xpose.msra.mxu0 0
        %914 = vmatprep.subr.bf16.mxu0 0
        %915 = vmatpush2.bf16.xpose.msra.mxu0 0
        %916 = vmatprep.subr.bf16.mxu0 0
        %917 = vmatpush2.bf16.xpose.msra.mxu0 0
        %918 = vmatprep.subr.bf16.mxu0 0
        %919 = vmatpush2.bf16.xpose.msra.mxu0 0
        %920 = vmatprep.subr.bf16.mxu0 0
        %921 = vmatpush2.bf16.xpose.msra.mxu0 0
        %922 = vmatprep.subr.bf16.mxu0 0
        %923 = vmatpush2.bf16.xpose.msra.mxu0 0
        %924 = vmatprep.mubr.bf16.mxu0 0
        %925 = vmatmul.mubr.bf16.gmra.mxu0 %v887
        %v926 = vpop.f32.mrf.mxu0
        %v927 = vadd.f32 0.0, %v926
        %v928 = vpop.f32.mrf.mxu0
        %v929 = vpop.f32.mrf.mxu0
        %v930 = vpop.f32.mrf.mxu0
        %931 = vdwg.mxu0
        %v932 = vsel %vm762, %v927, -inf
        %933 = vmax.xlane.f32.xlu0 %v932
        %v934 = vpop.xlane.xlu0 %933
        %v935 = vsub.f32 %v927, %v934
        %v936 = vmul.f32 %v935, 1.442695
        %v937 = vpow.pop %v936
        %v938 = vsel %vm762, %v937, 0.0
        %939 = vadd.xlane.f32.xlu0 %v938
        %v940 = vpop.xlane.xlu0 %939
        %v941 = vrcp.pop %v940
        %v942 = vmul.f32 %v937, %v941
        %v943 = vpack.c.bf16 %v942, %v942
        %s944 = scalar_lea.vmem %s602, 4 [#allocation8]
        %945 = vst.msk [vmem:[%s944] sm:$0xf] %vm821, %v943
        %946 = vrot.lane.b32.xlu0 %v883, 88
        %v947 = vpop.permute.xlu0 %946
        %v949 = vsel %vm762, %v943, 0
        %v952 = vsel %vm831, %v947, 0
        %954 = vmatprep.subr.bf16.mxu0 0
        %955 = vmatpush1.bf16.msra.mxu0 0
        %956 = vmatprep.subr.bf16.mxu0 0
        %957 = vmatpush1.bf16.msra.mxu0 0
        %958 = vmatprep.subr.bf16.mxu0 0
        %959 = vmatpush1.bf16.msra.mxu0 0
        %960 = vmatprep.subr.bf16.mxu0 0
        %961 = vmatpush1.bf16.msra.mxu0 0
        %962 = vmatprep.subr.bf16.mxu0 0
        %963 = vmatpush1.bf16.msra.mxu0 0
        %964 = vmatprep.subr.bf16.mxu0 0
        %965 = vmatpush1.bf16.msra.mxu0 0
        %966 = vmatprep.subr.bf16.mxu0 0
        %967 = vmatpush1.bf16.msra.mxu0 0
        %968 = vmatprep.subr.bf16.mxu0 0
        %969 = vmatpush1.bf16.msra.mxu0 %v952
        %970 = vmatprep.subr.bf16.mxu0 0
        %971 = vmatpush2.bf16.msra.mxu0 0
        %972 = vmatprep.subr.bf16.mxu0 0
        %973 = vmatpush2.bf16.msra.mxu0 0
        %974 = vmatprep.subr.bf16.mxu0 0
        %975 = vmatpush2.bf16.msra.mxu0 0
        %976 = vmatprep.subr.bf16.mxu0 0
        %977 = vmatpush2.bf16.msra.mxu0 0
        %978 = vmatprep.subr.bf16.mxu0 0
        %979 = vmatpush2.bf16.msra.mxu0 0
        %980 = vmatprep.subr.bf16.mxu0 0
        %981 = vmatpush2.bf16.msra.mxu0 0
        %982 = vmatprep.subr.bf16.mxu0 0
        %983 = vmatpush2.bf16.msra.mxu0 0
        %984 = vmatprep.subr.bf16.mxu0 0
        %985 = vmatpush2.bf16.msra.mxu0 0
        %986 = vmatprep.mubr.bf16.mxu0 0
        %987 = vmatmul.mubr.bf16.gmra.mxu0 %v949
        %v988 = vpop.f32.mrf.mxu0
        %v989 = vadd.f32 0.0, %v988
        %v990 = vpop.f32.mrf.mxu0
        %v991 = vpop.f32.mrf.mxu0
        %v992 = vpop.f32.mrf.mxu0
        %993 = vdwg.mxu0
        %v994 = vpack.c.bf16 %v989, %v989
        %v996 = vunpack.c.l.b16 %v994
        %v997 = vpack.c.b16 %v996, %v996
        %998 = vrot.lane.b32.xlu0 %v997, 8
        %v999 = vpop.permute.xlu0 %998
        %vm1001 = vcmask 126016
        %1002 = vst.msk [vmem:[#allocation3] sm:$0xf] %vm1001, %v999
        %v1003 = vld [vmem:[#allocation2] sm:$0xf]
        %1004 = vrot.lane.b32.xlu0 %v760, 112
        %v1005 = vpop.permute.xlu0 %1004
        %v1007 = vunpack.c.l.b16 %v1003
        %v1008 = vpack.c.b16 %v1007, %v1007
        %1009 = vrot.lane.b32.xlu0 %v1008, 112
        %v1010 = vpop.permute.xlu0 %1009
        %v1012 = vsel %vm762, %v1005, 0
        %v1015 = vsel %vm762, %v1010, 0
        %1017 = vmatprep.subr.bf16.mxu0 0
        %1018 = vmatpush1.bf16.xpose.msra.mxu0 0
        %1019 = vmatprep.subr.bf16.mxu0 0
        %1020 = vmatpush1.bf16.xpose.msra.mxu0 0
        %1021 = vmatprep.subr.bf16.mxu0 0
        %1022 = vmatpush1.bf16.xpose.msra.mxu0 0
        %1023 = vmatprep.subr.bf16.mxu0 0
        %1024 = vmatpush1.bf16.xpose.msra.mxu0 0
        %1025 = vmatprep.subr.bf16.mxu0 0
        %1026 = vmatpush1.bf16.xpose.msra.mxu0 0
        %1027 = vmatprep.subr.bf16.mxu0 0
        %1028 = vmatpush1.bf16.xpose.msra.mxu0 0
        %1029 = vmatprep.subr.bf16.mxu0 0
        %1030 = vmatpush1.bf16.xpose.msra.mxu0 0
        %1031 = vmatprep.subr.bf16.mxu0 0
        %1032 = vmatpush1.bf16.xpose.msra.mxu0 %v1015
        %1033 = vmatprep.subr.bf16.mxu0 0
        %1034 = vmatpush2.bf16.xpose.msra.mxu0 0
        %1035 = vmatprep.subr.bf16.mxu0 0
        %1036 = vmatpush2.bf16.xpose.msra.mxu0 0
        %1037 = vmatprep.subr.bf16.mxu0 0
        %1038 = vmatpush2.bf16.xpose.msra.mxu0 0
        %1039 = vmatprep.subr.bf16.mxu0 0
        %1040 = vmatpush2.bf16.xpose.msra.mxu0 0
        %1041 = vmatprep.subr.bf16.mxu0 0
        %1042 = vmatpush2.bf16.xpose.msra.mxu0 0
        %1043 = vmatprep.subr.bf16.mxu0 0
        %1044 = vmatpush2.bf16.xpose.msra.mxu0 0
        %1045 = vmatprep.subr.bf16.mxu0 0
        %1046 = vmatpush2.bf16.xpose.msra.mxu0 0
        %1047 = vmatprep.subr.bf16.mxu0 0
        %1048 = vmatpush2.bf16.xpose.msra.mxu0 0
        %1049 = vmatprep.mubr.bf16.mxu0 0
        %1050 = vmatmul.mubr.bf16.gmra.mxu0 %v1012
        %v1051 = vpop.f32.mrf.mxu0
        %v1052 = vadd.f32 0.0, %v1051
        %v1053 = vpop.f32.mrf.mxu0
        %v1054 = vpop.f32.mrf.mxu0
        %v1055 = vpop.f32.mrf.mxu0
        %1056 = vdwg.mxu0
        %v1057 = vsel %vm762, %v1052, -inf
        %1058 = vmax.xlane.f32.xlu0 %v1057
        %v1059 = vpop.xlane.xlu0 %1058
        %v1060 = vsub.f32 %v1052, %v1059
        %v1061 = vmul.f32 %v1060, 1.442695
        %v1062 = vpow.pop %v1061
        %v1063 = vsel %vm762, %v1062, 0.0
        %1064 = vadd.xlane.f32.xlu0 %v1063
        %v1065 = vpop.xlane.xlu0 %1064
        %v1066 = vrcp.pop %v1065
        %v1067 = vmul.f32 %v1062, %v1066
        %v1068 = vpack.c.bf16 %v1067, %v1067
        %s1069 = scalar_lea.vmem %s602, 8 [#allocation8]
        %1070 = vst.msk [vmem:[%s1069] sm:$0xf] %vm821, %v1068
        %1071 = vrot.lane.b32.xlu0 %v1008, 80
        %v1072 = vpop.permute.xlu0 %1071
        %v1074 = vsel %vm762, %v1068, 0
        %v1077 = vsel %vm831, %v1072, 0
        %1079 = vmatprep.subr.bf16.mxu0 0
        %1080 = vmatpush1.bf16.msra.mxu0 0
        %1081 = vmatprep.subr.bf16.mxu0 0
        %1082 = vmatpush1.bf16.msra.mxu0 0
        %1083 = vmatprep.subr.bf16.mxu0 0
        %1084 = vmatpush1.bf16.msra.mxu0 0
        %1085 = vmatprep.subr.bf16.mxu0 0
        %1086 = vmatpush1.bf16.msra.mxu0 0
        %1087 = vmatprep.subr.bf16.mxu0 0
        %1088 = vmatpush1.bf16.msra.mxu0 0
        %1089 = vmatprep.subr.bf16.mxu0 0
        %1090 = vmatpush1.bf16.msra.mxu0 0
        %1091 = vmatprep.subr.bf16.mxu0 0
        %1092 = vmatpush1.bf16.msra.mxu0 0
        %1093 = vmatprep.subr.bf16.mxu0 0
        %1094 = vmatpush1.bf16.msra.mxu0 %v1077
        %1095 = vmatprep.subr.bf16.mxu0 0
        %1096 = vmatpush2.bf16.msra.mxu0 0
        %1097 = vmatprep.subr.bf16.mxu0 0
        %1098 = vmatpush2.bf16.msra.mxu0 0
        %1099 = vmatprep.subr.bf16.mxu0 0
        %1100 = vmatpush2.bf16.msra.mxu0 0
        %1101 = vmatprep.subr.bf16.mxu0 0
        %1102 = vmatpush2.bf16.msra.mxu0 0
        %1103 = vmatprep.subr.bf16.mxu0 0
        %1104 = vmatpush2.bf16.msra.mxu0 0
        %1105 = vmatprep.subr.bf16.mxu0 0
        %1106 = vmatpush2.bf16.msra.mxu0 0
        %1107 = vmatprep.subr.bf16.mxu0 0
        %1108 = vmatpush2.bf16.msra.mxu0 0
        %1109 = vmatprep.subr.bf16.mxu0 0
        %1110 = vmatpush2.bf16.msra.mxu0 0
        %1111 = vmatprep.mubr.bf16.mxu0 0
        %1112 = vmatmul.mubr.bf16.gmra.mxu0 %v1074
        %v1113 = vpop.f32.mrf.mxu0
        %v1114 = vadd.f32 0.0, %v1113
        %v1115 = vpop.f32.mrf.mxu0
        %v1116 = vpop.f32.mrf.mxu0
        %v1117 = vpop.f32.mrf.mxu0
        %1118 = vdwg.mxu0
        %v1119 = vpack.c.bf16 %v1114, %v1114
        %v1121 = vunpack.c.l.b16 %v1119
        %v1122 = vpack.c.b16 %v1121, %v1121
        %1123 = vrot.lane.b32.xlu0 %v1122, 16
        %v1124 = vpop.permute.xlu0 %1123
        %vm1126 = vcmask 191616
        %1127 = vst.msk [vmem:[#allocation3] sm:$0xf] %vm1126, %v1124
        %v1128 = vld [vmem:[#allocation2] sm:$0xf]
        %1129 = vrot.lane.b32.xlu0 %v760, 104
        %v1130 = vpop.permute.xlu0 %1129
        %v1132 = vunpack.c.l.b16 %v1128
        %v1133 = vpack.c.b16 %v1132, %v1132
        %1134 = vrot.lane.b32.xlu0 %v1133, 104
        %v1135 = vpop.permute.xlu0 %1134
        %v1137 = vsel %vm762, %v1130, 0
        %v1140 = vsel %vm762, %v1135, 0
        %1142 = vmatprep.subr.bf16.mxu0 0
        %1143 = vmatpush1.bf16.xpose.msra.mxu0 0
        %1144 = vmatprep.subr.bf16.mxu0 0
        %1145 = vmatpush1.bf16.xpose.msra.mxu0 0
        %1146 = vmatprep.subr.bf16.mxu0 0
        %1147 = vmatpush1.bf16.xpose.msra.mxu0 0
        %1148 = vmatprep.subr.bf16.mxu0 0
        %1149 = vmatpush1.bf16.xpose.msra.mxu0 0
        %1150 = vmatprep.subr.bf16.mxu0 0
        %1151 = vmatpush1.bf16.xpose.msra.mxu0 0
        %1152 = vmatprep.subr.bf16.mxu0 0
        %1153 = vmatpush1.bf16.xpose.msra.mxu0 0
        %1154 = vmatprep.subr.bf16.mxu0 0
        %1155 = vmatpush1.bf16.xpose.msra.mxu0 0
        %1156 = vmatprep.subr.bf16.mxu0 0
        %1157 = vmatpush1.bf16.xpose.msra.mxu0 %v1140
        %1158 = vmatprep.subr.bf16.mxu0 0
        %1159 = vmatpush2.bf16.xpose.msra.mxu0 0
        %1160 = vmatprep.subr.bf16.mxu0 0
        %1161 = vmatpush2.bf16.xpose.msra.mxu0 0
        %1162 = vmatprep.subr.bf16.mxu0 0
        %1163 = vmatpush2.bf16.xpose.msra.mxu0 0
        %1164 = vmatprep.subr.bf16.mxu0 0
        %1165 = vmatpush2.bf16.xpose.msra.mxu0 0
        %1166 = vmatprep.subr.bf16.mxu0 0
        %1167 = vmatpush2.bf16.xpose.msra.mxu0 0
        %1168 = vmatprep.subr.bf16.mxu0 0
        %1169 = vmatpush2.bf16.xpose.msra.mxu0 0
        %1170 = vmatprep.subr.bf16.mxu0 0
        %1171 = vmatpush2.bf16.xpose.msra.mxu0 0
        %1172 = vmatprep.subr.bf16.mxu0 0
        %1173 = vmatpush2.bf16.xpose.msra.mxu0 0
        %1174 = vmatprep.mubr.bf16.mxu0 0
        %1175 = vmatmul.mubr.bf16.gmra.mxu0 %v1137
        %v1176 = vpop.f32.mrf.mxu0
        %v1177 = vadd.f32 0.0, %v1176
        %v1178 = vpop.f32.mrf.mxu0
        %v1179 = vpop.f32.mrf.mxu0
        %v1180 = vpop.f32.mrf.mxu0
        %1181 = vdwg.mxu0
        %v1182 = vsel %vm762, %v1177, -inf
        %1183 = vmax.xlane.f32.xlu0 %v1182
        %v1184 = vpop.xlane.xlu0 %1183
        %v1185 = vsub.f32 %v1177, %v1184
        %v1186 = vmul.f32 %v1185, 1.442695
        %v1187 = vpow.pop %v1186
        %v1188 = vsel %vm762, %v1187, 0.0
        %1189 = vadd.xlane.f32.xlu0 %v1188
        %v1190 = vpop.xlane.xlu0 %1189
        %v1191 = vrcp.pop %v1190
        %v1192 = vmul.f32 %v1187, %v1191
        %v1193 = vpack.c.bf16 %v1192, %v1192
        %s1194 = scalar_lea.vmem %s602, 12 [#allocation8]
        %1195 = vst.msk [vmem:[%s1194] sm:$0xf] %vm821, %v1193
        %1196 = vrot.lane.b32.xlu0 %v1133, 72
        %v1197 = vpop.permute.xlu0 %1196
        %v1199 = vsel %vm762, %v1193, 0
        %v1202 = vsel %vm831, %v1197, 0
        %1204 = vmatprep.subr.bf16.mxu0 0
        %1205 = vmatpush1.bf16.msra.mxu0 0
        %1206 = vmatprep.subr.bf16.mxu0 0
        %1207 = vmatpush1.bf16.msra.mxu0 0
        %1208 = vmatprep.subr.bf16.mxu0 0
        %1209 = vmatpush1.bf16.msra.mxu0 0
        %1210 = vmatprep.subr.bf16.mxu0 0
        %1211 = vmatpush1.bf16.msra.mxu0 0
        %1212 = vmatprep.subr.bf16.mxu0 0
        %1213 = vmatpush1.bf16.msra.mxu0 0
        %1214 = vmatprep.subr.bf16.mxu0 0
        %1215 = vmatpush1.bf16.msra.mxu0 0
        %1216 = vmatprep.subr.bf16.mxu0 0
        %1217 = vmatpush1.bf16.msra.mxu0 0
        %1218 = vmatprep.subr.bf16.mxu0 0
        %1219 = vmatpush1.bf16.msra.mxu0 %v1202
        %1220 = vmatprep.subr.bf16.mxu0 0
        %1221 = vmatpush2.bf16.msra.mxu0 0
        %1222 = vmatprep.subr.bf16.mxu0 0
        %1223 = vmatpush2.bf16.msra.mxu0 0
        %1224 = vmatprep.subr.bf16.mxu0 0
        %1225 = vmatpush2.bf16.msra.mxu0 0
        %1226 = vmatprep.subr.bf16.mxu0 0
        %1227 = vmatpush2.bf16.msra.mxu0 0
        %1228 = vmatprep.subr.bf16.mxu0 0
        %1229 = vmatpush2.bf16.msra.mxu0 0
        %1230 = vmatprep.subr.bf16.mxu0 0
        %1231 = vmatpush2.bf16.msra.mxu0 0
        %1232 = vmatprep.subr.bf16.mxu0 0
        %1233 = vmatpush2.bf16.msra.mxu0 0
        %1234 = vmatprep.subr.bf16.mxu0 0
        %1235 = vmatpush2.bf16.msra.mxu0 0
        %1236 = vmatprep.mubr.bf16.mxu0 0
        %1237 = vmatmul.mubr.bf16.gmra.mxu0 %v1199
        %v1238 = vpop.f32.mrf.mxu0
        %v1239 = vadd.f32 0.0, %v1238
        %v1240 = vpop.f32.mrf.mxu0
        %v1241 = vpop.f32.mrf.mxu0
        %v1242 = vpop.f32.mrf.mxu0
        %1243 = vdwg.mxu0
        %v1244 = vpack.c.bf16 %v1239, %v1239
        %v1246 = vunpack.c.l.b16 %v1244
        %v1247 = vpack.c.b16 %v1246, %v1246
        %1248 = vrot.lane.b32.xlu0 %v1247, 24
        %v1249 = vpop.permute.xlu0 %1248
        %vm1251 = vcmask 257216
        %1252 = vst.msk [vmem:[#allocation3] sm:$0xf] %vm1251, %v1249
        %v1253 = vld [vmem:[#allocation3] sm:$0xf]
        %v1254 = vld [vmem:[%s4] sm:$0xf]
        %v1255 = vld [vmem:[%s4 + $0x4] sm:$0xf]
        %v1256 = vld [vmem:[%s4 + $0x8] sm:$0xf]
        %v1257 = vld [vmem:[%s4 + $0xc] sm:$0xf]
        %v1258 = vld [vmem:[%s9] sm:$0x1]
        %v1260 = vlaneseq
        %v1261 = vshrl.u32 %v1260, 7
        %v1262 = vsub.s32 0, %v1261
        %v1263 = vrot.slane %v1258, %v1262
        %v1269 = vunpack.c.l.b16 %v1254
        %v1270 = vunpack.c.l.b16 %v1255
        %v1271 = vunpack.c.l.b16 %v1256
        %v1272 = vunpack.c.l.b16 %v1257
        %v1273 = vpack.c.b16 %v1270, %v1269
        %v1274 = vpack.c.b16 %v1272, %v1271
        %v1278 = vsel %vm716, %v1253, 0
        %1280 = vmatprep.subr.bf16.mxu0 0
        %1281 = vmatpush1.bf16.msra.mxu0 0
        %1282 = vmatprep.subr.bf16.mxu0 0
        %1283 = vmatpush1.bf16.msra.mxu0 0
        %1284 = vmatprep.subr.bf16.mxu0 0
        %1285 = vmatpush1.bf16.msra.mxu0 0
        %1286 = vmatprep.subr.bf16.mxu0 0
        %1287 = vmatpush1.bf16.msra.mxu0 0
        %1288 = vmatprep.subr.bf16.mxu0 0
        %1289 = vmatpush1.bf16.msra.mxu0 0
        %1290 = vmatprep.subr.bf16.mxu0 0
        %1291 = vmatpush1.bf16.msra.mxu0 0
        %1292 = vmatprep.subr.bf16.mxu0 0
        %1293 = vmatpush1.bf16.msra.mxu0 %v1274
        %1294 = vmatprep.subr.bf16.mxu0 0
        %1295 = vmatpush1.bf16.msra.mxu0 %v1273
        %1296 = vmatprep.subr.bf16.mxu0 0
        %1297 = vmatpush2.bf16.msra.mxu0 0
        %1298 = vmatprep.subr.bf16.mxu0 0
        %1299 = vmatpush2.bf16.msra.mxu0 0
        %1300 = vmatprep.subr.bf16.mxu0 0
        %1301 = vmatpush2.bf16.msra.mxu0 0
        %1302 = vmatprep.subr.bf16.mxu0 0
        %1303 = vmatpush2.bf16.msra.mxu0 0
        %1304 = vmatprep.subr.bf16.mxu0 0
        %1305 = vmatpush2.bf16.msra.mxu0 0
        %1306 = vmatprep.subr.bf16.mxu0 0
        %1307 = vmatpush2.bf16.msra.mxu0 0
        %1308 = vmatprep.subr.bf16.mxu0 0
        %1309 = vmatpush2.bf16.msra.mxu0 0
        %1310 = vmatprep.subr.bf16.mxu0 0
        %1311 = vmatpush2.bf16.msra.mxu0 0
        %1312 = vmatprep.mubr.bf16.mxu0 0
        %1313 = vmatmul.mubr.bf16.gmra.mxu0 %v1278
        %v1314 = vpop.f32.mrf.mxu0
        %v1315 = vadd.f32 %v1263, %v1314
        %v1316 = vpop.f32.mrf.mxu0
        %v1317 = vpop.f32.mrf.mxu0
        %v1318 = vpop.f32.mrf.mxu0
        %1319 = vdwg.mxu0
        %v1320 = vadd.f32 %v691, %v1315
        %v1321 = vld [vmem:[%s12] sm:$0x1]
        %v1322 = vld [vmem:[%s13] sm:$0x1]
        %v1323 = vsel %vm716, %v1320, 0.0
        %1324 = vadd.xlane.f32.xlu0 %v1323
        %v1325 = vpop.xlane.xlu0 %1324
        %v1326 = vrcp.pop 32.0
        %v1327 = vmul.f32 %v1325, %v1326
        %v1328 = vsub.f32 %v1320, %v1327
        %v1329 = vmul.f32 %v1328, %v1328
        %v1330 = vsel %vm716, %v1329, 0.0
        %1331 = vadd.xlane.f32.xlu0 %v1330
        %v1332 = vpop.xlane.xlu0 %1331
        %v1333 = vmul.f32 %v1332, %v1326
        %v1334 = vadd.f32 %v1333, 1e-05
        %v1335 = vrsqrt.pop %v1334
        %v1336 = vmul.f32 %v1328, %v1335
        %v1338 = vlaneseq
        %v1339 = vshrl.u32 %v1338, 7
        %v1340 = vsub.s32 0, %v1339
        %v1341 = vrot.slane %v1321, %v1340
        %v1343 = vmul.f32 %v1336, %v1341
        %v1345 = vlaneseq
        %v1346 = vshrl.u32 %v1345, 7
        %v1347 = vsub.s32 0, %v1346
        %v1348 = vrot.slane %v1322, %v1347
        %v1350 = vadd.f32 %v1343, %v1348
        %v1351 = vpack.c.bf16 %v1350, %v1350
        %v1352 = vld [vmem:[#allocation4] sm:$0xf]
        %v1353 = vld [vmem:[#allocation4 + $0x4] sm:$0xf]
        %v1354 = vld [vmem:[#allocation4 + $0x8] sm:$0xf]
        %v1355 = vld [vmem:[#allocation4 + $0xc] sm:$0xf]
        %v1356 = vld [vmem:[%s10] sm:$0x1]
        %v1358 = vlaneseq
        %v1359 = vshrl.u32 %v1358, 7
        %v1360 = vsub.s32 0, %v1359
        %v1361 = vrot.slane %v1356, %v1360
        %v1367 = vunpack.c.l.b16 %v1352
        %v1368 = vunpack.c.l.b16 %v1353
        %v1369 = vunpack.c.l.b16 %v1354
        %v1370 = vunpack.c.l.b16 %v1355
        %v1371 = vpack.c.b16 %v1368, %v1367
        %v1372 = vpack.c.b16 %v1370, %v1369
        %v1376 = vsel %vm716, %v1351, 0
        %1378 = vmatprep.subr.bf16.mxu0 0
        %1379 = vmatpush1.bf16.msra.mxu0 0
        %1380 = vmatprep.subr.bf16.mxu0 0
        %1381 = vmatpush1.bf16.msra.mxu0 0
        %1382 = vmatprep.subr.bf16.mxu0 0
        %1383 = vmatpush1.bf16.msra.mxu0 0
        %1384 = vmatprep.subr.bf16.mxu0 0
        %1385 = vmatpush1.bf16.msra.mxu0 0
        %1386 = vmatprep.subr.bf16.mxu0 0
        %1387 = vmatpush1.bf16.msra.mxu0 0
        %1388 = vmatprep.subr.bf16.mxu0 0
        %1389 = vmatpush1.bf16.msra.mxu0 0
        %1390 = vmatprep.subr.bf16.mxu0 0
        %1391 = vmatpush1.bf16.msra.mxu0 %v1372
        %1392 = vmatprep.subr.bf16.mxu0 0
        %1393 = vmatpush1.bf16.msra.mxu0 %v1371
        %1394 = vmatprep.subr.bf16.mxu0 0
        %1395 = vmatpush2.bf16.msra.mxu0 0
        %1396 = vmatprep.subr.bf16.mxu0 0
        %1397 = vmatpush2.bf16.msra.mxu0 0
        %1398 = vmatprep.subr.bf16.mxu0 0
        %1399 = vmatpush2.bf16.msra.mxu0 0
        %1400 = vmatprep.subr.bf16.mxu0 0
        %1401 = vmatpush2.bf16.msra.mxu0 0
        %1402 = vmatprep.subr.bf16.mxu0 0
        %1403 = vmatpush2.bf16.msra.mxu0 0
        %1404 = vmatprep.subr.bf16.mxu0 0
        %1405 = vmatpush2.bf16.msra.mxu0 0
        %1406 = vmatprep.subr.bf16.mxu0 0
        %1407 = vmatpush2.bf16.msra.mxu0 0
        %1408 = vmatprep.subr.bf16.mxu0 0
        %1409 = vmatpush2.bf16.msra.mxu0 0
        %1410 = vmatprep.mubr.bf16.mxu0 0
        %1411 = vmatmul.mubr.bf16.gmra.mxu0 %v1376
        %v1412 = vpop.f32.mrf.mxu0
        %v1413 = vadd.f32 %v1361, %v1412
        %v1414 = vpop.f32.mrf.mxu0
        %v1415 = vpop.f32.mrf.mxu0
        %v1416 = vpop.f32.mrf.mxu0
        %1417 = vdwg.mxu0
        %v1418 = vmax.f32 %v1413, 0.0
        %v1419 = vpack.c.bf16 %v1418, %v1418
        %v1420 = vld [vmem:[%s6] sm:$0xf]
        %v1421 = vld [vmem:[%s6 + $0x4] sm:$0xf]
        %v1422 = vld [vmem:[%s6 + $0x8] sm:$0xf]
        %v1423 = vld [vmem:[%s6 + $0xc] sm:$0xf]
        %v1424 = vld [vmem:[%s6 + $0x10] sm:$0xf]
        %v1425 = vld [vmem:[%s6 + $0x14] sm:$0xf]
        %v1426 = vld [vmem:[%s6 + $0x18] sm:$0xf]
        %v1427 = vld [vmem:[%s6 + $0x1c] sm:$0xf]
        %v1428 = vld [vmem:[%s6 + $0x20] sm:$0xf]
        %v1429 = vld [vmem:[%s6 + $0x24] sm:$0xf]
        %v1430 = vld [vmem:[%s6 + $0x28] sm:$0xf]
        %v1431 = vld [vmem:[%s6 + $0x2c] sm:$0xf]
        %v1432 = vld [vmem:[%s6 + $0x30] sm:$0xf]
        %v1433 = vld [vmem:[%s6 + $0x34] sm:$0xf]
        %v1434 = vld [vmem:[%s6 + $0x38] sm:$0xf]
        %v1435 = vld [vmem:[%s6 + $0x3c] sm:$0xf]
        %v1436 = vld [vmem:[%s11] sm:$0x1]
        %v1438 = vlaneseq
        %v1439 = vshrl.u32 %v1438, 7
        %v1440 = vsub.s32 0, %v1439
        %v1441 = vrot.slane %v1436, %v1440
        %v1459 = vunpack.c.l.b16 %v1420
        %v1460 = vunpack.c.l.b16 %v1421
        %v1461 = vunpack.c.l.b16 %v1422
        %v1462 = vunpack.c.l.b16 %v1423
        %v1463 = vunpack.c.l.b16 %v1424
        %v1464 = vunpack.c.l.b16 %v1425
        %v1465 = vunpack.c.l.b16 %v1426
        %v1466 = vunpack.c.l.b16 %v1427
        %v1467 = vunpack.c.l.b16 %v1428
        %v1468 = vunpack.c.l.b16 %v1429
        %v1469 = vunpack.c.l.b16 %v1430
        %v1470 = vunpack.c.l.b16 %v1431
        %v1471 = vunpack.c.l.b16 %v1432
        %v1472 = vunpack.c.l.b16 %v1433
        %v1473 = vunpack.c.l.b16 %v1434
        %v1474 = vunpack.c.l.b16 %v1435
        %v1475 = vpack.c.b16 %v1460, %v1459
        %v1476 = vpack.c.b16 %v1462, %v1461
        %v1477 = vpack.c.b16 %v1464, %v1463
        %v1478 = vpack.c.b16 %v1466, %v1465
        %v1479 = vpack.c.b16 %v1468, %v1467
        %v1480 = vpack.c.b16 %v1470, %v1469
        %v1481 = vpack.c.b16 %v1472, %v1471
        %v1482 = vpack.c.b16 %v1474, %v1473
        %1491 = vmatprep.subr.bf16.mxu0 0
        %1492 = vmatpush1.bf16.msra.mxu0 %v1482
        %1493 = vmatprep.subr.bf16.mxu0 0
        %1494 = vmatpush1.bf16.msra.mxu0 %v1481
        %1495 = vmatprep.subr.bf16.mxu0 0
        %1496 = vmatpush1.bf16.msra.mxu0 %v1480
        %1497 = vmatprep.subr.bf16.mxu0 0
        %1498 = vmatpush1.bf16.msra.mxu0 %v1479
        %1499 = vmatprep.subr.bf16.mxu0 0
        %1500 = vmatpush1.bf16.msra.mxu0 %v1478
        %1501 = vmatprep.subr.bf16.mxu0 0
        %1502 = vmatpush1.bf16.msra.mxu0 %v1477
        %1503 = vmatprep.subr.bf16.mxu0 0
        %1504 = vmatpush1.bf16.msra.mxu0 %v1476
        %1505 = vmatprep.subr.bf16.mxu0 0
        %1506 = vmatpush1.bf16.msra.mxu0 %v1475
        %1507 = vmatprep.subr.bf16.mxu0 0
        %1508 = vmatpush2.bf16.msra.mxu0 0
        %1509 = vmatprep.subr.bf16.mxu0 0
        %1510 = vmatpush2.bf16.msra.mxu0 0
        %1511 = vmatprep.subr.bf16.mxu0 0
        %1512 = vmatpush2.bf16.msra.mxu0 0
        %1513 = vmatprep.subr.bf16.mxu0 0
        %1514 = vmatpush2.bf16.msra.mxu0 0
        %1515 = vmatprep.subr.bf16.mxu0 0
        %1516 = vmatpush2.bf16.msra.mxu0 0
        %1517 = vmatprep.subr.bf16.mxu0 0
        %1518 = vmatpush2.bf16.msra.mxu0 0
        %1519 = vmatprep.subr.bf16.mxu0 0
        %1520 = vmatpush2.bf16.msra.mxu0 0
        %1521 = vmatprep.subr.bf16.mxu0 0
        %1522 = vmatpush2.bf16.msra.mxu0 0
        %1523 = vmatprep.mubr.bf16.mxu0 0
        %1524 = vmatmul.mubr.bf16.gmra.mxu0 %v1419
        %v1525 = vpop.f32.mrf.mxu0
        %v1526 = vadd.f32 %v1441, %v1525
        %v1527 = vpop.f32.mrf.mxu0
        %v1528 = vpop.f32.mrf.mxu0
        %v1529 = vpop.f32.mrf.mxu0
        %1530 = vdwg.mxu0
        %v1531 = vadd.f32 %v1350, %v1526
        %v1532 = vld [vmem:[%s14] sm:$0x1]
        %v1533 = vld [vmem:[%s15] sm:$0x1]
        %v1534 = vsel %vm716, %v1531, 0.0
        %1535 = vadd.xlane.f32.xlu0 %v1534
        %v1536 = vpop.xlane.xlu0 %1535
        %v1537 = vmul.f32 %v1536, %v1326
        %v1538 = vsub.f32 %v1531, %v1537
        %v1539 = vmul.f32 %v1538, %v1538
        %v1540 = vsel %vm716, %v1539, 0.0
        %1541 = vadd.xlane.f32.xlu0 %v1540
        %v1542 = vpop.xlane.xlu0 %1541
        %v1543 = vmul.f32 %v1542, %v1326
        %v1544 = vadd.f32 %v1543, 1e-05
        %v1545 = vrsqrt.pop %v1544
        %v1546 = vmul.f32 %v1538, %v1545
        %v1548 = vlaneseq
        %v1549 = vshrl.u32 %v1548, 7
        %v1550 = vsub.s32 0, %v1549
        %v1551 = vrot.slane %v1532, %v1550
        %v1553 = vmul.f32 %v1546, %v1551
        %v1555 = vlaneseq
        %v1556 = vshrl.u32 %v1555, 7
        %v1557 = vsub.s32 0, %v1556
        %v1558 = vrot.slane %v1533, %v1557
        %v1560 = vadd.f32 %v1553, %v1558
        %1561 = vst.msk [vmem:[%s595] sm:$0xff] %vm716, %v1560
        %s1562 = sand.u32 %s406, 1
        %s1563 = scalar_lea.sflag [#allocation6], %s1562
        %s1564 = sand.u32 %s406, 1
        %s1565 = smul.addr %s1564, 8
        %s1566 = scalar_lea.vmem [#allocation7], %s1565
        %s1567 = sand.u32 %s434, 1
        %s1568 = scalar_lea.sflag [#allocation9], %s1567
        %s1569 = sand.u32 %s434, 1
        %s1570 = smul.addr %s1569, 16
        %s1571 = scalar_lea.vmem [#allocation8], %s1570
        // Predicated region
        $region93: #{tpu_custom_call.1} parent=83 // pred_check
          %p1572 = pneg %p416
        $region94: #{tpu_custom_call.1} parent=83 // pred_check_branch
          %1574 = sbr.rel (%p1572) target = $region96
        $region95: #{tpu_custom_call.1} parent=83 // pred_region
          %s1576 = ssub.s32 128, 128
          %1577 = vsyncadd %s1563, %s1576
          %s1578 = sadd.s32 %s41, %s40
          %s1579 = smul.addr %s1578, 128
          %s1580 = scalar_lea.hbm %s16, %s1579
          %s1582 = sshll.u32 %s1566, 4
          %s1583 = int_to_ptr.vmem [resolvable:$true] %s1582
          %1585 = dma.vmem_to_hbm [thread:$0]  %s1583, 128, %s1580, %s1563
        $region96: #{tpu_custom_call.1} parent=83 // pred_fallthru
          _
        // Predicated region
        $region97: #{tpu_custom_call.1} parent=83 // pred_check
          %p1586 = pneg %p444
        $region98: #{tpu_custom_call.1} parent=83 // pred_check_branch
          %1588 = sbr.rel (%p1586) target = $region100
        $region99: #{tpu_custom_call.1} parent=83 // pred_region
          %s1590 = ssub.s32 256, 256
          %1591 = vsyncadd %s1568, %s1590
          %s1592 = smul.addr %s40, 4
          %s1593 = sadd.s32 %s41, %s1592
          %s1594 = smul.addr %s1593, 64
          %s1595 = scalar_lea.hbm %s17, %s1594
          %s1596 = sshll.u32 %s1571, 4
          %s1597 = int_to_ptr.vmem [resolvable:$true] %s1596
          %1602 = dma.vmem_to_hbm [thread:$0]  %s1597, 256, %s1595, %s1568, 64, 64, 4
        $region100: #{tpu_custom_call.1} parent=83 // pred_fallthru
          _
      $region84: #{tpu_custom_call.1} parent=5 // pred_fallthru
        _
      %p1603 = scmp.le.s32.totalorder 2, %s31
      // Predicated region
      $region101: #{tpu_custom_call.1} parent=5 // pred_check
        %p1604 = pneg %p1603
      $region102: #{tpu_custom_call.1} parent=5 // pred_check_branch
        %1606 = sbr.rel (%p1604) target = $region104
      $region103: #{tpu_custom_call.1} parent=5 // pred_region
        %s1607 = ssub.s32 %s31, 2
        // Predicated region
        $region105: #{tpu_custom_call.1} parent=103 // pred_check
          %p1608 = pneg %p422
        $region106: #{tpu_custom_call.1} parent=103 // pred_check_branch
          %1610 = sbr.rel (%p1608) target = $region108
        $region107: #{tpu_custom_call.1} parent=103 // pred_region
          %s1611 = sand.u32 %s407, 1
          %s1612 = scalar_lea.sflag [#allocation6], %s1611
          %s1613 = sand.u32 %s407, 1
          %s1614 = smul.addr %s1613, 8
          %s1615 = scalar_lea.vmem [#allocation7], %s1614
          %1616 = dma.done %s1612, 128
        $region108: #{tpu_custom_call.1} parent=103 // pred_fallthru
          _
        // Predicated region
        $region109: #{tpu_custom_call.1} parent=103 // pred_check
          %p1617 = pneg %p450
        $region110: #{tpu_custom_call.1} parent=103 // pred_check_branch
          %1619 = sbr.rel (%p1617) target = $region112
        $region111: #{tpu_custom_call.1} parent=103 // pred_region
          %s1620 = sand.u32 %s435, 1
          %s1621 = scalar_lea.sflag [#allocation9], %s1620
          %s1622 = sand.u32 %s435, 1
          %s1623 = smul.addr %s1622, 16
          %s1624 = scalar_lea.vmem [#allocation8], %s1623
          %1625 = dma.done %s1621, 256
        $region112: #{tpu_custom_call.1} parent=103 // pred_fallthru
          _
      $region104: #{tpu_custom_call.1} parent=5 // pred_fallthru
        _
    $region6: #{tpu_custom_call.1} parent=1 // loop_footer
      %s35 = sadd.s32 1, %s31
    $region7: #{tpu_custom_call.1} parent=1 // loop_footer_branch
      %30 = sbr.rel target = $region3
    $region8: #{tpu_custom_call.1} parent=1 // loop_exit
      _
    %1626 = vsyncpa [#allocation5], 1
    %s1627 = scalar_lea.sflag [#allocation5], 1
    %1628 = vsyncpa %s1627, 1
    %1629 = vsyncpa [#allocation6], 1
    %s1630 = scalar_lea.sflag [#allocation6], 1
    %1631 = vsyncpa %s1630, 1
    %1632 = vsyncpa [#allocation9], 1
    %s1633 = scalar_lea.sflag [#allocation9], 1
    %1634 = vsyncpa %s1633, 1

</llo_original>
